<compile_context>
chip_gen: v5e
topology: v5e:2x2
jax: 0.10.0
libtpu: 0.0.40
codegen_flags: <defaults>
</compile_context>

<pallas_src>
import jax
import jax.numpy as jnp
from jax.experimental import pallas as pl
from jax.experimental.pallas import tpu as pltpu

# --- static network dimensions (from the PyTorch module) ---------------------
L_IN = 64                 # input sequence length (128*14 fc1 input => L_IN = 64)
K = 3                     # conv kernel size
C1 = 64                   # conv1 out channels
C2 = 128                  # conv2 out channels
L1 = L_IN - K + 1         # 62
P1 = L1 // 2              # 31
L2 = P1 - K + 1           # 29
P2 = L2 // 2              # 14
FLAT = C2 * P2            # 1792 = 128 * 14
HID = 512                 # fc1 output


# -----------------------------------------------------------------------------
# Fused kernel: both Siamese branches + fc1/abs/fc2/sigmoid in one body.
# -----------------------------------------------------------------------------
def _scale_net_kernel(x1_ref, x2_ref,
                      w1_ref, b1_ref, w2_ref, b2_ref,
                      wf1_ref, bf1_ref, wf2_ref, bf2_ref,
                      out_ref, emb_ref,
                      s1, s2, flat):
    batch = x1_ref.shape[1]

    def forward_once(xcol, row):
        # xcol: (L_IN, 1) f32 column for one sample.
        # --- conv1 (Cin=1, k=3) + bias + relu, computed as VPU broadcasts ------
        y1 = (xcol[0:L1, :] * w1_ref[0:1, :]
              + xcol[1:L1 + 1, :] * w1_ref[1:2, :]
              + xcol[2:L1 + 2, :] * w1_ref[2:3, :]) + b1_ref[...]
        y1 = jnp.maximum(y1, 0.0)                                   # (L1, C1)

        # --- max_pool1d(k=2): sublane-strided loads from VMEM scratch ----------
        s1[...] = y1
        p1 = jnp.maximum(s1[pl.ds(0, P1, stride=2), :],
                         s1[pl.ds(1, P1, stride=2), :])             # (P1, C1)

        # --- conv2 as ONE im2col matmul: (L2, 3*C1) @ (3*C1, C2) ---------------
        taps = jnp.concatenate(
            [p1[0:L2, :], p1[1:L2 + 1, :], p1[2:L2 + 2, :]], axis=1)  # (L2, 3*C1)
        y2 = jnp.dot(taps, w2_ref[...],
                     preferred_element_type=jnp.float32) + b2_ref[...]
        y2 = jnp.maximum(y2, 0.0)                                   # (L2, C2)

        # --- max_pool1d(k=2) ----------------------------------------------------
        s2[...] = y2
        p2 = jnp.maximum(s2[pl.ds(0, P2, stride=2), :],
                         s2[pl.ds(1, P2, stride=2), :])             # (P2, C2)

        # --- flatten: 128-lane-dense row writes (fc1 weight pre-permuted) -------
        for t in range(P2):
            flat[row:row + 1, t * C2:(t + 1) * C2] = p2[t:t + 1, :]

    for b in range(batch):
        forward_once(x1_ref[:, b:b + 1], b)
        forward_once(x2_ref[:, b:b + 1], batch + b)

    # --- shared fc1 for all 2*batch flattened vectors (bf16 weights, f32 acc) --
    h = jnp.dot(flat[...].astype(jnp.bfloat16), wf1_ref[...],
                preferred_element_type=jnp.float32) + bf1_ref[...]
    h = jnp.maximum(h, 0.0)                                         # (2B, HID)
    emb_ref[...] = h                                                # forward_once outputs

    # --- |o1 - o2| -> fc2 -> sigmoid -------------------------------------------
    d = jnp.abs(h[0:batch, :] - h[batch:2 * batch, :])              # (B, HID)
    logit = jnp.dot(d, wf2_ref[...],
                    preferred_element_type=jnp.float32) + bf2_ref[...]
    out_ref[...] = jax.nn.sigmoid(logit)                            # (B, 1)


def scale_network_forward(params, input1, input2, return_embeddings=False):
    """input1, input2: (B, 1, L_IN) float32 (torch layout)."""
    B = input1.shape[0]
    x1t = input1.reshape(B, L_IN).T.astype(jnp.float32)             # (L_IN, B)
    x2t = input2.reshape(B, L_IN).T.astype(jnp.float32)

    vmem = lambda: pl.BlockSpec(memory_space=pltpu.MemorySpace.VMEM)
    out, emb = pl.pallas_call(
        _scale_net_kernel,
        out_shape=(jax.ShapeDtypeStruct((B, 1), jnp.float32),
                   jax.ShapeDtypeStruct((2 * B, HID), jnp.float32)),
        in_specs=[vmem() for _ in range(10)],
        out_specs=(vmem(), vmem()),
        scratch_shapes=[pltpu.VMEM((L1, C1), jnp.float32),
                        pltpu.VMEM((L2, C2), jnp.float32),
                        pltpu.VMEM((2 * B, FLAT), jnp.float32)],
        compiler_params=pltpu.CompilerParams(vmem_limit_bytes=32 * 1024 * 1024),
    )(x1t, x2t,
      params["conv1_w"], params["conv1_b"],
      params["conv2_w"], params["conv2_b"],
      params["fc1_w"], params["fc1_b"],
      params["fc2_w"], params["fc2_b"])
    if return_embeddings:
        return out, emb
    return out


# -----------------------------------------------------------------------------
# Convert PyTorch-layout weights into the kernel's layouts.
# -----------------------------------------------------------------------------
def prepare_params(conv1_w, conv1_b, conv2_w, conv2_b, fc1_w, fc1_b, fc2_w, fc2_b):
    p = {}
    # conv1.weight (C1, 1, K) -> (K, C1) ;   y1[t,c] = sum_k x[t+k] * w[k,c]
    p["conv1_w"] = jnp.transpose(conv1_w[:, 0, :]).astype(jnp.float32)
    p["conv1_b"] = conv1_b.reshape(1, C1).astype(jnp.float32)
    # conv2.weight (C2, C1, K) -> (K*C1, C2), row = k*C1 + cin (matches taps concat)
    p["conv2_w"] = jnp.transpose(conv2_w, (2, 1, 0)).reshape(K * C1, C2).astype(jnp.float32)
    p["conv2_b"] = conv2_b.reshape(1, C2).astype(jnp.float32)
    # fc1.weight (HID, FLAT) applied as flat @ W with W = fc1_w.T.  torch flatten is
    # channel-major (index = c*P2 + t); the kernel flatten is time-major
    # (index = t*C2 + c) -> permute rows accordingly.  Stored in bf16.
    w = jnp.transpose(fc1_w)                                        # (FLAT, HID), row c*P2+t
    w = w.reshape(C2, P2, HID).transpose(1, 0, 2).reshape(FLAT, HID)  # row t*C2+c
    p["fc1_w"] = w.astype(jnp.bfloat16)
    p["fc1_b"] = fc1_b.reshape(1, HID).astype(jnp.float32)
    p["fc2_w"] = jnp.transpose(fc2_w).astype(jnp.float32)           # (HID, 1)
    p["fc2_b"] = fc2_b.reshape(1, 1).astype(jnp.float32)
    return p


# -----------------------------------------------------------------------------
# Pure-JAX reference mirroring the PyTorch module (for self-verification).
# -----------------------------------------------------------------------------
def reference_forward(conv1_w, conv1_b, conv2_w, conv2_b, fc1_w, fc1_b,
                      fc2_w, fc2_b, input1, input2):
    fc1_w_q = fc1_w.astype(jnp.bfloat16).astype(jnp.float32)   # same bf16 values as kernel

    def conv1d(x, w, b):                                       # x: (B,Cin,L), w: (Cout,Cin,K)
        lout = x.shape[2] - K + 1
        taps = jnp.stack([x[:, :, k:k + lout] for k in range(K)], axis=-1)  # (B,Cin,Lout,K)
        return jnp.einsum("bclk,ock->bol", taps, w) + b[None, :, None]

    def pool2(x):                                              # (B,C,L) -> (B,C,L//2)
        lo = x.shape[2] // 2
        return jnp.max(x[:, :, :2 * lo].reshape(x.shape[0], x.shape[1], lo, 2), axis=-1)

    def forward_once(x):
        y = pool2(jax.nn.relu(conv1d(x, conv1_w, conv1_b)))
        y = pool2(jax.nn.relu(conv1d(y, conv2_w, conv2_b)))
        flat = y.reshape(y.shape[0], -1)
        return jax.nn.relu(flat @ fc1_w_q.T + fc1_b)

    o1 = forward_once(input1)
    o2 = forward_once(input2)
    out = jax.nn.sigmoid(jnp.abs(o1 - o2) @ fc2_w.T + fc2_b)
    return out, o1, o2


# -----------------------------------------------------------------------------
if __name__ == "__main__":
    B = 2
    key = jax.random.PRNGKey(0)
    ks = jax.random.split(key, 10)

    def rnd(k_, shape, scale=0.05):
        return (scale * jax.random.normal(k_, shape)).astype(jnp.float32)

    conv1_w = rnd(ks[0], (C1, 1, K));   conv1_b = rnd(ks[1], (C1,))
    conv2_w = rnd(ks[2], (C2, C1, K));  conv2_b = rnd(ks[3], (C2,))
    fc1_w = rnd(ks[4], (HID, FLAT));    fc1_b = rnd(ks[5], (HID,))
    fc2_w = rnd(ks[6], (1, HID));       fc2_b = rnd(ks[7], (1,))

    input1 = jax.random.normal(ks[8], (B, 1, L_IN), dtype=jnp.float32)
    input2 = jax.random.normal(ks[9], (B, 1, L_IN), dtype=jnp.float32)

    params = prepare_params(conv1_w, conv1_b, conv2_w, conv2_b,
                            fc1_w, fc1_b, fc2_w, fc2_b)

    out, emb = scale_network_forward(params, input1, input2, return_embeddings=True)
    jax.block_until_ready((out, emb))

    ref_out, ref_o1, ref_o2 = reference_forward(
        conv1_w, conv1_b, conv2_w, conv2_b, fc1_w, fc1_b, fc2_w, fc2_b,
        input1, input2)

    assert out.shape == (B, 1), out.shape
    assert emb.shape == (2 * B, HID), emb.shape
    assert jnp.all(jnp.isfinite(out)) and jnp.all(jnp.isfinite(emb))
    assert jnp.allclose(emb[:B], ref_o1, atol=5e-3), "branch-1 embeddings mismatch"
    assert jnp.allclose(emb[B:], ref_o2, atol=5e-3), "branch-2 embeddings mismatch"
    assert jnp.allclose(out, ref_out, atol=5e-3), (out, ref_out)
    print("KERNEL_OK")
</pallas_src>

<mosaic_0001>
module attributes {stable_mosaic.version = 11 : i64} {
  func.func @_scale_net_kernel(%arg0: memref<64x2xf32, #tpu.memory_space<vmem>>, %arg1: memref<64x2xf32, #tpu.memory_space<vmem>>, %arg2: memref<3x64xf32, #tpu.memory_space<vmem>>, %arg3: memref<1x64xf32, #tpu.memory_space<vmem>>, %arg4: memref<192x128xf32, #tpu.memory_space<vmem>>, %arg5: memref<1x128xf32, #tpu.memory_space<vmem>>, %arg6: memref<1792x512xbf16, #tpu.memory_space<vmem>>, %arg7: memref<1x512xf32, #tpu.memory_space<vmem>>, %arg8: memref<512x1xf32, #tpu.memory_space<vmem>>, %arg9: memref<1x1xf32, #tpu.memory_space<vmem>>, %arg10: memref<2x1xf32, #tpu.memory_space<vmem>>, %arg11: memref<4x512xf32, #tpu.memory_space<vmem>>, %arg12: memref<62x64xf32, #tpu.memory_space<vmem>>, %arg13: memref<29x128xf32, #tpu.memory_space<vmem>>, %arg14: memref<4x1792xf32, #tpu.memory_space<vmem>>) attributes {dimension_semantics = [], scalar_prefetch = 0 : i64, scratch_operands = 3 : i64, tpu.core_type = #tpu.core_type<tc>} {
    %c0 = arith.constant 0 : index
    %c0_0 = arith.constant 0 : index
    %0 = vector.load %arg0[%c0, %c0_0] : memref<64x2xf32, #tpu.memory_space<vmem>>, vector<64x1xf32>
    %1 = vector.extract_strided_slice %0 {offsets = [0, 0], sizes = [62, 1], strides = [1, 1]} : vector<64x1xf32> to vector<62x1xf32>
    %c0_1 = arith.constant 0 : index
    %c0_2 = arith.constant 0 : index
    %2 = vector.load %arg2[%c0_1, %c0_2] : memref<3x64xf32, #tpu.memory_space<vmem>>, vector<1x64xf32>
    %3 = vector.broadcast %1 : vector<62x1xf32> to vector<62x64xf32>
    %4 = vector.broadcast %2 : vector<1x64xf32> to vector<62x64xf32>
    %5 = arith.mulf %3, %4 : vector<62x64xf32>
    %6 = vector.extract_strided_slice %0 {offsets = [1, 0], sizes = [62, 1], strides = [1, 1]} : vector<64x1xf32> to vector<62x1xf32>
    %c1 = arith.constant 1 : index
    %c0_3 = arith.constant 0 : index
    %7 = vector.load %arg2[%c1, %c0_3] : memref<3x64xf32, #tpu.memory_space<vmem>>, vector<1x64xf32>
    %8 = vector.broadcast %6 : vector<62x1xf32> to vector<62x64xf32>
    %9 = vector.broadcast %7 : vector<1x64xf32> to vector<62x64xf32>
    %10 = arith.mulf %8, %9 : vector<62x64xf32>
    %11 = arith.addf %5, %10 : vector<62x64xf32>
    %12 = vector.extract_strided_slice %0 {offsets = [2, 0], sizes = [62, 1], strides = [1, 1]} : vector<64x1xf32> to vector<62x1xf32>
    %c2 = arith.constant 2 : index
    %c0_4 = arith.constant 0 : index
    %13 = vector.load %arg2[%c2, %c0_4] : memref<3x64xf32, #tpu.memory_space<vmem>>, vector<1x64xf32>
    %14 = vector.broadcast %12 : vector<62x1xf32> to vector<62x64xf32>
    %15 = vector.broadcast %13 : vector<1x64xf32> to vector<62x64xf32>
    %16 = arith.mulf %14, %15 : vector<62x64xf32>
    %17 = arith.addf %11, %16 : vector<62x64xf32>
    %c0_5 = arith.constant 0 : index
    %c0_6 = arith.constant 0 : index
    %18 = vector.load %arg3[%c0_5, %c0_6] : memref<1x64xf32, #tpu.memory_space<vmem>>, vector<1x64xf32>
    %19 = vector.broadcast %18 : vector<1x64xf32> to vector<62x64xf32>
    %20 = arith.addf %17, %19 : vector<62x64xf32>
    %cst = arith.constant 0.000000e+00 : f32
    %21 = vector.broadcast %cst : f32 to vector<62x64xf32>
    %22 = arith.maximumf %20, %21 : vector<62x64xf32>
    %c0_7 = arith.constant 0 : index
    %c0_8 = arith.constant 0 : index
    %23 = vector.load %arg12[%c0_7, %c0_8] : memref<62x64xf32, #tpu.memory_space<vmem>>, vector<62x64xf32>
    tpu.vector_store %arg12[%c0_7, %c0_8], %22 {strides = array<i32>} : memref<62x64xf32, #tpu.memory_space<vmem>>, vector<62x64xf32>,
    %c0_9 = arith.constant 0 : index
    %c0_10 = arith.constant 0 : index
    %24 = tpu.strided_load %arg12[%c0_9, %c0_10] {strides = array<i32: 2, 1>} : memref<62x64xf32, #tpu.memory_space<vmem>>, vector<31x64xf32>
    %c1_11 = arith.constant 1 : index
    %c0_12 = arith.constant 0 : index
    %25 = tpu.strided_load %arg12[%c1_11, %c0_12] {strides = array<i32: 2, 1>} : memref<62x64xf32, #tpu.memory_space<vmem>>, vector<31x64xf32>
    %26 = arith.maximumf %24, %25 : vector<31x64xf32>
    %27 = vector.extract_strided_slice %26 {offsets = [0, 0], sizes = [29, 64], strides = [1, 1]} : vector<31x64xf32> to vector<29x64xf32>
    %28 = vector.extract_strided_slice %26 {offsets = [1, 0], sizes = [29, 64], strides = [1, 1]} : vector<31x64xf32> to vector<29x64xf32>
    %29 = vector.extract_strided_slice %26 {offsets = [2, 0], sizes = [29, 64], strides = [1, 1]} : vector<31x64xf32> to vector<29x64xf32>
    %30 = tpu.concatenate %27, %28, %29 in 1 : vector<29x64xf32>, vector<29x64xf32>, vector<29x64xf32> -> vector<29x192xf32>
    %c0_13 = arith.constant 0 : index
    %c0_14 = arith.constant 0 : index
    %31 = vector.load %arg4[%c0_13, %c0_14] : memref<192x128xf32, #tpu.memory_space<vmem>>, vector<192x128xf32>
    %cst_15 = arith.constant dense<0.000000e+00> : vector<29x128xf32>
    %32 = tpu.matmul %30, %31, %cst_15 {dimension_numbers = #tpu.dot_dimension_numbers<[1], [0], [0], [1], [0, 0, 1, 1], [], []>} : vector<29x192xf32>, vector<192x128xf32>, vector<29x128xf32> -> vector<29x128xf32>
    %c0_16 = arith.constant 0 : index
    %c0_17 = arith.constant 0 : index
    %33 = vector.load %arg5[%c0_16, %c0_17] : memref<1x128xf32, #tpu.memory_space<vmem>>, vector<1x128xf32>
    %34 = vector.broadcast %33 : vector<1x128xf32> to vector<29x128xf32>
    %35 = arith.addf %32, %34 : vector<29x128xf32>
    %cst_18 = arith.constant 0.000000e+00 : f32
    %36 = vector.broadcast %cst_18 : f32 to vector<29x128xf32>
    %37 = arith.maximumf %35, %36 : vector<29x128xf32>
    %c0_19 = arith.constant 0 : index
    %c0_20 = arith.constant 0 : index
    %38 = vector.load %arg13[%c0_19, %c0_20] : memref<29x128xf32, #tpu.memory_space<vmem>>, vector<29x128xf32>
    tpu.vector_store %arg13[%c0_19, %c0_20], %37 {strides = array<i32>} : memref<29x128xf32, #tpu.memory_space<vmem>>, vector<29x128xf32>,
    %c0_21 = arith.constant 0 : index
    %c0_22 = arith.constant 0 : index
    %39 = tpu.strided_load %arg13[%c0_21, %c0_22] {strides = array<i32: 2, 1>} : memref<29x128xf32, #tpu.memory_space<vmem>>, vector<14x128xf32>
    %c1_23 = arith.constant 1 : index
    %c0_24 = arith.constant 0 : index
    %40 = tpu.strided_load %arg13[%c1_23, %c0_24] {strides = array<i32: 2, 1>} : memref<29x128xf32, #tpu.memory_space<vmem>>, vector<14x128xf32>
    %41 = arith.maximumf %39, %40 : vector<14x128xf32>
    %42 = vector.extract_strided_slice %41 {offsets = [0, 0], sizes = [1, 128], strides = [1, 1]} : vector<14x128xf32> to vector<1x128xf32>
    %c0_25 = arith.constant 0 : index
    %c0_26 = arith.constant 0 : index
    %43 = vector.load %arg14[%c0_25, %c0_26] : memref<4x1792xf32, #tpu.memory_space<vmem>>, vector<1x128xf32>
    tpu.vector_store %arg14[%c0_25, %c0_26], %42 {strides = array<i32>} : memref<4x1792xf32, #tpu.memory_space<vmem>>, vector<1x128xf32>,
    %44 = vector.extract_strided_slice %41 {offsets = [1, 0], sizes = [1, 128], strides = [1, 1]} : vector<14x128xf32> to vector<1x128xf32>
    %c0_27 = arith.constant 0 : index
    %c128 = arith.constant 128 : index
    %45 = vector.load %arg14[%c0_27, %c128] : memref<4x1792xf32, #tpu.memory_space<vmem>>, vector<1x128xf32>
    tpu.vector_store %arg14[%c0_27, %c128], %44 {strides = array<i32>} : memref<4x1792xf32, #tpu.memory_space<vmem>>, vector<1x128xf32>,
    %46 = vector.extract_strided_slice %41 {offsets = [2, 0], sizes = [1, 128], strides = [1, 1]} : vector<14x128xf32> to vector<1x128xf32>
    %c0_28 = arith.constant 0 : index
    %c256 = arith.constant 256 : index
    %47 = vector.load %arg14[%c0_28, %c256] : memref<4x1792xf32, #tpu.memory_space<vmem>>, vector<1x128xf32>
    tpu.vector_store %arg14[%c0_28, %c256], %46 {strides = array<i32>} : memref<4x1792xf32, #tpu.memory_space<vmem>>, vector<1x128xf32>,
    %48 = vector.extract_strided_slice %41 {offsets = [3, 0], sizes = [1, 128], strides = [1, 1]} : vector<14x128xf32> to vector<1x128xf32>
    %c0_29 = arith.constant 0 : index
    %c384 = arith.constant 384 : index
    %49 = vector.load %arg14[%c0_29, %c384] : memref<4x1792xf32, #tpu.memory_space<vmem>>, vector<1x128xf32>
    tpu.vector_store %arg14[%c0_29, %c384], %48 {strides = array<i32>} : memref<4x1792xf32, #tpu.memory_space<vmem>>, vector<1x128xf32>,
    %50 = vector.extract_strided_slice %41 {offsets = [4, 0], sizes = [1, 128], strides = [1, 1]} : vector<14x128xf32> to vector<1x128xf32>
    %c0_30 = arith.constant 0 : index
    %c512 = arith.constant 512 : index
    %51 = vector.load %arg14[%c0_30, %c512] : memref<4x1792xf32, #tpu.memory_space<vmem>>, vector<1x128xf32>
    tpu.vector_store %arg14[%c0_30, %c512], %50 {strides = array<i32>} : memref<4x1792xf32, #tpu.memory_space<vmem>>, vector<1x128xf32>,
    %52 = vector.extract_strided_slice %41 {offsets = [5, 0], sizes = [1, 128], strides = [1, 1]} : vector<14x128xf32> to vector<1x128xf32>
    %c0_31 = arith.constant 0 : index
    %c640 = arith.constant 640 : index
    %53 = vector.load %arg14[%c0_31, %c640] : memref<4x1792xf32, #tpu.memory_space<vmem>>, vector<1x128xf32>
    tpu.vector_store %arg14[%c0_31, %c640], %52 {strides = array<i32>} : memref<4x1792xf32, #tpu.memory_space<vmem>>, vector<1x128xf32>,
    %54 = vector.extract_strided_slice %41 {offsets = [6, 0], sizes = [1, 128], strides = [1, 1]} : vector<14x128xf32> to vector<1x128xf32>
    %c0_32 = arith.constant 0 : index
    %c768 = arith.constant 768 : index
    %55 = vector.load %arg14[%c0_32, %c768] : memref<4x1792xf32, #tpu.memory_space<vmem>>, vector<1x128xf32>
    tpu.vector_store %arg14[%c0_32, %c768], %54 {strides = array<i32>} : memref<4x1792xf32, #tpu.memory_space<vmem>>, vector<1x128xf32>,
    %56 = vector.extract_strided_slice %41 {offsets = [7, 0], sizes = [1, 128], strides = [1, 1]} : vector<14x128xf32> to vector<1x128xf32>
    %c0_33 = arith.constant 0 : index
    %c896 = arith.constant 896 : index
    %57 = vector.load %arg14[%c0_33, %c896] : memref<4x1792xf32, #tpu.memory_space<vmem>>, vector<1x128xf32>
    tpu.vector_store %arg14[%c0_33, %c896], %56 {strides = array<i32>} : memref<4x1792xf32, #tpu.memory_space<vmem>>, vector<1x128xf32>,
    %58 = vector.extract_strided_slice %41 {offsets = [8, 0], sizes = [1, 128], strides = [1, 1]} : vector<14x128xf32> to vector<1x128xf32>
    %c0_34 = arith.constant 0 : index
    %c1024 = arith.constant 1024 : index
    %59 = vector.load %arg14[%c0_34, %c1024] : memref<4x1792xf32, #tpu.memory_space<vmem>>, vector<1x128xf32>
    tpu.vector_store %arg14[%c0_34, %c1024], %58 {strides = array<i32>} : memref<4x1792xf32, #tpu.memory_space<vmem>>, vector<1x128xf32>,
    %60 = vector.extract_strided_slice %41 {offsets = [9, 0], sizes = [1, 128], strides = [1, 1]} : vector<14x128xf32> to vector<1x128xf32>
    %c0_35 = arith.constant 0 : index
    %c1152 = arith.constant 1152 : index
    %61 = vector.load %arg14[%c0_35, %c1152] : memref<4x1792xf32, #tpu.memory_space<vmem>>, vector<1x128xf32>
    tpu.vector_store %arg14[%c0_35, %c1152], %60 {strides = array<i32>} : memref<4x1792xf32, #tpu.memory_space<vmem>>, vector<1x128xf32>,
    %62 = vector.extract_strided_slice %41 {offsets = [10, 0], sizes = [1, 128], strides = [1, 1]} : vector<14x128xf32> to vector<1x128xf32>
    %c0_36 = arith.constant 0 : index
    %c1280 = arith.constant 1280 : index
    %63 = vector.load %arg14[%c0_36, %c1280] : memref<4x1792xf32, #tpu.memory_space<vmem>>, vector<1x128xf32>
    tpu.vector_store %arg14[%c0_36, %c1280], %62 {strides = array<i32>} : memref<4x1792xf32, #tpu.memory_space<vmem>>, vector<1x128xf32>,
    %64 = vector.extract_strided_slice %41 {offsets = [11, 0], sizes = [1, 128], strides = [1, 1]} : vector<14x128xf32> to vector<1x128xf32>
    %c0_37 = arith.constant 0 : index
    %c1408 = arith.constant 1408 : index
    %65 = vector.load %arg14[%c0_37, %c1408] : memref<4x1792xf32, #tpu.memory_space<vmem>>, vector<1x128xf32>
    tpu.vector_store %arg14[%c0_37, %c1408], %64 {strides = array<i32>} : memref<4x1792xf32, #tpu.memory_space<vmem>>, vector<1x128xf32>,
    %66 = vector.extract_strided_slice %41 {offsets = [12, 0], sizes = [1, 128], strides = [1, 1]} : vector<14x128xf32> to vector<1x128xf32>
    %c0_38 = arith.constant 0 : index
    %c1536 = arith.constant 1536 : index
    %67 = vector.load %arg14[%c0_38, %c1536] : memref<4x1792xf32, #tpu.memory_space<vmem>>, vector<1x128xf32>
    tpu.vector_store %arg14[%c0_38, %c1536], %66 {strides = array<i32>} : memref<4x1792xf32, #tpu.memory_space<vmem>>, vector<1x128xf32>,
    %68 = vector.extract_strided_slice %41 {offsets = [13, 0], sizes = [1, 128], strides = [1, 1]} : vector<14x128xf32> to vector<1x128xf32>
    %c0_39 = arith.constant 0 : index
    %c1664 = arith.constant 1664 : index
    %69 = vector.load %arg14[%c0_39, %c1664] : memref<4x1792xf32, #tpu.memory_space<vmem>>, vector<1x128xf32>
    tpu.vector_store %arg14[%c0_39, %c1664], %68 {strides = array<i32>} : memref<4x1792xf32, #tpu.memory_space<vmem>>, vector<1x128xf32>,
    %c0_40 = arith.constant 0 : index
    %c0_41 = arith.constant 0 : index
    %70 = vector.load %arg1[%c0_40, %c0_41] : memref<64x2xf32, #tpu.memory_space<vmem>>, vector<64x1xf32>
    %71 = vector.extract_strided_slice %70 {offsets = [0, 0], sizes = [62, 1], strides = [1, 1]} : vector<64x1xf32> to vector<62x1xf32>
    %c0_42 = arith.constant 0 : index
    %c0_43 = arith.constant 0 : index
    %72 = vector.load %arg2[%c0_42, %c0_43] : memref<3x64xf32, #tpu.memory_space<vmem>>, vector<1x64xf32>
    %73 = vector.broadcast %71 : vector<62x1xf32> to vector<62x64xf32>
    %74 = vector.broadcast %72 : vector<1x64xf32> to vector<62x64xf32>
    %75 = arith.mulf %73, %74 : vector<62x64xf32>
    %76 = vector.extract_strided_slice %70 {offsets = [1, 0], sizes = [62, 1], strides = [1, 1]} : vector<64x1xf32> to vector<62x1xf32>
    %c1_44 = arith.constant 1 : index
    %c0_45 = arith.constant 0 : index
    %77 = vector.load %arg2[%c1_44, %c0_45] : memref<3x64xf32, #tpu.memory_space<vmem>>, vector<1x64xf32>
    %78 = vector.broadcast %76 : vector<62x1xf32> to vector<62x64xf32>
    %79 = vector.broadcast %77 : vector<1x64xf32> to vector<62x64xf32>
    %80 = arith.mulf %78, %79 : vector<62x64xf32>
    %81 = arith.addf %75, %80 : vector<62x64xf32>
    %82 = vector.extract_strided_slice %70 {offsets = [2, 0], sizes = [62, 1], strides = [1, 1]} : vector<64x1xf32> to vector<62x1xf32>
    %c2_46 = arith.constant 2 : index
    %c0_47 = arith.constant 0 : index
    %83 = vector.load %arg2[%c2_46, %c0_47] : memref<3x64xf32, #tpu.memory_space<vmem>>, vector<1x64xf32>
    %84 = vector.broadcast %82 : vector<62x1xf32> to vector<62x64xf32>
    %85 = vector.broadcast %83 : vector<1x64xf32> to vector<62x64xf32>
    %86 = arith.mulf %84, %85 : vector<62x64xf32>
    %87 = arith.addf %81, %86 : vector<62x64xf32>
    %c0_48 = arith.constant 0 : index
    %c0_49 = arith.constant 0 : index
    %88 = vector.load %arg3[%c0_48, %c0_49] : memref<1x64xf32, #tpu.memory_space<vmem>>, vector<1x64xf32>
    %89 = vector.broadcast %88 : vector<1x64xf32> to vector<62x64xf32>
    %90 = arith.addf %87, %89 : vector<62x64xf32>
    %cst_50 = arith.constant 0.000000e+00 : f32
    %91 = vector.broadcast %cst_50 : f32 to vector<62x64xf32>
    %92 = arith.maximumf %90, %91 : vector<62x64xf32>
    %c0_51 = arith.constant 0 : index
    %c0_52 = arith.constant 0 : index
    %93 = vector.load %arg12[%c0_51, %c0_52] : memref<62x64xf32, #tpu.memory_space<vmem>>, vector<62x64xf32>
    tpu.vector_store %arg12[%c0_51, %c0_52], %92 {strides = array<i32>} : memref<62x64xf32, #tpu.memory_space<vmem>>, vector<62x64xf32>,
    %c0_53 = arith.constant 0 : index
    %c0_54 = arith.constant 0 : index
    %94 = tpu.strided_load %arg12[%c0_53, %c0_54] {strides = array<i32: 2, 1>} : memref<62x64xf32, #tpu.memory_space<vmem>>, vector<31x64xf32>
    %c1_55 = arith.constant 1 : index
    %c0_56 = arith.constant 0 : index
    %95 = tpu.strided_load %arg12[%c1_55, %c0_56] {strides = array<i32: 2, 1>} : memref<62x64xf32, #tpu.memory_space<vmem>>, vector<31x64xf32>
    %96 = arith.maximumf %94, %95 : vector<31x64xf32>
    %97 = vector.extract_strided_slice %96 {offsets = [0, 0], sizes = [29, 64], strides = [1, 1]} : vector<31x64xf32> to vector<29x64xf32>
    %98 = vector.extract_strided_slice %96 {offsets = [1, 0], sizes = [29, 64], strides = [1, 1]} : vector<31x64xf32> to vector<29x64xf32>
    %99 = vector.extract_strided_slice %96 {offsets = [2, 0], sizes = [29, 64], strides = [1, 1]} : vector<31x64xf32> to vector<29x64xf32>
    %100 = tpu.concatenate %97, %98, %99 in 1 : vector<29x64xf32>, vector<29x64xf32>, vector<29x64xf32> -> vector<29x192xf32>
    %c0_57 = arith.constant 0 : index
    %c0_58 = arith.constant 0 : index
    %101 = vector.load %arg4[%c0_57, %c0_58] : memref<192x128xf32, #tpu.memory_space<vmem>>, vector<192x128xf32>
    %cst_59 = arith.constant dense<0.000000e+00> : vector<29x128xf32>
    %102 = tpu.matmul %100, %101, %cst_59 {dimension_numbers = #tpu.dot_dimension_numbers<[1], [0], [0], [1], [0, 0, 1, 1], [], []>} : vector<29x192xf32>, vector<192x128xf32>, vector<29x128xf32> -> vector<29x128xf32>
    %c0_60 = arith.constant 0 : index
    %c0_61 = arith.constant 0 : index
    %103 = vector.load %arg5[%c0_60, %c0_61] : memref<1x128xf32, #tpu.memory_space<vmem>>, vector<1x128xf32>
    %104 = vector.broadcast %103 : vector<1x128xf32> to vector<29x128xf32>
    %105 = arith.addf %102, %104 : vector<29x128xf32>
    %cst_62 = arith.constant 0.000000e+00 : f32
    %106 = vector.broadcast %cst_62 : f32 to vector<29x128xf32>
    %107 = arith.maximumf %105, %106 : vector<29x128xf32>
    %c0_63 = arith.constant 0 : index
    %c0_64 = arith.constant 0 : index
    %108 = vector.load %arg13[%c0_63, %c0_64] : memref<29x128xf32, #tpu.memory_space<vmem>>, vector<29x128xf32>
    tpu.vector_store %arg13[%c0_63, %c0_64], %107 {strides = array<i32>} : memref<29x128xf32, #tpu.memory_space<vmem>>, vector<29x128xf32>,
    %c0_65 = arith.constant 0 : index
    %c0_66 = arith.constant 0 : index
    %109 = tpu.strided_load %arg13[%c0_65, %c0_66] {strides = array<i32: 2, 1>} : memref<29x128xf32, #tpu.memory_space<vmem>>, vector<14x128xf32>
    %c1_67 = arith.constant 1 : index
    %c0_68 = arith.constant 0 : index
    %110 = tpu.strided_load %arg13[%c1_67, %c0_68] {strides = array<i32: 2, 1>} : memref<29x128xf32, #tpu.memory_space<vmem>>, vector<14x128xf32>
    %111 = arith.maximumf %109, %110 : vector<14x128xf32>
    %112 = vector.extract_strided_slice %111 {offsets = [0, 0], sizes = [1, 128], strides = [1, 1]} : vector<14x128xf32> to vector<1x128xf32>
    %c2_69 = arith.constant 2 : index
    %c0_70 = arith.constant 0 : index
    %113 = vector.load %arg14[%c2_69, %c0_70] : memref<4x1792xf32, #tpu.memory_space<vmem>>, vector<1x128xf32>
    tpu.vector_store %arg14[%c2_69, %c0_70], %112 {strides = array<i32>} : memref<4x1792xf32, #tpu.memory_space<vmem>>, vector<1x128xf32>,
    %114 = vector.extract_strided_slice %111 {offsets = [1, 0], sizes = [1, 128], strides = [1, 1]} : vector<14x128xf32> to vector<1x128xf32>
    %c2_71 = arith.constant 2 : index
    %c128_72 = arith.constant 128 : index
    %115 = vector.load %arg14[%c2_71, %c128_72] : memref<4x1792xf32, #tpu.memory_space<vmem>>, vector<1x128xf32>
    tpu.vector_store %arg14[%c2_71, %c128_72], %114 {strides = array<i32>} : memref<4x1792xf32, #tpu.memory_space<vmem>>, vector<1x128xf32>,
    %116 = vector.extract_strided_slice %111 {offsets = [2, 0], sizes = [1, 128], strides = [1, 1]} : vector<14x128xf32> to vector<1x128xf32>
    %c2_73 = arith.constant 2 : index
    %c256_74 = arith.constant 256 : index
    %117 = vector.load %arg14[%c2_73, %c256_74] : memref<4x1792xf32, #tpu.memory_space<vmem>>, vector<1x128xf32>
    tpu.vector_store %arg14[%c2_73, %c256_74], %116 {strides = array<i32>} : memref<4x1792xf32, #tpu.memory_space<vmem>>, vector<1x128xf32>,
    %118 = vector.extract_strided_slice %111 {offsets = [3, 0], sizes = [1, 128], strides = [1, 1]} : vector<14x128xf32> to vector<1x128xf32>
    %c2_75 = arith.constant 2 : index
    %c384_76 = arith.constant 384 : index
    %119 = vector.load %arg14[%c2_75, %c384_76] : memref<4x1792xf32, #tpu.memory_space<vmem>>, vector<1x128xf32>
    tpu.vector_store %arg14[%c2_75, %c384_76], %118 {strides = array<i32>} : memref<4x1792xf32, #tpu.memory_space<vmem>>, vector<1x128xf32>,
    %120 = vector.extract_strided_slice %111 {offsets = [4, 0], sizes = [1, 128], strides = [1, 1]} : vector<14x128xf32> to vector<1x128xf32>
    %c2_77 = arith.constant 2 : index
    %c512_78 = arith.constant 512 : index
    %121 = vector.load %arg14[%c2_77, %c512_78] : memref<4x1792xf32, #tpu.memory_space<vmem>>, vector<1x128xf32>
    tpu.vector_store %arg14[%c2_77, %c512_78], %120 {strides = array<i32>} : memref<4x1792xf32, #tpu.memory_space<vmem>>, vector<1x128xf32>,
    %122 = vector.extract_strided_slice %111 {offsets = [5, 0], sizes = [1, 128], strides = [1, 1]} : vector<14x128xf32> to vector<1x128xf32>
    %c2_79 = arith.constant 2 : index
    %c640_80 = arith.constant 640 : index
    %123 = vector.load %arg14[%c2_79, %c640_80] : memref<4x1792xf32, #tpu.memory_space<vmem>>, vector<1x128xf32>
    tpu.vector_store %arg14[%c2_79, %c640_80], %122 {strides = array<i32>} : memref<4x1792xf32, #tpu.memory_space<vmem>>, vector<1x128xf32>,
    %124 = vector.extract_strided_slice %111 {offsets = [6, 0], sizes = [1, 128], strides = [1, 1]} : vector<14x128xf32> to vector<1x128xf32>
    %c2_81 = arith.constant 2 : index
    %c768_82 = arith.constant 768 : index
    %125 = vector.load %arg14[%c2_81, %c768_82] : memref<4x1792xf32, #tpu.memory_space<vmem>>, vector<1x128xf32>
    tpu.vector_store %arg14[%c2_81, %c768_82], %124 {strides = array<i32>} : memref<4x1792xf32, #tpu.memory_space<vmem>>, vector<1x128xf32>,
    %126 = vector.extract_strided_slice %111 {offsets = [7, 0], sizes = [1, 128], strides = [1, 1]} : vector<14x128xf32> to vector<1x128xf32>
    %c2_83 = arith.constant 2 : index
    %c896_84 = arith.constant 896 : index
    %127 = vector.load %arg14[%c2_83, %c896_84] : memref<4x1792xf32, #tpu.memory_space<vmem>>, vector<1x128xf32>
    tpu.vector_store %arg14[%c2_83, %c896_84], %126 {strides = array<i32>} : memref<4x1792xf32, #tpu.memory_space<vmem>>, vector<1x128xf32>,
    %128 = vector.extract_strided_slice %111 {offsets = [8, 0], sizes = [1, 128], strides = [1, 1]} : vector<14x128xf32> to vector<1x128xf32>
    %c2_85 = arith.constant 2 : index
    %c1024_86 = arith.constant 1024 : index
    %129 = vector.load %arg14[%c2_85, %c1024_86] : memref<4x1792xf32, #tpu.memory_space<vmem>>, vector<1x128xf32>
    tpu.vector_store %arg14[%c2_85, %c1024_86], %128 {strides = array<i32>} : memref<4x1792xf32, #tpu.memory_space<vmem>>, vector<1x128xf32>,
    %130 = vector.extract_strided_slice %111 {offsets = [9, 0], sizes = [1, 128], strides = [1, 1]} : vector<14x128xf32> to vector<1x128xf32>
    %c2_87 = arith.constant 2 : index
    %c1152_88 = arith.constant 1152 : index
    %131 = vector.load %arg14[%c2_87, %c1152_88] : memref<4x1792xf32, #tpu.memory_space<vmem>>, vector<1x128xf32>
    tpu.vector_store %arg14[%c2_87, %c1152_88], %130 {strides = array<i32>} : memref<4x1792xf32, #tpu.memory_space<vmem>>, vector<1x128xf32>,
    %132 = vector.extract_strided_slice %111 {offsets = [10, 0], sizes = [1, 128], strides = [1, 1]} : vector<14x128xf32> to vector<1x128xf32>
    %c2_89 = arith.constant 2 : index
    %c1280_90 = arith.constant 1280 : index
    %133 = vector.load %arg14[%c2_89, %c1280_90] : memref<4x1792xf32, #tpu.memory_space<vmem>>, vector<1x128xf32>
    tpu.vector_store %arg14[%c2_89, %c1280_90], %132 {strides = array<i32>} : memref<4x1792xf32, #tpu.memory_space<vmem>>, vector<1x128xf32>,
    %134 = vector.extract_strided_slice %111 {offsets = [11, 0], sizes = [1, 128], strides = [1, 1]} : vector<14x128xf32> to vector<1x128xf32>
    %c2_91 = arith.constant 2 : index
    %c1408_92 = arith.constant 1408 : index
    %135 = vector.load %arg14[%c2_91, %c1408_92] : memref<4x1792xf32, #tpu.memory_space<vmem>>, vector<1x128xf32>
    tpu.vector_store %arg14[%c2_91, %c1408_92], %134 {strides = array<i32>} : memref<4x1792xf32, #tpu.memory_space<vmem>>, vector<1x128xf32>,
    %136 = vector.extract_strided_slice %111 {offsets = [12, 0], sizes = [1, 128], strides = [1, 1]} : vector<14x128xf32> to vector<1x128xf32>
    %c2_93 = arith.constant 2 : index
    %c1536_94 = arith.constant 1536 : index
    %137 = vector.load %arg14[%c2_93, %c1536_94] : memref<4x1792xf32, #tpu.memory_space<vmem>>, vector<1x128xf32>
    tpu.vector_store %arg14[%c2_93, %c1536_94], %136 {strides = array<i32>} : memref<4x1792xf32, #tpu.memory_space<vmem>>, vector<1x128xf32>,
    %138 = vector.extract_strided_slice %111 {offsets = [13, 0], sizes = [1, 128], strides = [1, 1]} : vector<14x128xf32> to vector<1x128xf32>
    %c2_95 = arith.constant 2 : index
    %c1664_96 = arith.constant 1664 : index
    %139 = vector.load %arg14[%c2_95, %c1664_96] : memref<4x1792xf32, #tpu.memory_space<vmem>>, vector<1x128xf32>
    tpu.vector_store %arg14[%c2_95, %c1664_96], %138 {strides = array<i32>} : memref<4x1792xf32, #tpu.memory_space<vmem>>, vector<1x128xf32>,
    %c0_97 = arith.constant 0 : index
    %c1_98 = arith.constant 1 : index
    %140 = vector.load %arg0[%c0_97, %c1_98] : memref<64x2xf32, #tpu.memory_space<vmem>>, vector<64x1xf32>
    %141 = vector.extract_strided_slice %140 {offsets = [0, 0], sizes = [62, 1], strides = [1, 1]} : vector<64x1xf32> to vector<62x1xf32>
    %c0_99 = arith.constant 0 : index
    %c0_100 = arith.constant 0 : index
    %142 = vector.load %arg2[%c0_99, %c0_100] : memref<3x64xf32, #tpu.memory_space<vmem>>, vector<1x64xf32>
    %143 = vector.broadcast %141 : vector<62x1xf32> to vector<62x64xf32>
    %144 = vector.broadcast %142 : vector<1x64xf32> to vector<62x64xf32>
    %145 = arith.mulf %143, %144 : vector<62x64xf32>
    %146 = vector.extract_strided_slice %140 {offsets = [1, 0], sizes = [62, 1], strides = [1, 1]} : vector<64x1xf32> to vector<62x1xf32>
    %c1_101 = arith.constant 1 : index
    %c0_102 = arith.constant 0 : index
    %147 = vector.load %arg2[%c1_101, %c0_102] : memref<3x64xf32, #tpu.memory_space<vmem>>, vector<1x64xf32>
    %148 = vector.broadcast %146 : vector<62x1xf32> to vector<62x64xf32>
    %149 = vector.broadcast %147 : vector<1x64xf32> to vector<62x64xf32>
    %150 = arith.mulf %148, %149 : vector<62x64xf32>
    %151 = arith.addf %145, %150 : vector<62x64xf32>
    %152 = vector.extract_strided_slice %140 {offsets = [2, 0], sizes = [62, 1], strides = [1, 1]} : vector<64x1xf32> to vector<62x1xf32>
    %c2_103 = arith.constant 2 : index
    %c0_104 = arith.constant 0 : index
    %153 = vector.load %arg2[%c2_103, %c0_104] : memref<3x64xf32, #tpu.memory_space<vmem>>, vector<1x64xf32>
    %154 = vector.broadcast %152 : vector<62x1xf32> to vector<62x64xf32>
    %155 = vector.broadcast %153 : vector<1x64xf32> to vector<62x64xf32>
    %156 = arith.mulf %154, %155 : vector<62x64xf32>
    %157 = arith.addf %151, %156 : vector<62x64xf32>
    %c0_105 = arith.constant 0 : index
    %c0_106 = arith.constant 0 : index
    %158 = vector.load %arg3[%c0_105, %c0_106] : memref<1x64xf32, #tpu.memory_space<vmem>>, vector<1x64xf32>
    %159 = vector.broadcast %158 : vector<1x64xf32> to vector<62x64xf32>
    %160 = arith.addf %157, %159 : vector<62x64xf32>
    %cst_107 = arith.constant 0.000000e+00 : f32
    %161 = vector.broadcast %cst_107 : f32 to vector<62x64xf32>
    %162 = arith.maximumf %160, %161 : vector<62x64xf32>
    %c0_108 = arith.constant 0 : index
    %c0_109 = arith.constant 0 : index
    %163 = vector.load %arg12[%c0_108, %c0_109] : memref<62x64xf32, #tpu.memory_space<vmem>>, vector<62x64xf32>
    tpu.vector_store %arg12[%c0_108, %c0_109], %162 {strides = array<i32>} : memref<62x64xf32, #tpu.memory_space<vmem>>, vector<62x64xf32>,
    %c0_110 = arith.constant 0 : index
    %c0_111 = arith.constant 0 : index
    %164 = tpu.strided_load %arg12[%c0_110, %c0_111] {strides = array<i32: 2, 1>} : memref<62x64xf32, #tpu.memory_space<vmem>>, vector<31x64xf32>
    %c1_112 = arith.constant 1 : index
    %c0_113 = arith.constant 0 : index
    %165 = tpu.strided_load %arg12[%c1_112, %c0_113] {strides = array<i32: 2, 1>} : memref<62x64xf32, #tpu.memory_space<vmem>>, vector<31x64xf32>
    %166 = arith.maximumf %164, %165 : vector<31x64xf32>
    %167 = vector.extract_strided_slice %166 {offsets = [0, 0], sizes = [29, 64], strides = [1, 1]} : vector<31x64xf32> to vector<29x64xf32>
    %168 = vector.extract_strided_slice %166 {offsets = [1, 0], sizes = [29, 64], strides = [1, 1]} : vector<31x64xf32> to vector<29x64xf32>
    %169 = vector.extract_strided_slice %166 {offsets = [2, 0], sizes = [29, 64], strides = [1, 1]} : vector<31x64xf32> to vector<29x64xf32>
    %170 = tpu.concatenate %167, %168, %169 in 1 : vector<29x64xf32>, vector<29x64xf32>, vector<29x64xf32> -> vector<29x192xf32>
    %c0_114 = arith.constant 0 : index
    %c0_115 = arith.constant 0 : index
    %171 = vector.load %arg4[%c0_114, %c0_115] : memref<192x128xf32, #tpu.memory_space<vmem>>, vector<192x128xf32>
    %cst_116 = arith.constant dense<0.000000e+00> : vector<29x128xf32>
    %172 = tpu.matmul %170, %171, %cst_116 {dimension_numbers = #tpu.dot_dimension_numbers<[1], [0], [0], [1], [0, 0, 1, 1], [], []>} : vector<29x192xf32>, vector<192x128xf32>, vector<29x128xf32> -> vector<29x128xf32>
    %c0_117 = arith.constant 0 : index
    %c0_118 = arith.constant 0 : index
    %173 = vector.load %arg5[%c0_117, %c0_118] : memref<1x128xf32, #tpu.memory_space<vmem>>, vector<1x128xf32>
    %174 = vector.broadcast %173 : vector<1x128xf32> to vector<29x128xf32>
    %175 = arith.addf %172, %174 : vector<29x128xf32>
    %cst_119 = arith.constant 0.000000e+00 : f32
    %176 = vector.broadcast %cst_119 : f32 to vector<29x128xf32>
    %177 = arith.maximumf %175, %176 : vector<29x128xf32>
    %c0_120 = arith.constant 0 : index
    %c0_121 = arith.constant 0 : index
    %178 = vector.load %arg13[%c0_120, %c0_121] : memref<29x128xf32, #tpu.memory_space<vmem>>, vector<29x128xf32>
    tpu.vector_store %arg13[%c0_120, %c0_121], %177 {strides = array<i32>} : memref<29x128xf32, #tpu.memory_space<vmem>>, vector<29x128xf32>,
    %c0_122 = arith.constant 0 : index
    %c0_123 = arith.constant 0 : index
    %179 = tpu.strided_load %arg13[%c0_122, %c0_123] {strides = array<i32: 2, 1>} : memref<29x128xf32, #tpu.memory_space<vmem>>, vector<14x128xf32>
    %c1_124 = arith.constant 1 : index
    %c0_125 = arith.constant 0 : index
    %180 = tpu.strided_load %arg13[%c1_124, %c0_125] {strides = array<i32: 2, 1>} : memref<29x128xf32, #tpu.memory_space<vmem>>, vector<14x128xf32>
    %181 = arith.maximumf %179, %180 : vector<14x128xf32>
    %182 = vector.extract_strided_slice %181 {offsets = [0, 0], sizes = [1, 128], strides = [1, 1]} : vector<14x128xf32> to vector<1x128xf32>
    %c1_126 = arith.constant 1 : index
    %c0_127 = arith.constant 0 : index
    %183 = vector.load %arg14[%c1_126, %c0_127] : memref<4x1792xf32, #tpu.memory_space<vmem>>, vector<1x128xf32>
    tpu.vector_store %arg14[%c1_126, %c0_127], %182 {strides = array<i32>} : memref<4x1792xf32, #tpu.memory_space<vmem>>, vector<1x128xf32>,
    %184 = vector.extract_strided_slice %181 {offsets = [1, 0], sizes = [1, 128], strides = [1, 1]} : vector<14x128xf32> to vector<1x128xf32>
    %c1_128 = arith.constant 1 : index
    %c128_129 = arith.constant 128 : index
    %185 = vector.load %arg14[%c1_128, %c128_129] : memref<4x1792xf32, #tpu.memory_space<vmem>>, vector<1x128xf32>
    tpu.vector_store %arg14[%c1_128, %c128_129], %184 {strides = array<i32>} : memref<4x1792xf32, #tpu.memory_space<vmem>>, vector<1x128xf32>,
    %186 = vector.extract_strided_slice %181 {offsets = [2, 0], sizes = [1, 128], strides = [1, 1]} : vector<14x128xf32> to vector<1x128xf32>
    %c1_130 = arith.constant 1 : index
    %c256_131 = arith.constant 256 : index
    %187 = vector.load %arg14[%c1_130, %c256_131] : memref<4x1792xf32, #tpu.memory_space<vmem>>, vector<1x128xf32>
    tpu.vector_store %arg14[%c1_130, %c256_131], %186 {strides = array<i32>} : memref<4x1792xf32, #tpu.memory_space<vmem>>, vector<1x128xf32>,
    %188 = vector.extract_strided_slice %181 {offsets = [3, 0], sizes = [1, 128], strides = [1, 1]} : vector<14x128xf32> to vector<1x128xf32>
    %c1_132 = arith.constant 1 : index
    %c384_133 = arith.constant 384 : index
    %189 = vector.load %arg14[%c1_132, %c384_133] : memref<4x1792xf32, #tpu.memory_space<vmem>>, vector<1x128xf32>
    tpu.vector_store %arg14[%c1_132, %c384_133], %188 {strides = array<i32>} : memref<4x1792xf32, #tpu.memory_space<vmem>>, vector<1x128xf32>,
    %190 = vector.extract_strided_slice %181 {offsets = [4, 0], sizes = [1, 128], strides = [1, 1]} : vector<14x128xf32> to vector<1x128xf32>
    %c1_134 = arith.constant 1 : index
    %c512_135 = arith.constant 512 : index
    %191 = vector.load %arg14[%c1_134, %c512_135] : memref<4x1792xf32, #tpu.memory_space<vmem>>, vector<1x128xf32>
    tpu.vector_store %arg14[%c1_134, %c512_135], %190 {strides = array<i32>} : memref<4x1792xf32, #tpu.memory_space<vmem>>, vector<1x128xf32>,
    %192 = vector.extract_strided_slice %181 {offsets = [5, 0], sizes = [1, 128], strides = [1, 1]} : vector<14x128xf32> to vector<1x128xf32>
    %c1_136 = arith.constant 1 : index
    %c640_137 = arith.constant 640 : index
    %193 = vector.load %arg14[%c1_136, %c640_137] : memref<4x1792xf32, #tpu.memory_space<vmem>>, vector<1x128xf32>
    tpu.vector_store %arg14[%c1_136, %c640_137], %192 {strides = array<i32>} : memref<4x1792xf32, #tpu.memory_space<vmem>>, vector<1x128xf32>,
    %194 = vector.extract_strided_slice %181 {offsets = [6, 0], sizes = [1, 128], strides = [1, 1]} : vector<14x128xf32> to vector<1x128xf32>
    %c1_138 = arith.constant 1 : index
    %c768_139 = arith.constant 768 : index
    %195 = vector.load %arg14[%c1_138, %c768_139] : memref<4x1792xf32, #tpu.memory_space<vmem>>, vector<1x128xf32>
    tpu.vector_store %arg14[%c1_138, %c768_139], %194 {strides = array<i32>} : memref<4x1792xf32, #tpu.memory_space<vmem>>, vector<1x128xf32>,
    %196 = vector.extract_strided_slice %181 {offsets = [7, 0], sizes = [1, 128], strides = [1, 1]} : vector<14x128xf32> to vector<1x128xf32>
    %c1_140 = arith.constant 1 : index
    %c896_141 = arith.constant 896 : index
    %197 = vector.load %arg14[%c1_140, %c896_141] : memref<4x1792xf32, #tpu.memory_space<vmem>>, vector<1x128xf32>
    tpu.vector_store %arg14[%c1_140, %c896_141], %196 {strides = array<i32>} : memref<4x1792xf32, #tpu.memory_space<vmem>>, vector<1x128xf32>,
    %198 = vector.extract_strided_slice %181 {offsets = [8, 0], sizes = [1, 128], strides = [1, 1]} : vector<14x128xf32> to vector<1x128xf32>
    %c1_142 = arith.constant 1 : index
    %c1024_143 = arith.constant 1024 : index
    %199 = vector.load %arg14[%c1_142, %c1024_143] : memref<4x1792xf32, #tpu.memory_space<vmem>>, vector<1x128xf32>
    tpu.vector_store %arg14[%c1_142, %c1024_143], %198 {strides = array<i32>} : memref<4x1792xf32, #tpu.memory_space<vmem>>, vector<1x128xf32>,
    %200 = vector.extract_strided_slice %181 {offsets = [9, 0], sizes = [1, 128], strides = [1, 1]} : vector<14x128xf32> to vector<1x128xf32>
    %c1_144 = arith.constant 1 : index
    %c1152_145 = arith.constant 1152 : index
    %201 = vector.load %arg14[%c1_144, %c1152_145] : memref<4x1792xf32, #tpu.memory_space<vmem>>, vector<1x128xf32>
    tpu.vector_store %arg14[%c1_144, %c1152_145], %200 {strides = array<i32>} : memref<4x1792xf32, #tpu.memory_space<vmem>>, vector<1x128xf32>,
    %202 = vector.extract_strided_slice %181 {offsets = [10, 0], sizes = [1, 128], strides = [1, 1]} : vector<14x128xf32> to vector<1x128xf32>
    %c1_146 = arith.constant 1 : index
    %c1280_147 = arith.constant 1280 : index
    %203 = vector.load %arg14[%c1_146, %c1280_147] : memref<4x1792xf32, #tpu.memory_space<vmem>>, vector<1x128xf32>
    tpu.vector_store %arg14[%c1_146, %c1280_147], %202 {strides = array<i32>} : memref<4x1792xf32, #tpu.memory_space<vmem>>, vector<1x128xf32>,
    %204 = vector.extract_strided_slice %181 {offsets = [11, 0], sizes = [1, 128], strides = [1, 1]} : vector<14x128xf32> to vector<1x128xf32>
    %c1_148 = arith.constant 1 : index
    %c1408_149 = arith.constant 1408 : index
    %205 = vector.load %arg14[%c1_148, %c1408_149] : memref<4x1792xf32, #tpu.memory_space<vmem>>, vector<1x128xf32>
    tpu.vector_store %arg14[%c1_148, %c1408_149], %204 {strides = array<i32>} : memref<4x1792xf32, #tpu.memory_space<vmem>>, vector<1x128xf32>,
    %206 = vector.extract_strided_slice %181 {offsets = [12, 0], sizes = [1, 128], strides = [1, 1]} : vector<14x128xf32> to vector<1x128xf32>
    %c1_150 = arith.constant 1 : index
    %c1536_151 = arith.constant 1536 : index
    %207 = vector.load %arg14[%c1_150, %c1536_151] : memref<4x1792xf32, #tpu.memory_space<vmem>>, vector<1x128xf32>
    tpu.vector_store %arg14[%c1_150, %c1536_151], %206 {strides = array<i32>} : memref<4x1792xf32, #tpu.memory_space<vmem>>, vector<1x128xf32>,
    %208 = vector.extract_strided_slice %181 {offsets = [13, 0], sizes = [1, 128], strides = [1, 1]} : vector<14x128xf32> to vector<1x128xf32>
    %c1_152 = arith.constant 1 : index
    %c1664_153 = arith.constant 1664 : index
    %209 = vector.load %arg14[%c1_152, %c1664_153] : memref<4x1792xf32, #tpu.memory_space<vmem>>, vector<1x128xf32>
    tpu.vector_store %arg14[%c1_152, %c1664_153], %208 {strides = array<i32>} : memref<4x1792xf32, #tpu.memory_space<vmem>>, vector<1x128xf32>,
    %c0_154 = arith.constant 0 : index
    %c1_155 = arith.constant 1 : index
    %210 = vector.load %arg1[%c0_154, %c1_155] : memref<64x2xf32, #tpu.memory_space<vmem>>, vector<64x1xf32>
    %211 = vector.extract_strided_slice %210 {offsets = [0, 0], sizes = [62, 1], strides = [1, 1]} : vector<64x1xf32> to vector<62x1xf32>
    %c0_156 = arith.constant 0 : index
    %c0_157 = arith.constant 0 : index
    %212 = vector.load %arg2[%c0_156, %c0_157] : memref<3x64xf32, #tpu.memory_space<vmem>>, vector<1x64xf32>
    %213 = vector.broadcast %211 : vector<62x1xf32> to vector<62x64xf32>
    %214 = vector.broadcast %212 : vector<1x64xf32> to vector<62x64xf32>
    %215 = arith.mulf %213, %214 : vector<62x64xf32>
    %216 = vector.extract_strided_slice %210 {offsets = [1, 0], sizes = [62, 1], strides = [1, 1]} : vector<64x1xf32> to vector<62x1xf32>
    %c1_158 = arith.constant 1 : index
    %c0_159 = arith.constant 0 : index
    %217 = vector.load %arg2[%c1_158, %c0_159] : memref<3x64xf32, #tpu.memory_space<vmem>>, vector<1x64xf32>
    %218 = vector.broadcast %216 : vector<62x1xf32> to vector<62x64xf32>
    %219 = vector.broadcast %217 : vector<1x64xf32> to vector<62x64xf32>
    %220 = arith.mulf %218, %219 : vector<62x64xf32>
    %221 = arith.addf %215, %220 : vector<62x64xf32>
    %222 = vector.extract_strided_slice %210 {offsets = [2, 0], sizes = [62, 1], strides = [1, 1]} : vector<64x1xf32> to vector<62x1xf32>
    %c2_160 = arith.constant 2 : index
    %c0_161 = arith.constant 0 : index
    %223 = vector.load %arg2[%c2_160, %c0_161] : memref<3x64xf32, #tpu.memory_space<vmem>>, vector<1x64xf32>
    %224 = vector.broadcast %222 : vector<62x1xf32> to vector<62x64xf32>
    %225 = vector.broadcast %223 : vector<1x64xf32> to vector<62x64xf32>
    %226 = arith.mulf %224, %225 : vector<62x64xf32>
    %227 = arith.addf %221, %226 : vector<62x64xf32>
    %c0_162 = arith.constant 0 : index
    %c0_163 = arith.constant 0 : index
    %228 = vector.load %arg3[%c0_162, %c0_163] : memref<1x64xf32, #tpu.memory_space<vmem>>, vector<1x64xf32>
    %229 = vector.broadcast %228 : vector<1x64xf32> to vector<62x64xf32>
    %230 = arith.addf %227, %229 : vector<62x64xf32>
    %cst_164 = arith.constant 0.000000e+00 : f32
    %231 = vector.broadcast %cst_164 : f32 to vector<62x64xf32>
    %232 = arith.maximumf %230, %231 : vector<62x64xf32>
    %c0_165 = arith.constant 0 : index
    %c0_166 = arith.constant 0 : index
    %233 = vector.load %arg12[%c0_165, %c0_166] : memref<62x64xf32, #tpu.memory_space<vmem>>, vector<62x64xf32>
    tpu.vector_store %arg12[%c0_165, %c0_166], %232 {strides = array<i32>} : memref<62x64xf32, #tpu.memory_space<vmem>>, vector<62x64xf32>,
    %c0_167 = arith.constant 0 : index
    %c0_168 = arith.constant 0 : index
    %234 = tpu.strided_load %arg12[%c0_167, %c0_168] {strides = array<i32: 2, 1>} : memref<62x64xf32, #tpu.memory_space<vmem>>, vector<31x64xf32>
    %c1_169 = arith.constant 1 : index
    %c0_170 = arith.constant 0 : index
    %235 = tpu.strided_load %arg12[%c1_169, %c0_170] {strides = array<i32: 2, 1>} : memref<62x64xf32, #tpu.memory_space<vmem>>, vector<31x64xf32>
    %236 = arith.maximumf %234, %235 : vector<31x64xf32>
    %237 = vector.extract_strided_slice %236 {offsets = [0, 0], sizes = [29, 64], strides = [1, 1]} : vector<31x64xf32> to vector<29x64xf32>
    %238 = vector.extract_strided_slice %236 {offsets = [1, 0], sizes = [29, 64], strides = [1, 1]} : vector<31x64xf32> to vector<29x64xf32>
    %239 = vector.extract_strided_slice %236 {offsets = [2, 0], sizes = [29, 64], strides = [1, 1]} : vector<31x64xf32> to vector<29x64xf32>
    %240 = tpu.concatenate %237, %238, %239 in 1 : vector<29x64xf32>, vector<29x64xf32>, vector<29x64xf32> -> vector<29x192xf32>
    %c0_171 = arith.constant 0 : index
    %c0_172 = arith.constant 0 : index
    %241 = vector.load %arg4[%c0_171, %c0_172] : memref<192x128xf32, #tpu.memory_space<vmem>>, vector<192x128xf32>
    %cst_173 = arith.constant dense<0.000000e+00> : vector<29x128xf32>
    %242 = tpu.matmul %240, %241, %cst_173 {dimension_numbers = #tpu.dot_dimension_numbers<[1], [0], [0], [1], [0, 0, 1, 1], [], []>} : vector<29x192xf32>, vector<192x128xf32>, vector<29x128xf32> -> vector<29x128xf32>
    %c0_174 = arith.constant 0 : index
    %c0_175 = arith.constant 0 : index
    %243 = vector.load %arg5[%c0_174, %c0_175] : memref<1x128xf32, #tpu.memory_space<vmem>>, vector<1x128xf32>
    %244 = vector.broadcast %243 : vector<1x128xf32> to vector<29x128xf32>
    %245 = arith.addf %242, %244 : vector<29x128xf32>
    %cst_176 = arith.constant 0.000000e+00 : f32
    %246 = vector.broadcast %cst_176 : f32 to vector<29x128xf32>
    %247 = arith.maximumf %245, %246 : vector<29x128xf32>
    %c0_177 = arith.constant 0 : index
    %c0_178 = arith.constant 0 : index
    %248 = vector.load %arg13[%c0_177, %c0_178] : memref<29x128xf32, #tpu.memory_space<vmem>>, vector<29x128xf32>
    tpu.vector_store %arg13[%c0_177, %c0_178], %247 {strides = array<i32>} : memref<29x128xf32, #tpu.memory_space<vmem>>, vector<29x128xf32>,
    %c0_179 = arith.constant 0 : index
    %c0_180 = arith.constant 0 : index
    %249 = tpu.strided_load %arg13[%c0_179, %c0_180] {strides = array<i32: 2, 1>} : memref<29x128xf32, #tpu.memory_space<vmem>>, vector<14x128xf32>
    %c1_181 = arith.constant 1 : index
    %c0_182 = arith.constant 0 : index
    %250 = tpu.strided_load %arg13[%c1_181, %c0_182] {strides = array<i32: 2, 1>} : memref<29x128xf32, #tpu.memory_space<vmem>>, vector<14x128xf32>
    %251 = arith.maximumf %249, %250 : vector<14x128xf32>
    %252 = vector.extract_strided_slice %251 {offsets = [0, 0], sizes = [1, 128], strides = [1, 1]} : vector<14x128xf32> to vector<1x128xf32>
    %c3 = arith.constant 3 : index
    %c0_183 = arith.constant 0 : index
    %253 = vector.load %arg14[%c3, %c0_183] : memref<4x1792xf32, #tpu.memory_space<vmem>>, vector<1x128xf32>
    tpu.vector_store %arg14[%c3, %c0_183], %252 {strides = array<i32>} : memref<4x1792xf32, #tpu.memory_space<vmem>>, vector<1x128xf32>,
    %254 = vector.extract_strided_slice %251 {offsets = [1, 0], sizes = [1, 128], strides = [1, 1]} : vector<14x128xf32> to vector<1x128xf32>
    %c3_184 = arith.constant 3 : index
    %c128_185 = arith.constant 128 : index
    %255 = vector.load %arg14[%c3_184, %c128_185] : memref<4x1792xf32, #tpu.memory_space<vmem>>, vector<1x128xf32>
    tpu.vector_store %arg14[%c3_184, %c128_185], %254 {strides = array<i32>} : memref<4x1792xf32, #tpu.memory_space<vmem>>, vector<1x128xf32>,
    %256 = vector.extract_strided_slice %251 {offsets = [2, 0], sizes = [1, 128], strides = [1, 1]} : vector<14x128xf32> to vector<1x128xf32>
    %c3_186 = arith.constant 3 : index
    %c256_187 = arith.constant 256 : index
    %257 = vector.load %arg14[%c3_186, %c256_187] : memref<4x1792xf32, #tpu.memory_space<vmem>>, vector<1x128xf32>
    tpu.vector_store %arg14[%c3_186, %c256_187], %256 {strides = array<i32>} : memref<4x1792xf32, #tpu.memory_space<vmem>>, vector<1x128xf32>,
    %258 = vector.extract_strided_slice %251 {offsets = [3, 0], sizes = [1, 128], strides = [1, 1]} : vector<14x128xf32> to vector<1x128xf32>
    %c3_188 = arith.constant 3 : index
    %c384_189 = arith.constant 384 : index
    %259 = vector.load %arg14[%c3_188, %c384_189] : memref<4x1792xf32, #tpu.memory_space<vmem>>, vector<1x128xf32>
    tpu.vector_store %arg14[%c3_188, %c384_189], %258 {strides = array<i32>} : memref<4x1792xf32, #tpu.memory_space<vmem>>, vector<1x128xf32>,
    %260 = vector.extract_strided_slice %251 {offsets = [4, 0], sizes = [1, 128], strides = [1, 1]} : vector<14x128xf32> to vector<1x128xf32>
    %c3_190 = arith.constant 3 : index
    %c512_191 = arith.constant 512 : index
    %261 = vector.load %arg14[%c3_190, %c512_191] : memref<4x1792xf32, #tpu.memory_space<vmem>>, vector<1x128xf32>
    tpu.vector_store %arg14[%c3_190, %c512_191], %260 {strides = array<i32>} : memref<4x1792xf32, #tpu.memory_space<vmem>>, vector<1x128xf32>,
    %262 = vector.extract_strided_slice %251 {offsets = [5, 0], sizes = [1, 128], strides = [1, 1]} : vector<14x128xf32> to vector<1x128xf32>
    %c3_192 = arith.constant 3 : index
    %c640_193 = arith.constant 640 : index
    %263 = vector.load %arg14[%c3_192, %c640_193] : memref<4x1792xf32, #tpu.memory_space<vmem>>, vector<1x128xf32>
    tpu.vector_store %arg14[%c3_192, %c640_193], %262 {strides = array<i32>} : memref<4x1792xf32, #tpu.memory_space<vmem>>, vector<1x128xf32>,
    %264 = vector.extract_strided_slice %251 {offsets = [6, 0], sizes = [1, 128], strides = [1, 1]} : vector<14x128xf32> to vector<1x128xf32>
    %c3_194 = arith.constant 3 : index
    %c768_195 = arith.constant 768 : index
    %265 = vector.load %arg14[%c3_194, %c768_195] : memref<4x1792xf32, #tpu.memory_space<vmem>>, vector<1x128xf32>
    tpu.vector_store %arg14[%c3_194, %c768_195], %264 {strides = array<i32>} : memref<4x1792xf32, #tpu.memory_space<vmem>>, vector<1x128xf32>,
    %266 = vector.extract_strided_slice %251 {offsets = [7, 0], sizes = [1, 128], strides = [1, 1]} : vector<14x128xf32> to vector<1x128xf32>
    %c3_196 = arith.constant 3 : index
    %c896_197 = arith.constant 896 : index
    %267 = vector.load %arg14[%c3_196, %c896_197] : memref<4x1792xf32, #tpu.memory_space<vmem>>, vector<1x128xf32>
    tpu.vector_store %arg14[%c3_196, %c896_197], %266 {strides = array<i32>} : memref<4x1792xf32, #tpu.memory_space<vmem>>, vector<1x128xf32>,
    %268 = vector.extract_strided_slice %251 {offsets = [8, 0], sizes = [1, 128], strides = [1, 1]} : vector<14x128xf32> to vector<1x128xf32>
    %c3_198 = arith.constant 3 : index
    %c1024_199 = arith.constant 1024 : index
    %269 = vector.load %arg14[%c3_198, %c1024_199] : memref<4x1792xf32, #tpu.memory_space<vmem>>, vector<1x128xf32>
    tpu.vector_store %arg14[%c3_198, %c1024_199], %268 {strides = array<i32>} : memref<4x1792xf32, #tpu.memory_space<vmem>>, vector<1x128xf32>,
    %270 = vector.extract_strided_slice %251 {offsets = [9, 0], sizes = [1, 128], strides = [1, 1]} : vector<14x128xf32> to vector<1x128xf32>
    %c3_200 = arith.constant 3 : index
    %c1152_201 = arith.constant 1152 : index
    %271 = vector.load %arg14[%c3_200, %c1152_201] : memref<4x1792xf32, #tpu.memory_space<vmem>>, vector<1x128xf32>
    tpu.vector_store %arg14[%c3_200, %c1152_201], %270 {strides = array<i32>} : memref<4x1792xf32, #tpu.memory_space<vmem>>, vector<1x128xf32>,
    %272 = vector.extract_strided_slice %251 {offsets = [10, 0], sizes = [1, 128], strides = [1, 1]} : vector<14x128xf32> to vector<1x128xf32>
    %c3_202 = arith.constant 3 : index
    %c1280_203 = arith.constant 1280 : index
    %273 = vector.load %arg14[%c3_202, %c1280_203] : memref<4x1792xf32, #tpu.memory_space<vmem>>, vector<1x128xf32>
    tpu.vector_store %arg14[%c3_202, %c1280_203], %272 {strides = array<i32>} : memref<4x1792xf32, #tpu.memory_space<vmem>>, vector<1x128xf32>,
    %274 = vector.extract_strided_slice %251 {offsets = [11, 0], sizes = [1, 128], strides = [1, 1]} : vector<14x128xf32> to vector<1x128xf32>
    %c3_204 = arith.constant 3 : index
    %c1408_205 = arith.constant 1408 : index
    %275 = vector.load %arg14[%c3_204, %c1408_205] : memref<4x1792xf32, #tpu.memory_space<vmem>>, vector<1x128xf32>
    tpu.vector_store %arg14[%c3_204, %c1408_205], %274 {strides = array<i32>} : memref<4x1792xf32, #tpu.memory_space<vmem>>, vector<1x128xf32>,
    %276 = vector.extract_strided_slice %251 {offsets = [12, 0], sizes = [1, 128], strides = [1, 1]} : vector<14x128xf32> to vector<1x128xf32>
    %c3_206 = arith.constant 3 : index
    %c1536_207 = arith.constant 1536 : index
    %277 = vector.load %arg14[%c3_206, %c1536_207] : memref<4x1792xf32, #tpu.memory_space<vmem>>, vector<1x128xf32>
    tpu.vector_store %arg14[%c3_206, %c1536_207], %276 {strides = array<i32>} : memref<4x1792xf32, #tpu.memory_space<vmem>>, vector<1x128xf32>,
    %278 = vector.extract_strided_slice %251 {offsets = [13, 0], sizes = [1, 128], strides = [1, 1]} : vector<14x128xf32> to vector<1x128xf32>
    %c3_208 = arith.constant 3 : index
    %c1664_209 = arith.constant 1664 : index
    %279 = vector.load %arg14[%c3_208, %c1664_209] : memref<4x1792xf32, #tpu.memory_space<vmem>>, vector<1x128xf32>
    tpu.vector_store %arg14[%c3_208, %c1664_209], %278 {strides = array<i32>} : memref<4x1792xf32, #tpu.memory_space<vmem>>, vector<1x128xf32>,
    %c0_210 = arith.constant 0 : index
    %c0_211 = arith.constant 0 : index
    %280 = vector.load %arg14[%c0_210, %c0_211] : memref<4x1792xf32, #tpu.memory_space<vmem>>, vector<4x1792xf32>
    %281 = arith.truncf %280 : vector<4x1792xf32> to vector<4x1792xbf16>
    %c0_212 = arith.constant 0 : index
    %c0_213 = arith.constant 0 : index
    %282 = vector.load %arg6[%c0_212, %c0_213] : memref<1792x512xbf16, #tpu.memory_space<vmem>>, vector<1792x512xbf16>
    %cst_214 = arith.constant dense<0.000000e+00> : vector<4x512xf32>
    %283 = tpu.matmul %281, %282, %cst_214 {dimension_numbers = #tpu.dot_dimension_numbers<[1], [0], [0], [1], [0, 0, 1, 1], [], []>} : vector<4x1792xbf16>, vector<1792x512xbf16>, vector<4x512xf32> -> vector<4x512xf32>
    %c0_215 = arith.constant 0 : index
    %c0_216 = arith.constant 0 : index
    %284 = vector.load %arg7[%c0_215, %c0_216] : memref<1x512xf32, #tpu.memory_space<vmem>>, vector<1x512xf32>
    %285 = vector.broadcast %284 : vector<1x512xf32> to vector<4x512xf32>
    %286 = arith.addf %283, %285 : vector<4x512xf32>
    %cst_217 = arith.constant 0.000000e+00 : f32
    %287 = vector.broadcast %cst_217 : f32 to vector<4x512xf32>
    %288 = arith.maximumf %286, %287 : vector<4x512xf32>
    %c0_218 = arith.constant 0 : index
    %c0_219 = arith.constant 0 : index
    %289 = vector.load %arg11[%c0_218, %c0_219] : memref<4x512xf32, #tpu.memory_space<vmem>>, vector<4x512xf32>
    tpu.vector_store %arg11[%c0_218, %c0_219], %288 {strides = array<i32>} : memref<4x512xf32, #tpu.memory_space<vmem>>, vector<4x512xf32>,
    %290 = vector.extract_strided_slice %288 {offsets = [0, 0], sizes = [2, 512], strides = [1, 1]} : vector<4x512xf32> to vector<2x512xf32>
    %291 = vector.extract_strided_slice %288 {offsets = [2, 0], sizes = [2, 512], strides = [1, 1]} : vector<4x512xf32> to vector<2x512xf32>
    %292 = arith.subf %290, %291 : vector<2x512xf32>
    %293 = math.absf %292 : vector<2x512xf32>
    %c0_220 = arith.constant 0 : index
    %c0_221 = arith.constant 0 : index
    %294 = vector.load %arg8[%c0_220, %c0_221] : memref<512x1xf32, #tpu.memory_space<vmem>>, vector<512x1xf32>
    %cst_222 = arith.constant dense<0.000000e+00> : vector<2x1xf32>
    %295 = tpu.matmul %293, %294, %cst_222 {dimension_numbers = #tpu.dot_dimension_numbers<[1], [0], [0], [1], [0, 0, 1, 1], [], []>} : vector<2x512xf32>, vector<512x1xf32>, vector<2x1xf32> -> vector<2x1xf32>
    %c0_223 = arith.constant 0 : index
    %c0_224 = arith.constant 0 : index
    %296 = vector.load %arg9[%c0_223, %c0_224] : memref<1x1xf32, #tpu.memory_space<vmem>>, vector<1x1xf32>
    %297 = vector.broadcast %296 : vector<1x1xf32> to vector<2x1xf32>
    %298 = arith.addf %295, %297 : vector<2x1xf32>
    %299 = arith.negf %298 : vector<2x1xf32>
    %300 = math.exp %299 : vector<2x1xf32>
    %cst_225 = arith.constant 1.000000e+00 : f32
    %301 = vector.broadcast %cst_225 : f32 to vector<2x1xf32>
    %302 = arith.addf %301, %300 : vector<2x1xf32>
    %303 = arith.divf %301, %302 : vector<2x1xf32>
    %c0_226 = arith.constant 0 : index
    %c0_227 = arith.constant 0 : index
    %304 = vector.load %arg10[%c0_226, %c0_227] : memref<2x1xf32, #tpu.memory_space<vmem>>, vector<2x1xf32>
    tpu.vector_store %arg10[%c0_226, %c0_227], %303 {strides = array<i32>} : memref<2x1xf32, #tpu.memory_space<vmem>>, vector<2x1xf32>,
    return
  }
}

</mosaic_0001>

<llo_original>
// kernel: tpu_custom_call.1
$region0: #{tpu_custom_call.1}
  #allocation0 [shape = 'u32[]', space=smem, size = 0x4, offset = 0x4, fixed_abs, tag = 'smem constant byte address 0x4 - core index']
  #allocation1 [shape = 'u32[72,128]{1,0:T(1,128)}', space=vmem, size = 0x9000, scoped, tag = 'internal scratch']
  #allocation2 [shape = 'f32[62,64]{1,0:T(8,128)}', space=vmem, size = 0x8000, scoped, tag = 'scratch operand']
  #allocation3 [shape = 'f32[29,128]{1,0:T(8,128)}', space=vmem, size = 0x4000, scoped, tag = 'scratch operand']
  #allocation4 [shape = 'f32[4,1792]{1,0:T(4,128)}', space=vmem, size = 0x7000, scoped, tag = 'scratch operand']
  #allocation5 [shape = 'f32[1,1]{1,0:T(1,128)S(1)}', space=vmem, size = 0x200, scoped, tag = 'scoped memory for tpu_custom_call.1']
  %s0 = inlined_call_operand.vmem [shape: f32[64,2], index: 0, kind: input, shape index: {}]
  %s1 = inlined_call_operand.vmem [shape: f32[64,2], index: 1, kind: input, shape index: {}]
  %s2 = inlined_call_operand.hbm [shape: f32[3,64], index: 2, kind: input, shape index: {}]
  %s3 = inlined_call_operand.hbm [shape: f32[1,64], index: 3, kind: input, shape index: {}]
  %s4 = inlined_call_operand.hbm [shape: f32[192,128], index: 4, kind: input, shape index: {}]
  %s5 = inlined_call_operand.hbm [shape: f32[1,128], index: 5, kind: input, shape index: {}]
  %s6 = inlined_call_operand.hbm [shape: bf16[1792,512], index: 6, kind: input, shape index: {}]
  %s7 = inlined_call_operand.hbm [shape: f32[1,512], index: 7, kind: input, shape index: {}]
  %s8 = inlined_call_operand.vmem [shape: f32[512,1], index: 8, kind: input, shape index: {}]
  %s9 = inlined_call_operand.<no memory space> [shape: f32[1,1], index: 9, kind: input, shape index: {}]
  %s10 = inlined_call_operand.vmem [shape: f32[2,1], index: 10, kind: output, shape index: {0}]
  %s11 = inlined_call_operand.hbm [shape: f32[4,512], index: 11, kind: output, shape index: {1}]
  %12 = xla_tuple %s10, %s11
  %s13 = sld [smem:[#allocation0]]
  $region82: #{tpu_custom_call.1} parent=0
    _
  %s15 = ssub.s32 1, %s13
  %s16 = scalar_select 0, %s15, %s13
  %v17 = vstv %s9
  %18 = vst [vmem:[#allocation5] sm:$0x1] %v17
  $region1: #{tpu_custom_call.1} parent=0
    #allocation6 [shape = 'u8[2048]{0}', space=vmem, size = 0x800, scoped, tag = 'input window, operand 2, single buffered']
    #allocation7 [shape = 's32[1]{0}', space=sflag, size = 0x4, scoped, tag = 'scoped memory for tpu_custom_call.1']
    #allocation8 [shape = 's32[1]{0}', space=sflag, size = 0x4, scoped, tag = 'scoped memory for tpu_custom_call.1']
    #allocation9 [shape = 'u8[512]{0}', space=vmem, size = 0x400, scoped, tag = 'input window, operand 3, single buffered']
    #allocation10 [shape = 's32[1]{0}', space=sflag, size = 0x4, scoped, tag = 'scoped memory for tpu_custom_call.1']
    #allocation11 [shape = 'u8[98304]{0}', space=vmem, size = 0x18000, scoped, tag = 'input window, operand 4, single buffered']
    #allocation12 [shape = 'u8[512]{0}', space=vmem, size = 0x400, scoped, tag = 'input window, operand 5, single buffered']
    #allocation13 [shape = 's32[1]{0}', space=sflag, size = 0x4, scoped, tag = 'scoped memory for tpu_custom_call.1']
    #allocation14 [shape = 'u8[1835008]{0}', space=vmem, size = 0x1c0000, scoped, tag = 'input window, operand 6, single buffered']
    #allocation15 [shape = 'u8[2048]{0}', space=vmem, size = 0x800, scoped, tag = 'input window, operand 7, single buffered']
    #allocation16 [shape = 's32[1]{0}', space=sflag, size = 0x4, scoped, tag = 'scoped memory for tpu_custom_call.1']
    #allocation17 [shape = 'u8[8192]{0}', space=vmem, size = 0x2000, scoped, tag = 'output window, operand 1, single buffered']
    %19 = vsyncpa [#allocation7], 0
    %20 = vsyncpa [#allocation10], 0
    %21 = vsyncpa [#allocation13], 0
    %22 = vsyncpa [#allocation16], 0
    %23 = vsyncpa [#allocation8], 0
    // Predicated region
    $region2: #{tpu_custom_call.1} parent=1 // pred_check
      _
    $region3: #{tpu_custom_call.1} parent=1 // pred_check_branch
      %25 = sbr.rel (0) target = $region5
    $region4: #{tpu_custom_call.1} parent=1 // pred_region
      _
    $region5: #{tpu_custom_call.1} parent=1 // pred_fallthru
      _
    // Predicated region
    $region6: #{tpu_custom_call.1} parent=1 // pred_check
      _
    $region7: #{tpu_custom_call.1} parent=1 // pred_check_branch
      %27 = sbr.rel (0) target = $region9
    $region8: #{tpu_custom_call.1} parent=1 // pred_region
      _
    $region9: #{tpu_custom_call.1} parent=1 // pred_fallthru
      _
    // Predicated region
    $region10: #{tpu_custom_call.1} parent=1 // pred_check
      _
    $region11: #{tpu_custom_call.1} parent=1 // pred_check_branch
      %29 = sbr.rel (0) target = $region13
    $region12: #{tpu_custom_call.1} parent=1 // pred_region
      %31 = vsyncadd [#allocation7], 0
      %s33 = sshll.u32 %s2, 4
      %s34 = int_to_ptr.hbm [resolvable:$true] %s33
      %s35 = sshll.u32 [#allocation6], 4
      %s36 = int_to_ptr.vmem [resolvable:$true] %s35
      %38 = dma.hbm_to_vmem [thread:$0]  %s34, 64, %s36, [#allocation7]
    $region13: #{tpu_custom_call.1} parent=1 // pred_fallthru
      _
    // Predicated region
    $region14: #{tpu_custom_call.1} parent=1 // pred_check
      _
    $region15: #{tpu_custom_call.1} parent=1 // pred_check_branch
      %40 = sbr.rel (0) target = $region17
    $region16: #{tpu_custom_call.1} parent=1 // pred_region
      %42 = vsyncadd [#allocation10], 0
      %s44 = sshll.u32 %s3, 4
      %s45 = int_to_ptr.hbm [resolvable:$true] %s44
      %s46 = sshll.u32 [#allocation9], 4
      %s47 = int_to_ptr.vmem [resolvable:$true] %s46
      %49 = dma.hbm_to_vmem [thread:$0]  %s45, 16, %s47, [#allocation10]
    $region17: #{tpu_custom_call.1} parent=1 // pred_fallthru
      _
    // Predicated region
    $region18: #{tpu_custom_call.1} parent=1 // pred_check
      _
    $region19: #{tpu_custom_call.1} parent=1 // pred_check_branch
      %51 = sbr.rel (0) target = $region21
    $region20: #{tpu_custom_call.1} parent=1 // pred_region
      %53 = vsyncadd [#allocation10], 0
      %s54 = sshll.u32 %s4, 4
      %s55 = int_to_ptr.hbm [resolvable:$true] %s54
      %s56 = sshll.u32 [#allocation11], 4
      %s57 = int_to_ptr.vmem [resolvable:$true] %s56
      %62 = dma.hbm_to_vmem [thread:$0]  %s55, 3072, %s57, [#allocation10], 128, 128, 8
    $region21: #{tpu_custom_call.1} parent=1 // pred_fallthru
      _
    // Predicated region
    $region22: #{tpu_custom_call.1} parent=1 // pred_check
      _
    $region23: #{tpu_custom_call.1} parent=1 // pred_check_branch
      %64 = sbr.rel (0) target = $region25
    $region24: #{tpu_custom_call.1} parent=1 // pred_region
      %66 = vsyncadd [#allocation13], 0
      %s68 = sshll.u32 %s5, 4
      %s69 = int_to_ptr.hbm [resolvable:$true] %s68
      %s70 = sshll.u32 [#allocation12], 4
      %s71 = int_to_ptr.vmem [resolvable:$true] %s70
      %73 = dma.hbm_to_vmem [thread:$0]  %s69, 16, %s71, [#allocation13]
    $region25: #{tpu_custom_call.1} parent=1 // pred_fallthru
      _
    // Predicated region
    $region26: #{tpu_custom_call.1} parent=1 // pred_check
      _
    $region27: #{tpu_custom_call.1} parent=1 // pred_check_branch
      %75 = sbr.rel (0) target = $region29
    $region28: #{tpu_custom_call.1} parent=1 // pred_region
      %77 = vsyncadd [#allocation13], 0
      %s78 = sshll.u32 %s6, 4
      %s79 = int_to_ptr.hbm [resolvable:$true] %s78
      %s80 = sshll.u32 [#allocation14], 4
      %s81 = int_to_ptr.vmem [resolvable:$true] %s80
      %86 = dma.hbm_to_vmem [thread:$0]  %s79, 57344, %s81, [#allocation13], 256, 256, 16
    $region29: #{tpu_custom_call.1} parent=1 // pred_fallthru
      _
    // Predicated region
    $region30: #{tpu_custom_call.1} parent=1 // pred_check
      _
    $region31: #{tpu_custom_call.1} parent=1 // pred_check_branch
      %88 = sbr.rel (0) target = $region33
    $region32: #{tpu_custom_call.1} parent=1 // pred_region
      %90 = vsyncadd [#allocation16], 0
      %s92 = sshll.u32 %s7, 4
      %s93 = int_to_ptr.hbm [resolvable:$true] %s92
      %s94 = sshll.u32 [#allocation15], 4
      %s95 = int_to_ptr.vmem [resolvable:$true] %s94
      %97 = dma.hbm_to_vmem [thread:$0]  %s93, 64, %s95, [#allocation16]
    $region33: #{tpu_custom_call.1} parent=1 // pred_fallthru
      _
    // Predicated region
    $region34: #{tpu_custom_call.1} parent=1 // pred_check
      _
    $region35: #{tpu_custom_call.1} parent=1 // pred_check_branch
      %99 = sbr.rel (0) target = $region37
    $region36: #{tpu_custom_call.1} parent=1 // pred_region
      _
    $region37: #{tpu_custom_call.1} parent=1 // pred_fallthru
      _
    // Predicated region
    $region38: #{tpu_custom_call.1} parent=1 // pred_check
      _
    $region39: #{tpu_custom_call.1} parent=1 // pred_check_branch
      %101 = sbr.rel (0) target = $region41
    $region40: #{tpu_custom_call.1} parent=1 // pred_region
      _
    $region41: #{tpu_custom_call.1} parent=1 // pred_fallthru
      _
    // Predicated region
    $region42: #{tpu_custom_call.1} parent=1 // pred_check
      _
    $region43: #{tpu_custom_call.1} parent=1 // pred_check_branch
      %103 = sbr.rel (0) target = $region45
    $region44: #{tpu_custom_call.1} parent=1 // pred_region
      %105 = dma.done [#allocation7], 64
    $region45: #{tpu_custom_call.1} parent=1 // pred_fallthru
      _
    // Predicated region
    $region46: #{tpu_custom_call.1} parent=1 // pred_check
      _
    $region47: #{tpu_custom_call.1} parent=1 // pred_check_branch
      %107 = sbr.rel (0) target = $region49
    $region48: #{tpu_custom_call.1} parent=1 // pred_region
      %109 = dma.done [#allocation10], 16
    $region49: #{tpu_custom_call.1} parent=1 // pred_fallthru
      _
    // Predicated region
    $region50: #{tpu_custom_call.1} parent=1 // pred_check
      _
    $region51: #{tpu_custom_call.1} parent=1 // pred_check_branch
      %111 = sbr.rel (0) target = $region53
    $region52: #{tpu_custom_call.1} parent=1 // pred_region
      %113 = dma.done [#allocation10], 3072
    $region53: #{tpu_custom_call.1} parent=1 // pred_fallthru
      _
    // Predicated region
    $region54: #{tpu_custom_call.1} parent=1 // pred_check
      _
    $region55: #{tpu_custom_call.1} parent=1 // pred_check_branch
      %115 = sbr.rel (0) target = $region57
    $region56: #{tpu_custom_call.1} parent=1 // pred_region
      %117 = dma.done [#allocation13], 16
    $region57: #{tpu_custom_call.1} parent=1 // pred_fallthru
      _
    // Predicated region
    $region58: #{tpu_custom_call.1} parent=1 // pred_check
      _
    $region59: #{tpu_custom_call.1} parent=1 // pred_check_branch
      %119 = sbr.rel (0) target = $region61
    $region60: #{tpu_custom_call.1} parent=1 // pred_region
      %121 = dma.done [#allocation13], 57344
    $region61: #{tpu_custom_call.1} parent=1 // pred_fallthru
      _
    // Predicated region
    $region62: #{tpu_custom_call.1} parent=1 // pred_check
      _
    $region63: #{tpu_custom_call.1} parent=1 // pred_check_branch
      %123 = sbr.rel (0) target = $region65
    $region64: #{tpu_custom_call.1} parent=1 // pred_region
      %125 = dma.done [#allocation16], 64
    $region65: #{tpu_custom_call.1} parent=1 // pred_fallthru
      _
    %v126 = vld [vmem:[%s0] sm:$0xff]
    %v127 = vld [vmem:[%s0 + $0x8] sm:$0xff]
    %v128 = vld [vmem:[%s0 + $0x10] sm:$0xff]
    %v129 = vld [vmem:[%s0 + $0x18] sm:$0xff]
    %v130 = vld [vmem:[%s0 + $0x20] sm:$0xff]
    %v131 = vld [vmem:[%s0 + $0x28] sm:$0xff]
    %v132 = vld [vmem:[%s0 + $0x30] sm:$0xff]
    %v133 = vld [vmem:[%s0 + $0x38] sm:$0xff]
    %v134 = vld [vmem:[#allocation6] sm:$0x1]
    %136 = vset.pattern.permute.xlu0 0
    %137 = vperm.xlu0 %136, %v126
    %v138 = vpop.permute.xlu0 %137
    %141 = vset.pattern.permute.xlu0 0
    %142 = vperm.xlu0 %141, %v127
    %v143 = vpop.permute.xlu0 %142
    %146 = vset.pattern.permute.xlu0 0
    %147 = vperm.xlu0 %146, %v128
    %v148 = vpop.permute.xlu0 %147
    %151 = vset.pattern.permute.xlu0 0
    %152 = vperm.xlu0 %151, %v129
    %v153 = vpop.permute.xlu0 %152
    %156 = vset.pattern.permute.xlu0 0
    %157 = vperm.xlu0 %156, %v130
    %v158 = vpop.permute.xlu0 %157
    %161 = vset.pattern.permute.xlu0 0
    %162 = vperm.xlu0 %161, %v131
    %v163 = vpop.permute.xlu0 %162
    %166 = vset.pattern.permute.xlu0 0
    %167 = vperm.xlu0 %166, %v132
    %v168 = vpop.permute.xlu0 %167
    %171 = vset.pattern.permute.xlu0 0
    %172 = vperm.xlu0 %171, %v133
    %v173 = vpop.permute.xlu0 %172
    %v175 = vperm.slane %v134, 0
    %v176 = vmul.f32 %v138, %v175
    %v177 = vmul.f32 %v143, %v175
    %v178 = vmul.f32 %v148, %v175
    %v179 = vmul.f32 %v153, %v175
    %v180 = vmul.f32 %v158, %v175
    %v181 = vmul.f32 %v163, %v175
    %v182 = vmul.f32 %v168, %v175
    %v183 = vmul.f32 %v173, %v175
    %v184 = vld [vmem:[#allocation6 + $0x1] sm:$0x1]
    %v185 = vperm.slane %v184, 0
    %v186 = vmul.f32 %v138, %v185
    %v187 = vmul.f32 %v143, %v185
    %v188 = vmul.f32 %v148, %v185
    %v189 = vmul.f32 %v153, %v185
    %v190 = vmul.f32 %v158, %v185
    %v191 = vmul.f32 %v163, %v185
    %v192 = vmul.f32 %v168, %v185
    %v193 = vmul.f32 %v173, %v185
    %vm202 = vcmask 1046528
    %v203 = vrot.slane %v186, 1
    %v204 = vrot.slane %v187, 1
    %v205 = vsel %vm202, %v203, %v204
    %v206 = vrot.slane %v188, 1
    %v207 = vsel %vm202, %v204, %v206
    %v208 = vrot.slane %v189, 1
    %v209 = vsel %vm202, %v206, %v208
    %v210 = vrot.slane %v190, 1
    %v211 = vsel %vm202, %v208, %v210
    %v212 = vrot.slane %v191, 1
    %v213 = vsel %vm202, %v210, %v212
    %v214 = vrot.slane %v192, 1
    %v215 = vsel %vm202, %v212, %v214
    %v216 = vrot.slane %v193, 1
    %v217 = vsel %vm202, %v214, %v216
    %v226 = vadd.f32 %v176, %v205
    %v227 = vadd.f32 %v177, %v207
    %v228 = vadd.f32 %v178, %v209
    %v229 = vadd.f32 %v179, %v211
    %v230 = vadd.f32 %v180, %v213
    %v231 = vadd.f32 %v181, %v215
    %v232 = vadd.f32 %v182, %v217
    %v233 = vadd.f32 %v183, %v216
    %v234 = vld [vmem:[#allocation6 + $0x2] sm:$0x1]
    %v235 = vperm.slane %v234, 0
    %v236 = vmul.f32 %v138, %v235
    %v237 = vmul.f32 %v143, %v235
    %v238 = vmul.f32 %v148, %v235
    %v239 = vmul.f32 %v153, %v235
    %v240 = vmul.f32 %v158, %v235
    %v241 = vmul.f32 %v163, %v235
    %v242 = vmul.f32 %v168, %v235
    %v243 = vmul.f32 %v173, %v235
    %vm252 = vcmask 1045504
    %v253 = vrot.slane %v236, 2
    %v254 = vrot.slane %v237, 2
    %v255 = vsel %vm252, %v253, %v254
    %v256 = vrot.slane %v238, 2
    %v257 = vsel %vm252, %v254, %v256
    %v258 = vrot.slane %v239, 2
    %v259 = vsel %vm252, %v256, %v258
    %v260 = vrot.slane %v240, 2
    %v261 = vsel %vm252, %v258, %v260
    %v262 = vrot.slane %v241, 2
    %v263 = vsel %vm252, %v260, %v262
    %v264 = vrot.slane %v242, 2
    %v265 = vsel %vm252, %v262, %v264
    %v266 = vrot.slane %v243, 2
    %v267 = vsel %vm252, %v264, %v266
    %v276 = vadd.f32 %v226, %v255
    %v277 = vadd.f32 %v227, %v257
    %v278 = vadd.f32 %v228, %v259
    %v279 = vadd.f32 %v229, %v261
    %v280 = vadd.f32 %v230, %v263
    %v281 = vadd.f32 %v231, %v265
    %v282 = vadd.f32 %v232, %v267
    %v283 = vadd.f32 %v233, %v266
    %v284 = vld [vmem:[#allocation9] sm:$0x1]
    %v286 = vperm.slane %v284, 0
    %v288 = vadd.f32 %v276, %v286
    %v289 = vadd.f32 %v277, %v286
    %v290 = vadd.f32 %v278, %v286
    %v291 = vadd.f32 %v279, %v286
    %v292 = vadd.f32 %v280, %v286
    %v293 = vadd.f32 %v281, %v286
    %v294 = vadd.f32 %v282, %v286
    %v295 = vadd.f32 %v283, %v286
    %v296 = vmax.f32 %v288, 0.0
    %v297 = vmax.f32 %v289, 0.0
    %v298 = vmax.f32 %v290, 0.0
    %v299 = vmax.f32 %v291, 0.0
    %v300 = vmax.f32 %v292, 0.0
    %v301 = vmax.f32 %v293, 0.0
    %v302 = vmax.f32 %v294, 0.0
    %v303 = vmax.f32 %v295, 0.0
    %vm304 = vcmask 523264
    %305 = vst.msk [vmem:[#allocation2] sm:$0xff] %vm304, %v296
    %306 = vst.msk [vmem:[#allocation2 + $0x8] sm:$0xff] %vm304, %v297
    %307 = vst.msk [vmem:[#allocation2 + $0x10] sm:$0xff] %vm304, %v298
    %308 = vst.msk [vmem:[#allocation2 + $0x18] sm:$0xff] %vm304, %v299
    %309 = vst.msk [vmem:[#allocation2 + $0x20] sm:$0xff] %vm304, %v300
    %310 = vst.msk [vmem:[#allocation2 + $0x28] sm:$0xff] %vm304, %v301
    %311 = vst.msk [vmem:[#allocation2 + $0x30] sm:$0xff] %vm304, %v302
    %vm312 = vcmask 521216
    %313 = vst.msk [vmem:[#allocation2 + $0x38] sm:$0x3f] %vm312, %v303
    %v314 = vld [vmem:[#allocation2] ss:$2 sm:$0xff]
    %s315 = scalar_lea.vmem [#allocation2], 16
    %v316 = vld [vmem:[%s315] ss:$2 sm:$0xff]
    %s317 = scalar_lea.vmem [#allocation2], 32
    %v318 = vld [vmem:[%s317] ss:$2 sm:$0xff]
    %s319 = scalar_lea.vmem [#allocation2], 48
    %v320 = vld [vmem:[%s319] ss:$2 sm:$0x7f]
    %s321 = scalar_lea.vmem [#allocation2], 1
    %v322 = vld [vmem:[%s321] ss:$2 sm:$0xff]
    %s323 = scalar_lea.vmem [#allocation2], 17
    %v324 = vld [vmem:[%s323] ss:$2 sm:$0xff]
    %s325 = scalar_lea.vmem [#allocation2], 33
    %v326 = vld [vmem:[%s325] ss:$2 sm:$0xff]
    %s327 = scalar_lea.vmem [#allocation2], 49
    %v328 = vld [vmem:[%s327] ss:$2 sm:$0x7f]
    %v329 = vmax.f32 %v314, %v322
    %v330 = vmax.f32 %v316, %v324
    %v331 = vmax.f32 %v318, %v326
    %v332 = vmax.f32 %v320, %v328
    %v337 = vrot.slane %v329, 1
    %v338 = vrot.slane %v330, 1
    %v339 = vsel %vm202, %v337, %v338
    %v340 = vrot.slane %v331, 1
    %v341 = vsel %vm202, %v338, %v340
    %v342 = vrot.slane %v332, 1
    %v343 = vsel %vm202, %v340, %v342
    %344 = vrot.lane.b32.xlu0 %v339, 64
    %v345 = vpop.permute.xlu0 %344
    %346 = vrot.lane.b32.xlu0 %v341, 64
    %v347 = vpop.permute.xlu0 %346
    %348 = vrot.lane.b32.xlu0 %v343, 64
    %v349 = vpop.permute.xlu0 %348
    %350 = vrot.lane.b32.xlu0 %v342, 64
    %v351 = vpop.permute.xlu0 %350
    %v356 = vrot.slane %v329, 2
    %v357 = vrot.slane %v330, 2
    %v358 = vsel %vm252, %v356, %v357
    %v359 = vrot.slane %v331, 2
    %v360 = vsel %vm252, %v357, %v359
    %v361 = vrot.slane %v332, 2
    %v362 = vsel %vm252, %v359, %v361
    %v363 = vsel %vm304, %v329, %v345
    %v364 = vsel %vm304, %v330, %v347
    %v365 = vsel %vm304, %v331, %v349
    %v366 = vsel %vm304, %v332, %v351
    %v367 = vld [vmem:[#allocation11] sm:$0xff]
    %v368 = vld [vmem:[#allocation11 + $0x8] sm:$0xff]
    %v369 = vld [vmem:[#allocation11 + $0x10] sm:$0xff]
    %v370 = vld [vmem:[#allocation11 + $0x18] sm:$0xff]
    %v371 = vld [vmem:[#allocation11 + $0x20] sm:$0xff]
    %v372 = vld [vmem:[#allocation11 + $0x28] sm:$0xff]
    %v373 = vld [vmem:[#allocation11 + $0x30] sm:$0xff]
    %v374 = vld [vmem:[#allocation11 + $0x38] sm:$0xff]
    %v375 = vld [vmem:[#allocation11 + $0x40] sm:$0xff]
    %v376 = vld [vmem:[#allocation11 + $0x48] sm:$0xff]
    %v377 = vld [vmem:[#allocation11 + $0x50] sm:$0xff]
    %v378 = vld [vmem:[#allocation11 + $0x58] sm:$0xff]
    %v379 = vld [vmem:[#allocation11 + $0x60] sm:$0xff]
    %v380 = vld [vmem:[#allocation11 + $0x68] sm:$0xff]
    %v381 = vld [vmem:[#allocation11 + $0x70] sm:$0xff]
    %v382 = vld [vmem:[#allocation11 + $0x78] sm:$0xff]
    %v383 = vld [vmem:[#allocation11 + $0x80] sm:$0xff]
    %v384 = vld [vmem:[#allocation11 + $0x88] sm:$0xff]
    %v385 = vld [vmem:[#allocation11 + $0x90] sm:$0xff]
    %v386 = vld [vmem:[#allocation11 + $0x98] sm:$0xff]
    %v387 = vld [vmem:[#allocation11 + $0xa0] sm:$0xff]
    %v388 = vld [vmem:[#allocation11 + $0xa8] sm:$0xff]
    %v389 = vld [vmem:[#allocation11 + $0xb0] sm:$0xff]
    %v390 = vld [vmem:[#allocation11 + $0xb8] sm:$0xff]
    %v391 = vld [vmem:[#allocation12] sm:$0x1]
    %v393 = vperm.slane %v391, 0
    %v395 = vsel %vm304, %v358, 0
    %v397 = vsel %vm304, %v360, 0
    %v399 = vsel %vm304, %v362, 0
    %v401 = vsel %vm304, %v361, 0
    %403 = vmatpush.msra.mxu0 %v382
    %404 = vmatpush.msra.mxu0 %v381
    %405 = vmatpush.msra.mxu0 %v380
    %406 = vmatpush.msra.mxu0 %v379
    %407 = vmatpush.msra.mxu0 %v378
    %408 = vmatpush.msra.mxu0 %v377
    %409 = vmatpush.msra.mxu0 %v376
    %410 = vmatpush.msra.mxu0 %v375
    %411 = vmatpush.msra.mxu0 %v374
    %412 = vmatpush.msra.mxu0 %v373
    %413 = vmatpush.msra.mxu0 %v372
    %414 = vmatpush.msra.mxu0 %v371
    %415 = vmatpush.msra.mxu0 %v370
    %416 = vmatpush.msra.mxu0 %v369
    %417 = vmatpush.msra.mxu0 %v368
    %418 = vmatpush.msra.mxu0 %v367
    %419 = vmatmul.f32.gmra.mxu0 %v363
    %v420 = vpop.f32.mrf.mxu0
    %v421 = vadd.f32 %v393, %v420
    %422 = vmatmul.f32.gmra.mxu0 %v364
    %v423 = vpop.f32.mrf.mxu0
    %v424 = vadd.f32 %v393, %v423
    %425 = vmatmul.f32.gmra.mxu0 %v365
    %v426 = vpop.f32.mrf.mxu0
    %v427 = vadd.f32 %v393, %v426
    %428 = vmatmul.f32.gmra.mxu0 %v366
    %v429 = vpop.f32.mrf.mxu0
    %v430 = vadd.f32 %v393, %v429
    %431 = vdwg.mxu0
    %432 = vmatpush.msra.mxu0 0.0
    %433 = vmatpush.msra.mxu0 0.0
    %434 = vmatpush.msra.mxu0 0.0
    %435 = vmatpush.msra.mxu0 0.0
    %436 = vmatpush.msra.mxu0 0.0
    %437 = vmatpush.msra.mxu0 0.0
    %438 = vmatpush.msra.mxu0 0.0
    %439 = vmatpush.msra.mxu0 0.0
    %440 = vmatpush.msra.mxu0 %v390
    %441 = vmatpush.msra.mxu0 %v389
    %442 = vmatpush.msra.mxu0 %v388
    %443 = vmatpush.msra.mxu0 %v387
    %444 = vmatpush.msra.mxu0 %v386
    %445 = vmatpush.msra.mxu0 %v385
    %446 = vmatpush.msra.mxu0 %v384
    %447 = vmatpush.msra.mxu0 %v383
    %448 = vmatmul.f32.gmra.mxu0 %v395
    %v449 = vpop.f32.mrf.mxu0
    %v450 = vadd.f32 %v421, %v449
    %451 = vmatmul.f32.gmra.mxu0 %v397
    %v452 = vpop.f32.mrf.mxu0
    %v453 = vadd.f32 %v424, %v452
    %454 = vmatmul.f32.gmra.mxu0 %v399
    %v455 = vpop.f32.mrf.mxu0
    %v456 = vadd.f32 %v427, %v455
    %457 = vmatmul.f32.gmra.mxu0 %v401
    %v458 = vpop.f32.mrf.mxu0
    %v459 = vadd.f32 %v430, %v458
    %460 = vdwg.mxu0
    %v461 = vmax.f32 %v450, 0.0
    %v462 = vmax.f32 %v453, 0.0
    %v463 = vmax.f32 %v456, 0.0
    %v464 = vmax.f32 %v459, 0.0
    %465 = vst [vmem:[#allocation3] sm:$0xff] %v461
    %466 = vst [vmem:[#allocation3 + $0x8] sm:$0xff] %v462
    %467 = vst [vmem:[#allocation3 + $0x10] sm:$0xff] %v463
    %468 = vst [vmem:[#allocation3 + $0x18] sm:$0x1f] %v464
    %v469 = vld [vmem:[#allocation3] ss:$2 sm:$0xff]
    %s470 = scalar_lea.vmem [#allocation3], 16
    %v471 = vld [vmem:[%s470] ss:$2 sm:$0x3f]
    %s472 = scalar_lea.vmem [#allocation3], 1
    %v473 = vld [vmem:[%s472] ss:$2 sm:$0xff]
    %s474 = scalar_lea.vmem [#allocation3], 17
    %v475 = vld [vmem:[%s474] ss:$2 sm:$0x3f]
    %v476 = vmax.f32 %v469, %v473
    %v477 = vmax.f32 %v471, %v475
    %478 = vst [vmem:[#allocation4] sm:$0x1] %v476
    %v480 = vrot.slane %v476, 5
    %v481 = vrot.slane %v480, 4
    %483 = vst [vmem:[#allocation4 + $0x4] sm:$0x1] %v481
    %v484 = vrot.slane %v476, 6
    %v485 = vrot.slane %v484, 4
    %487 = vst [vmem:[#allocation4 + $0x8] sm:$0x1] %v485
    %v488 = vrot.slane %v476, 7
    %v489 = vrot.slane %v488, 4
    %491 = vst [vmem:[#allocation4 + $0xc] sm:$0x1] %v489
    %492 = vst.sshfl [vmem:[#allocation1] sm:$0xff pattern:$0x75316420] %v476
    %s493 = scalar_lea.vmem [#allocation1], 1
    %v494 = vld [vmem:[%s493] ss:$2 sm:$0xff]
    %496 = vst [vmem:[#allocation4 + $0x10] sm:$0x1] %v494
    %497 = vst.sshfl [vmem:[#allocation1] sm:$0xff pattern:$0x75316420] %v476
    %s498 = scalar_lea.vmem [#allocation1], 1
    %v499 = vld [vmem:[%s498] ss:$2 sm:$0xff]
    %v500 = vrot.slane %v499, 5
    %v501 = vrot.slane %v500, 4
    %503 = vst [vmem:[#allocation4 + $0x14] sm:$0x1] %v501
    %504 = vst.sshfl [vmem:[#allocation1] sm:$0xff pattern:$0x75316420] %v476
    %s505 = scalar_lea.vmem [#allocation1], 1
    %v506 = vld [vmem:[%s505] ss:$2 sm:$0xff]
    %v507 = vrot.slane %v506, 6
    %v508 = vrot.slane %v507, 4
    %510 = vst [vmem:[#allocation4 + $0x18] sm:$0x1] %v508
    %511 = vst.sshfl [vmem:[#allocation1] sm:$0xff pattern:$0x75316420] %v476
    %s512 = scalar_lea.vmem [#allocation1], 1
    %v513 = vld [vmem:[%s512] ss:$2 sm:$0xff]
    %v514 = vrot.slane %v513, 7
    %v515 = vrot.slane %v514, 4
    %517 = vst [vmem:[#allocation4 + $0x1c] sm:$0x1] %v515
    %518 = vst [vmem:[#allocation4 + $0x20] sm:$0x1] %v477
    %v520 = vrot.slane %v477, 5
    %v521 = vrot.slane %v520, 4
    %523 = vst [vmem:[#allocation4 + $0x24] sm:$0x1] %v521
    %v524 = vrot.slane %v477, 6
    %v525 = vrot.slane %v524, 4
    %527 = vst [vmem:[#allocation4 + $0x28] sm:$0x1] %v525
    %v528 = vrot.slane %v477, 7
    %v529 = vrot.slane %v528, 4
    %531 = vst [vmem:[#allocation4 + $0x2c] sm:$0x1] %v529
    %532 = vst.sshfl [vmem:[#allocation1] sm:$0xff pattern:$0x75316420] %v477
    %s533 = scalar_lea.vmem [#allocation1], 1
    %v534 = vld [vmem:[%s533] ss:$2 sm:$0xff]
    %536 = vst [vmem:[#allocation4 + $0x30] sm:$0x1] %v534
    %537 = vst.sshfl [vmem:[#allocation1] sm:$0xff pattern:$0x75316420] %v477
    %s538 = scalar_lea.vmem [#allocation1], 1
    %v539 = vld [vmem:[%s538] ss:$2 sm:$0xff]
    %v540 = vrot.slane %v539, 5
    %v541 = vrot.slane %v540, 4
    %543 = vst [vmem:[#allocation4 + $0x34] sm:$0x1] %v541
    %v544 = vld [vmem:[%s1] sm:$0xff]
    %v545 = vld [vmem:[%s1 + $0x8] sm:$0xff]
    %v546 = vld [vmem:[%s1 + $0x10] sm:$0xff]
    %v547 = vld [vmem:[%s1 + $0x18] sm:$0xff]
    %v548 = vld [vmem:[%s1 + $0x20] sm:$0xff]
    %v549 = vld [vmem:[%s1 + $0x28] sm:$0xff]
    %v550 = vld [vmem:[%s1 + $0x30] sm:$0xff]
    %v551 = vld [vmem:[%s1 + $0x38] sm:$0xff]
    %v552 = vld [vmem:[#allocation6] sm:$0x1]
    %554 = vset.pattern.permute.xlu0 0
    %555 = vperm.xlu0 %554, %v544
    %v556 = vpop.permute.xlu0 %555
    %559 = vset.pattern.permute.xlu0 0
    %560 = vperm.xlu0 %559, %v545
    %v561 = vpop.permute.xlu0 %560
    %564 = vset.pattern.permute.xlu0 0
    %565 = vperm.xlu0 %564, %v546
    %v566 = vpop.permute.xlu0 %565
    %569 = vset.pattern.permute.xlu0 0
    %570 = vperm.xlu0 %569, %v547
    %v571 = vpop.permute.xlu0 %570
    %574 = vset.pattern.permute.xlu0 0
    %575 = vperm.xlu0 %574, %v548
    %v576 = vpop.permute.xlu0 %575
    %579 = vset.pattern.permute.xlu0 0
    %580 = vperm.xlu0 %579, %v549
    %v581 = vpop.permute.xlu0 %580
    %584 = vset.pattern.permute.xlu0 0
    %585 = vperm.xlu0 %584, %v550
    %v586 = vpop.permute.xlu0 %585
    %589 = vset.pattern.permute.xlu0 0
    %590 = vperm.xlu0 %589, %v551
    %v591 = vpop.permute.xlu0 %590
    %v593 = vperm.slane %v552, 0
    %v594 = vmul.f32 %v556, %v593
    %v595 = vmul.f32 %v561, %v593
    %v596 = vmul.f32 %v566, %v593
    %v597 = vmul.f32 %v571, %v593
    %v598 = vmul.f32 %v576, %v593
    %v599 = vmul.f32 %v581, %v593
    %v600 = vmul.f32 %v586, %v593
    %v601 = vmul.f32 %v591, %v593
    %v602 = vld [vmem:[#allocation6 + $0x1] sm:$0x1]
    %v603 = vperm.slane %v602, 0
    %v604 = vmul.f32 %v556, %v603
    %v605 = vmul.f32 %v561, %v603
    %v606 = vmul.f32 %v566, %v603
    %v607 = vmul.f32 %v571, %v603
    %v608 = vmul.f32 %v576, %v603
    %v609 = vmul.f32 %v581, %v603
    %v610 = vmul.f32 %v586, %v603
    %v611 = vmul.f32 %v591, %v603
    %v620 = vrot.slane %v604, 1
    %v621 = vrot.slane %v605, 1
    %v622 = vsel %vm202, %v620, %v621
    %v623 = vrot.slane %v606, 1
    %v624 = vsel %vm202, %v621, %v623
    %v625 = vrot.slane %v607, 1
    %v626 = vsel %vm202, %v623, %v625
    %v627 = vrot.slane %v608, 1
    %v628 = vsel %vm202, %v625, %v627
    %v629 = vrot.slane %v609, 1
    %v630 = vsel %vm202, %v627, %v629
    %v631 = vrot.slane %v610, 1
    %v632 = vsel %vm202, %v629, %v631
    %v633 = vrot.slane %v611, 1
    %v634 = vsel %vm202, %v631, %v633
    %v643 = vadd.f32 %v594, %v622
    %v644 = vadd.f32 %v595, %v624
    %v645 = vadd.f32 %v596, %v626
    %v646 = vadd.f32 %v597, %v628
    %v647 = vadd.f32 %v598, %v630
    %v648 = vadd.f32 %v599, %v632
    %v649 = vadd.f32 %v600, %v634
    %v650 = vadd.f32 %v601, %v633
    %v651 = vld [vmem:[#allocation6 + $0x2] sm:$0x1]
    %v652 = vperm.slane %v651, 0
    %v653 = vmul.f32 %v556, %v652
    %v654 = vmul.f32 %v561, %v652
    %v655 = vmul.f32 %v566, %v652
    %v656 = vmul.f32 %v571, %v652
    %v657 = vmul.f32 %v576, %v652
    %v658 = vmul.f32 %v581, %v652
    %v659 = vmul.f32 %v586, %v652
    %v660 = vmul.f32 %v591, %v652
    %v669 = vrot.slane %v653, 2
    %v670 = vrot.slane %v654, 2
    %v671 = vsel %vm252, %v669, %v670
    %v672 = vrot.slane %v655, 2
    %v673 = vsel %vm252, %v670, %v672
    %v674 = vrot.slane %v656, 2
    %v675 = vsel %vm252, %v672, %v674
    %v676 = vrot.slane %v657, 2
    %v677 = vsel %vm252, %v674, %v676
    %v678 = vrot.slane %v658, 2
    %v679 = vsel %vm252, %v676, %v678
    %v680 = vrot.slane %v659, 2
    %v681 = vsel %vm252, %v678, %v680
    %v682 = vrot.slane %v660, 2
    %v683 = vsel %vm252, %v680, %v682
    %v692 = vadd.f32 %v643, %v671
    %v693 = vadd.f32 %v644, %v673
    %v694 = vadd.f32 %v645, %v675
    %v695 = vadd.f32 %v646, %v677
    %v696 = vadd.f32 %v647, %v679
    %v697 = vadd.f32 %v648, %v681
    %v698 = vadd.f32 %v649, %v683
    %v699 = vadd.f32 %v650, %v682
    %v700 = vld [vmem:[#allocation9] sm:$0x1]
    %v702 = vperm.slane %v700, 0
    %v704 = vadd.f32 %v692, %v702
    %v705 = vadd.f32 %v693, %v702
    %v706 = vadd.f32 %v694, %v702
    %v707 = vadd.f32 %v695, %v702
    %v708 = vadd.f32 %v696, %v702
    %v709 = vadd.f32 %v697, %v702
    %v710 = vadd.f32 %v698, %v702
    %v711 = vadd.f32 %v699, %v702
    %v712 = vmax.f32 %v704, 0.0
    %v713 = vmax.f32 %v705, 0.0
    %v714 = vmax.f32 %v706, 0.0
    %v715 = vmax.f32 %v707, 0.0
    %v716 = vmax.f32 %v708, 0.0
    %v717 = vmax.f32 %v709, 0.0
    %v718 = vmax.f32 %v710, 0.0
    %v719 = vmax.f32 %v711, 0.0
    %720 = vst.msk [vmem:[#allocation2] sm:$0xff] %vm304, %v712
    %721 = vst.msk [vmem:[#allocation2 + $0x8] sm:$0xff] %vm304, %v713
    %722 = vst.msk [vmem:[#allocation2 + $0x10] sm:$0xff] %vm304, %v714
    %723 = vst.msk [vmem:[#allocation2 + $0x18] sm:$0xff] %vm304, %v715
    %724 = vst.msk [vmem:[#allocation2 + $0x20] sm:$0xff] %vm304, %v716
    %725 = vst.msk [vmem:[#allocation2 + $0x28] sm:$0xff] %vm304, %v717
    %726 = vst.msk [vmem:[#allocation2 + $0x30] sm:$0xff] %vm304, %v718
    %727 = vst.msk [vmem:[#allocation2 + $0x38] sm:$0x3f] %vm312, %v719
    %v728 = vld [vmem:[#allocation2] ss:$2 sm:$0xff]
    %v729 = vld [vmem:[%s315] ss:$2 sm:$0xff]
    %v730 = vld [vmem:[%s317] ss:$2 sm:$0xff]
    %v731 = vld [vmem:[%s319] ss:$2 sm:$0x7f]
    %v732 = vld [vmem:[%s321] ss:$2 sm:$0xff]
    %v733 = vld [vmem:[%s323] ss:$2 sm:$0xff]
    %v734 = vld [vmem:[%s325] ss:$2 sm:$0xff]
    %v735 = vld [vmem:[%s327] ss:$2 sm:$0x7f]
    %v736 = vmax.f32 %v728, %v732
    %v737 = vmax.f32 %v729, %v733
    %v738 = vmax.f32 %v730, %v734
    %v739 = vmax.f32 %v731, %v735
    %v744 = vrot.slane %v736, 1
    %v745 = vrot.slane %v737, 1
    %v746 = vsel %vm202, %v744, %v745
    %v747 = vrot.slane %v738, 1
    %v748 = vsel %vm202, %v745, %v747
    %v749 = vrot.slane %v739, 1
    %v750 = vsel %vm202, %v747, %v749
    %751 = vrot.lane.b32.xlu0 %v746, 64
    %v752 = vpop.permute.xlu0 %751
    %753 = vrot.lane.b32.xlu0 %v748, 64
    %v754 = vpop.permute.xlu0 %753
    %755 = vrot.lane.b32.xlu0 %v750, 64
    %v756 = vpop.permute.xlu0 %755
    %757 = vrot.lane.b32.xlu0 %v749, 64
    %v758 = vpop.permute.xlu0 %757
    %v763 = vrot.slane %v736, 2
    %v764 = vrot.slane %v737, 2
    %v765 = vsel %vm252, %v763, %v764
    %v766 = vrot.slane %v738, 2
    %v767 = vsel %vm252, %v764, %v766
    %v768 = vrot.slane %v739, 2
    %v769 = vsel %vm252, %v766, %v768
    %v770 = vsel %vm304, %v736, %v752
    %v771 = vsel %vm304, %v737, %v754
    %v772 = vsel %vm304, %v738, %v756
    %v773 = vsel %vm304, %v739, %v758
    %v774 = vld [vmem:[#allocation11] sm:$0xff]
    %v775 = vld [vmem:[#allocation11 + $0x8] sm:$0xff]
    %v776 = vld [vmem:[#allocation11 + $0x10] sm:$0xff]
    %v777 = vld [vmem:[#allocation11 + $0x18] sm:$0xff]
    %v778 = vld [vmem:[#allocation11 + $0x20] sm:$0xff]
    %v779 = vld [vmem:[#allocation11 + $0x28] sm:$0xff]
    %v780 = vld [vmem:[#allocation11 + $0x30] sm:$0xff]
    %v781 = vld [vmem:[#allocation11 + $0x38] sm:$0xff]
    %v782 = vld [vmem:[#allocation11 + $0x40] sm:$0xff]
    %v783 = vld [vmem:[#allocation11 + $0x48] sm:$0xff]
    %v784 = vld [vmem:[#allocation11 + $0x50] sm:$0xff]
    %v785 = vld [vmem:[#allocation11 + $0x58] sm:$0xff]
    %v786 = vld [vmem:[#allocation11 + $0x60] sm:$0xff]
    %v787 = vld [vmem:[#allocation11 + $0x68] sm:$0xff]
    %v788 = vld [vmem:[#allocation11 + $0x70] sm:$0xff]
    %v789 = vld [vmem:[#allocation11 + $0x78] sm:$0xff]
    %v790 = vld [vmem:[#allocation11 + $0x80] sm:$0xff]
    %v791 = vld [vmem:[#allocation11 + $0x88] sm:$0xff]
    %v792 = vld [vmem:[#allocation11 + $0x90] sm:$0xff]
    %v793 = vld [vmem:[#allocation11 + $0x98] sm:$0xff]
    %v794 = vld [vmem:[#allocation11 + $0xa0] sm:$0xff]
    %v795 = vld [vmem:[#allocation11 + $0xa8] sm:$0xff]
    %v796 = vld [vmem:[#allocation11 + $0xb0] sm:$0xff]
    %v797 = vld [vmem:[#allocation11 + $0xb8] sm:$0xff]
    %v798 = vld [vmem:[#allocation12] sm:$0x1]
    %v800 = vperm.slane %v798, 0
    %v802 = vsel %vm304, %v765, 0
    %v804 = vsel %vm304, %v767, 0
    %v806 = vsel %vm304, %v769, 0
    %v808 = vsel %vm304, %v768, 0
    %810 = vmatpush.msra.mxu0 %v789
    %811 = vmatpush.msra.mxu0 %v788
    %812 = vmatpush.msra.mxu0 %v787
    %813 = vmatpush.msra.mxu0 %v786
    %814 = vmatpush.msra.mxu0 %v785
    %815 = vmatpush.msra.mxu0 %v784
    %816 = vmatpush.msra.mxu0 %v783
    %817 = vmatpush.msra.mxu0 %v782
    %818 = vmatpush.msra.mxu0 %v781
    %819 = vmatpush.msra.mxu0 %v780
    %820 = vmatpush.msra.mxu0 %v779
    %821 = vmatpush.msra.mxu0 %v778
    %822 = vmatpush.msra.mxu0 %v777
    %823 = vmatpush.msra.mxu0 %v776
    %824 = vmatpush.msra.mxu0 %v775
    %825 = vmatpush.msra.mxu0 %v774
    %826 = vmatmul.f32.gmra.mxu0 %v770
    %v827 = vpop.f32.mrf.mxu0
    %v828 = vadd.f32 %v800, %v827
    %829 = vmatmul.f32.gmra.mxu0 %v771
    %v830 = vpop.f32.mrf.mxu0
    %v831 = vadd.f32 %v800, %v830
    %832 = vmatmul.f32.gmra.mxu0 %v772
    %v833 = vpop.f32.mrf.mxu0
    %v834 = vadd.f32 %v800, %v833
    %835 = vmatmul.f32.gmra.mxu0 %v773
    %v836 = vpop.f32.mrf.mxu0
    %v837 = vadd.f32 %v800, %v836
    %838 = vdwg.mxu0
    %839 = vmatpush.msra.mxu0 0.0
    %840 = vmatpush.msra.mxu0 0.0
    %841 = vmatpush.msra.mxu0 0.0
    %842 = vmatpush.msra.mxu0 0.0
    %843 = vmatpush.msra.mxu0 0.0
    %844 = vmatpush.msra.mxu0 0.0
    %845 = vmatpush.msra.mxu0 0.0
    %846 = vmatpush.msra.mxu0 0.0
    %847 = vmatpush.msra.mxu0 %v797
    %848 = vmatpush.msra.mxu0 %v796
    %849 = vmatpush.msra.mxu0 %v795
    %850 = vmatpush.msra.mxu0 %v794
    %851 = vmatpush.msra.mxu0 %v793
    %852 = vmatpush.msra.mxu0 %v792
    %853 = vmatpush.msra.mxu0 %v791
    %854 = vmatpush.msra.mxu0 %v790
    %855 = vmatmul.f32.gmra.mxu0 %v802
    %v856 = vpop.f32.mrf.mxu0
    %v857 = vadd.f32 %v828, %v856
    %858 = vmatmul.f32.gmra.mxu0 %v804
    %v859 = vpop.f32.mrf.mxu0
    %v860 = vadd.f32 %v831, %v859
    %861 = vmatmul.f32.gmra.mxu0 %v806
    %v862 = vpop.f32.mrf.mxu0
    %v863 = vadd.f32 %v834, %v862
    %864 = vmatmul.f32.gmra.mxu0 %v808
    %v865 = vpop.f32.mrf.mxu0
    %v866 = vadd.f32 %v837, %v865
    %867 = vdwg.mxu0
    %v868 = vmax.f32 %v857, 0.0
    %v869 = vmax.f32 %v860, 0.0
    %v870 = vmax.f32 %v863, 0.0
    %v871 = vmax.f32 %v866, 0.0
    %872 = vst [vmem:[#allocation3] sm:$0xff] %v868
    %873 = vst [vmem:[#allocation3 + $0x8] sm:$0xff] %v869
    %874 = vst [vmem:[#allocation3 + $0x10] sm:$0xff] %v870
    %875 = vst [vmem:[#allocation3 + $0x18] sm:$0x1f] %v871
    %v876 = vld [vmem:[#allocation3] ss:$2 sm:$0xff]
    %v877 = vld [vmem:[%s470] ss:$2 sm:$0x3f]
    %v878 = vld [vmem:[%s472] ss:$2 sm:$0xff]
    %v879 = vld [vmem:[%s474] ss:$2 sm:$0x3f]
    %v880 = vmax.f32 %v876, %v878
    %v881 = vmax.f32 %v877, %v879
    %882 = vst [vmem:[#allocation4 + $0x2] sm:$0x1] %v880
    %v884 = vrot.slane %v880, 5
    %v885 = vrot.slane %v884, 4
    %887 = vst [vmem:[#allocation4 + $0x6] sm:$0x1] %v885
    %v888 = vrot.slane %v880, 6
    %v889 = vrot.slane %v888, 4
    %891 = vst [vmem:[#allocation4 + $0xa] sm:$0x1] %v889
    %v892 = vrot.slane %v880, 7
    %v893 = vrot.slane %v892, 4
    %895 = vst [vmem:[#allocation4 + $0xe] sm:$0x1] %v893
    %896 = vst.sshfl [vmem:[#allocation1] sm:$0xff pattern:$0x75316420] %v880
    %s897 = scalar_lea.vmem [#allocation1], 1
    %v898 = vld [vmem:[%s897] ss:$2 sm:$0xff]
    %900 = vst [vmem:[#allocation4 + $0x12] sm:$0x1] %v898
    %901 = vst.sshfl [vmem:[#allocation1] sm:$0xff pattern:$0x75316420] %v880
    %s902 = scalar_lea.vmem [#allocation1], 1
    %v903 = vld [vmem:[%s902] ss:$2 sm:$0xff]
    %v904 = vrot.slane %v903, 5
    %v905 = vrot.slane %v904, 4
    %907 = vst [vmem:[#allocation4 + $0x16] sm:$0x1] %v905
    %908 = vst.sshfl [vmem:[#allocation1] sm:$0xff pattern:$0x75316420] %v880
    %s909 = scalar_lea.vmem [#allocation1], 1
    %v910 = vld [vmem:[%s909] ss:$2 sm:$0xff]
    %v911 = vrot.slane %v910, 6
    %v912 = vrot.slane %v911, 4
    %914 = vst [vmem:[#allocation4 + $0x1a] sm:$0x1] %v912
    %915 = vst.sshfl [vmem:[#allocation1] sm:$0xff pattern:$0x75316420] %v880
    %s916 = scalar_lea.vmem [#allocation1], 1
    %v917 = vld [vmem:[%s916] ss:$2 sm:$0xff]
    %v918 = vrot.slane %v917, 7
    %v919 = vrot.slane %v918, 4
    %921 = vst [vmem:[#allocation4 + $0x1e] sm:$0x1] %v919
    %922 = vst [vmem:[#allocation4 + $0x22] sm:$0x1] %v881
    %v924 = vrot.slane %v881, 5
    %v925 = vrot.slane %v924, 4
    %927 = vst [vmem:[#allocation4 + $0x26] sm:$0x1] %v925
    %v928 = vrot.slane %v881, 6
    %v929 = vrot.slane %v928, 4
    %931 = vst [vmem:[#allocation4 + $0x2a] sm:$0x1] %v929
    %v932 = vrot.slane %v881, 7
    %v933 = vrot.slane %v932, 4
    %935 = vst [vmem:[#allocation4 + $0x2e] sm:$0x1] %v933
    %936 = vst.sshfl [vmem:[#allocation1] sm:$0xff pattern:$0x75316420] %v881
    %s937 = scalar_lea.vmem [#allocation1], 1
    %v938 = vld [vmem:[%s937] ss:$2 sm:$0xff]
    %940 = vst [vmem:[#allocation4 + $0x32] sm:$0x1] %v938
    %941 = vst.sshfl [vmem:[#allocation1] sm:$0xff pattern:$0x75316420] %v881
    %s942 = scalar_lea.vmem [#allocation1], 1
    %v943 = vld [vmem:[%s942] ss:$2 sm:$0xff]
    %v944 = vrot.slane %v943, 5
    %v945 = vrot.slane %v944, 4
    %947 = vst [vmem:[#allocation4 + $0x36] sm:$0x1] %v945
    %v948 = vld [vmem:[%s0] sm:$0xff]
    %v949 = vld [vmem:[%s0 + $0x8] sm:$0xff]
    %v950 = vld [vmem:[%s0 + $0x10] sm:$0xff]
    %v951 = vld [vmem:[%s0 + $0x18] sm:$0xff]
    %v952 = vld [vmem:[%s0 + $0x20] sm:$0xff]
    %v953 = vld [vmem:[%s0 + $0x28] sm:$0xff]
    %v954 = vld [vmem:[%s0 + $0x30] sm:$0xff]
    %v955 = vld [vmem:[%s0 + $0x38] sm:$0xff]
    %v956 = vld [vmem:[#allocation6] sm:$0x1]
    %958 = vset.pattern.permute.xlu0 1
    %959 = vperm.xlu0 %958, %v948
    %v960 = vpop.permute.xlu0 %959
    %963 = vset.pattern.permute.xlu0 1
    %964 = vperm.xlu0 %963, %v949
    %v965 = vpop.permute.xlu0 %964
    %968 = vset.pattern.permute.xlu0 1
    %969 = vperm.xlu0 %968, %v950
    %v970 = vpop.permute.xlu0 %969
    %973 = vset.pattern.permute.xlu0 1
    %974 = vperm.xlu0 %973, %v951
    %v975 = vpop.permute.xlu0 %974
    %978 = vset.pattern.permute.xlu0 1
    %979 = vperm.xlu0 %978, %v952
    %v980 = vpop.permute.xlu0 %979
    %983 = vset.pattern.permute.xlu0 1
    %984 = vperm.xlu0 %983, %v953
    %v985 = vpop.permute.xlu0 %984
    %988 = vset.pattern.permute.xlu0 1
    %989 = vperm.xlu0 %988, %v954
    %v990 = vpop.permute.xlu0 %989
    %993 = vset.pattern.permute.xlu0 1
    %994 = vperm.xlu0 %993, %v955
    %v995 = vpop.permute.xlu0 %994
    %v997 = vperm.slane %v956, 0
    %v998 = vmul.f32 %v960, %v997
    %v999 = vmul.f32 %v965, %v997
    %v1000 = vmul.f32 %v970, %v997
    %v1001 = vmul.f32 %v975, %v997
    %v1002 = vmul.f32 %v980, %v997
    %v1003 = vmul.f32 %v985, %v997
    %v1004 = vmul.f32 %v990, %v997
    %v1005 = vmul.f32 %v995, %v997
    %v1006 = vld [vmem:[#allocation6 + $0x1] sm:$0x1]
    %v1007 = vperm.slane %v1006, 0
    %v1008 = vmul.f32 %v960, %v1007
    %v1009 = vmul.f32 %v965, %v1007
    %v1010 = vmul.f32 %v970, %v1007
    %v1011 = vmul.f32 %v975, %v1007
    %v1012 = vmul.f32 %v980, %v1007
    %v1013 = vmul.f32 %v985, %v1007
    %v1014 = vmul.f32 %v990, %v1007
    %v1015 = vmul.f32 %v995, %v1007
    %v1024 = vrot.slane %v1008, 1
    %v1025 = vrot.slane %v1009, 1
    %v1026 = vsel %vm202, %v1024, %v1025
    %v1027 = vrot.slane %v1010, 1
    %v1028 = vsel %vm202, %v1025, %v1027
    %v1029 = vrot.slane %v1011, 1
    %v1030 = vsel %vm202, %v1027, %v1029
    %v1031 = vrot.slane %v1012, 1
    %v1032 = vsel %vm202, %v1029, %v1031
    %v1033 = vrot.slane %v1013, 1
    %v1034 = vsel %vm202, %v1031, %v1033
    %v1035 = vrot.slane %v1014, 1
    %v1036 = vsel %vm202, %v1033, %v1035
    %v1037 = vrot.slane %v1015, 1
    %v1038 = vsel %vm202, %v1035, %v1037
    %v1047 = vadd.f32 %v998, %v1026
    %v1048 = vadd.f32 %v999, %v1028
    %v1049 = vadd.f32 %v1000, %v1030
    %v1050 = vadd.f32 %v1001, %v1032
    %v1051 = vadd.f32 %v1002, %v1034
    %v1052 = vadd.f32 %v1003, %v1036
    %v1053 = vadd.f32 %v1004, %v1038
    %v1054 = vadd.f32 %v1005, %v1037
    %v1055 = vld [vmem:[#allocation6 + $0x2] sm:$0x1]
    %v1056 = vperm.slane %v1055, 0
    %v1057 = vmul.f32 %v960, %v1056
    %v1058 = vmul.f32 %v965, %v1056
    %v1059 = vmul.f32 %v970, %v1056
    %v1060 = vmul.f32 %v975, %v1056
    %v1061 = vmul.f32 %v980, %v1056
    %v1062 = vmul.f32 %v985, %v1056
    %v1063 = vmul.f32 %v990, %v1056
    %v1064 = vmul.f32 %v995, %v1056
    %v1073 = vrot.slane %v1057, 2
    %v1074 = vrot.slane %v1058, 2
    %v1075 = vsel %vm252, %v1073, %v1074
    %v1076 = vrot.slane %v1059, 2
    %v1077 = vsel %vm252, %v1074, %v1076
    %v1078 = vrot.slane %v1060, 2
    %v1079 = vsel %vm252, %v1076, %v1078
    %v1080 = vrot.slane %v1061, 2
    %v1081 = vsel %vm252, %v1078, %v1080
    %v1082 = vrot.slane %v1062, 2
    %v1083 = vsel %vm252, %v1080, %v1082
    %v1084 = vrot.slane %v1063, 2
    %v1085 = vsel %vm252, %v1082, %v1084
    %v1086 = vrot.slane %v1064, 2
    %v1087 = vsel %vm252, %v1084, %v1086
    %v1096 = vadd.f32 %v1047, %v1075
    %v1097 = vadd.f32 %v1048, %v1077
    %v1098 = vadd.f32 %v1049, %v1079
    %v1099 = vadd.f32 %v1050, %v1081
    %v1100 = vadd.f32 %v1051, %v1083
    %v1101 = vadd.f32 %v1052, %v1085
    %v1102 = vadd.f32 %v1053, %v1087
    %v1103 = vadd.f32 %v1054, %v1086
    %v1104 = vld [vmem:[#allocation9] sm:$0x1]
    %v1106 = vperm.slane %v1104, 0
    %v1108 = vadd.f32 %v1096, %v1106
    %v1109 = vadd.f32 %v1097, %v1106
    %v1110 = vadd.f32 %v1098, %v1106
    %v1111 = vadd.f32 %v1099, %v1106
    %v1112 = vadd.f32 %v1100, %v1106
    %v1113 = vadd.f32 %v1101, %v1106
    %v1114 = vadd.f32 %v1102, %v1106
    %v1115 = vadd.f32 %v1103, %v1106
    %v1116 = vmax.f32 %v1108, 0.0
    %v1117 = vmax.f32 %v1109, 0.0
    %v1118 = vmax.f32 %v1110, 0.0
    %v1119 = vmax.f32 %v1111, 0.0
    %v1120 = vmax.f32 %v1112, 0.0
    %v1121 = vmax.f32 %v1113, 0.0
    %v1122 = vmax.f32 %v1114, 0.0
    %v1123 = vmax.f32 %v1115, 0.0
    %1124 = vst.msk [vmem:[#allocation2] sm:$0xff] %vm304, %v1116
    %1125 = vst.msk [vmem:[#allocation2 + $0x8] sm:$0xff] %vm304, %v1117
    %1126 = vst.msk [vmem:[#allocation2 + $0x10] sm:$0xff] %vm304, %v1118
    %1127 = vst.msk [vmem:[#allocation2 + $0x18] sm:$0xff] %vm304, %v1119
    %1128 = vst.msk [vmem:[#allocation2 + $0x20] sm:$0xff] %vm304, %v1120
    %1129 = vst.msk [vmem:[#allocation2 + $0x28] sm:$0xff] %vm304, %v1121
    %1130 = vst.msk [vmem:[#allocation2 + $0x30] sm:$0xff] %vm304, %v1122
    %1131 = vst.msk [vmem:[#allocation2 + $0x38] sm:$0x3f] %vm312, %v1123
    %v1132 = vld [vmem:[#allocation2] ss:$2 sm:$0xff]
    %v1133 = vld [vmem:[%s315] ss:$2 sm:$0xff]
    %v1134 = vld [vmem:[%s317] ss:$2 sm:$0xff]
    %v1135 = vld [vmem:[%s319] ss:$2 sm:$0x7f]
    %v1136 = vld [vmem:[%s321] ss:$2 sm:$0xff]
    %v1137 = vld [vmem:[%s323] ss:$2 sm:$0xff]
    %v1138 = vld [vmem:[%s325] ss:$2 sm:$0xff]
    %v1139 = vld [vmem:[%s327] ss:$2 sm:$0x7f]
    %v1140 = vmax.f32 %v1132, %v1136
    %v1141 = vmax.f32 %v1133, %v1137
    %v1142 = vmax.f32 %v1134, %v1138
    %v1143 = vmax.f32 %v1135, %v1139
    %v1148 = vrot.slane %v1140, 1
    %v1149 = vrot.slane %v1141, 1
    %v1150 = vsel %vm202, %v1148, %v1149
    %v1151 = vrot.slane %v1142, 1
    %v1152 = vsel %vm202, %v1149, %v1151
    %v1153 = vrot.slane %v1143, 1
    %v1154 = vsel %vm202, %v1151, %v1153
    %1155 = vrot.lane.b32.xlu0 %v1150, 64
    %v1156 = vpop.permute.xlu0 %1155
    %1157 = vrot.lane.b32.xlu0 %v1152, 64
    %v1158 = vpop.permute.xlu0 %1157
    %1159 = vrot.lane.b32.xlu0 %v1154, 64
    %v1160 = vpop.permute.xlu0 %1159
    %1161 = vrot.lane.b32.xlu0 %v1153, 64
    %v1162 = vpop.permute.xlu0 %1161
    %v1167 = vrot.slane %v1140, 2
    %v1168 = vrot.slane %v1141, 2
    %v1169 = vsel %vm252, %v1167, %v1168
    %v1170 = vrot.slane %v1142, 2
    %v1171 = vsel %vm252, %v1168, %v1170
    %v1172 = vrot.slane %v1143, 2
    %v1173 = vsel %vm252, %v1170, %v1172
    %v1174 = vsel %vm304, %v1140, %v1156
    %v1175 = vsel %vm304, %v1141, %v1158
    %v1176 = vsel %vm304, %v1142, %v1160
    %v1177 = vsel %vm304, %v1143, %v1162
    %v1178 = vld [vmem:[#allocation11] sm:$0xff]
    %v1179 = vld [vmem:[#allocation11 + $0x8] sm:$0xff]
    %v1180 = vld [vmem:[#allocation11 + $0x10] sm:$0xff]
    %v1181 = vld [vmem:[#allocation11 + $0x18] sm:$0xff]
    %v1182 = vld [vmem:[#allocation11 + $0x20] sm:$0xff]
    %v1183 = vld [vmem:[#allocation11 + $0x28] sm:$0xff]
    %v1184 = vld [vmem:[#allocation11 + $0x30] sm:$0xff]
    %v1185 = vld [vmem:[#allocation11 + $0x38] sm:$0xff]
    %v1186 = vld [vmem:[#allocation11 + $0x40] sm:$0xff]
    %v1187 = vld [vmem:[#allocation11 + $0x48] sm:$0xff]
    %v1188 = vld [vmem:[#allocation11 + $0x50] sm:$0xff]
    %v1189 = vld [vmem:[#allocation11 + $0x58] sm:$0xff]
    %v1190 = vld [vmem:[#allocation11 + $0x60] sm:$0xff]
    %v1191 = vld [vmem:[#allocation11 + $0x68] sm:$0xff]
    %v1192 = vld [vmem:[#allocation11 + $0x70] sm:$0xff]
    %v1193 = vld [vmem:[#allocation11 + $0x78] sm:$0xff]
    %v1194 = vld [vmem:[#allocation11 + $0x80] sm:$0xff]
    %v1195 = vld [vmem:[#allocation11 + $0x88] sm:$0xff]
    %v1196 = vld [vmem:[#allocation11 + $0x90] sm:$0xff]
    %v1197 = vld [vmem:[#allocation11 + $0x98] sm:$0xff]
    %v1198 = vld [vmem:[#allocation11 + $0xa0] sm:$0xff]
    %v1199 = vld [vmem:[#allocation11 + $0xa8] sm:$0xff]
    %v1200 = vld [vmem:[#allocation11 + $0xb0] sm:$0xff]
    %v1201 = vld [vmem:[#allocation11 + $0xb8] sm:$0xff]
    %v1202 = vld [vmem:[#allocation12] sm:$0x1]
    %v1204 = vperm.slane %v1202, 0
    %v1206 = vsel %vm304, %v1169, 0
    %v1208 = vsel %vm304, %v1171, 0
    %v1210 = vsel %vm304, %v1173, 0
    %v1212 = vsel %vm304, %v1172, 0
    %1214 = vmatpush.msra.mxu0 %v1193
    %1215 = vmatpush.msra.mxu0 %v1192
    %1216 = vmatpush.msra.mxu0 %v1191
    %1217 = vmatpush.msra.mxu0 %v1190
    %1218 = vmatpush.msra.mxu0 %v1189
    %1219 = vmatpush.msra.mxu0 %v1188
    %1220 = vmatpush.msra.mxu0 %v1187
    %1221 = vmatpush.msra.mxu0 %v1186
    %1222 = vmatpush.msra.mxu0 %v1185
    %1223 = vmatpush.msra.mxu0 %v1184
    %1224 = vmatpush.msra.mxu0 %v1183
    %1225 = vmatpush.msra.mxu0 %v1182
    %1226 = vmatpush.msra.mxu0 %v1181
    %1227 = vmatpush.msra.mxu0 %v1180
    %1228 = vmatpush.msra.mxu0 %v1179
    %1229 = vmatpush.msra.mxu0 %v1178
    %1230 = vmatmul.f32.gmra.mxu0 %v1174
    %v1231 = vpop.f32.mrf.mxu0
    %v1232 = vadd.f32 %v1204, %v1231
    %1233 = vmatmul.f32.gmra.mxu0 %v1175
    %v1234 = vpop.f32.mrf.mxu0
    %v1235 = vadd.f32 %v1204, %v1234
    %1236 = vmatmul.f32.gmra.mxu0 %v1176
    %v1237 = vpop.f32.mrf.mxu0
    %v1238 = vadd.f32 %v1204, %v1237
    %1239 = vmatmul.f32.gmra.mxu0 %v1177
    %v1240 = vpop.f32.mrf.mxu0
    %v1241 = vadd.f32 %v1204, %v1240
    %1242 = vdwg.mxu0
    %1243 = vmatpush.msra.mxu0 0.0
    %1244 = vmatpush.msra.mxu0 0.0
    %1245 = vmatpush.msra.mxu0 0.0
    %1246 = vmatpush.msra.mxu0 0.0
    %1247 = vmatpush.msra.mxu0 0.0
    %1248 = vmatpush.msra.mxu0 0.0
    %1249 = vmatpush.msra.mxu0 0.0
    %1250 = vmatpush.msra.mxu0 0.0
    %1251 = vmatpush.msra.mxu0 %v1201
    %1252 = vmatpush.msra.mxu0 %v1200
    %1253 = vmatpush.msra.mxu0 %v1199
    %1254 = vmatpush.msra.mxu0 %v1198
    %1255 = vmatpush.msra.mxu0 %v1197
    %1256 = vmatpush.msra.mxu0 %v1196
    %1257 = vmatpush.msra.mxu0 %v1195
    %1258 = vmatpush.msra.mxu0 %v1194
    %1259 = vmatmul.f32.gmra.mxu0 %v1206
    %v1260 = vpop.f32.mrf.mxu0
    %v1261 = vadd.f32 %v1232, %v1260
    %1262 = vmatmul.f32.gmra.mxu0 %v1208
    %v1263 = vpop.f32.mrf.mxu0
    %v1264 = vadd.f32 %v1235, %v1263
    %1265 = vmatmul.f32.gmra.mxu0 %v1210
    %v1266 = vpop.f32.mrf.mxu0
    %v1267 = vadd.f32 %v1238, %v1266
    %1268 = vmatmul.f32.gmra.mxu0 %v1212
    %v1269 = vpop.f32.mrf.mxu0
    %v1270 = vadd.f32 %v1241, %v1269
    %1271 = vdwg.mxu0
    %v1272 = vmax.f32 %v1261, 0.0
    %v1273 = vmax.f32 %v1264, 0.0
    %v1274 = vmax.f32 %v1267, 0.0
    %v1275 = vmax.f32 %v1270, 0.0
    %1276 = vst [vmem:[#allocation3] sm:$0xff] %v1272
    %1277 = vst [vmem:[#allocation3 + $0x8] sm:$0xff] %v1273
    %1278 = vst [vmem:[#allocation3 + $0x10] sm:$0xff] %v1274
    %1279 = vst [vmem:[#allocation3 + $0x18] sm:$0x1f] %v1275
    %v1280 = vld [vmem:[#allocation3] ss:$2 sm:$0xff]
    %v1281 = vld [vmem:[%s470] ss:$2 sm:$0x3f]
    %v1282 = vld [vmem:[%s472] ss:$2 sm:$0xff]
    %v1283 = vld [vmem:[%s474] ss:$2 sm:$0x3f]
    %v1284 = vmax.f32 %v1280, %v1282
    %v1285 = vmax.f32 %v1281, %v1283
    %1286 = vst [vmem:[#allocation4 + $0x1] sm:$0x1] %v1284
    %v1288 = vrot.slane %v1284, 5
    %v1289 = vrot.slane %v1288, 4
    %1291 = vst [vmem:[#allocation4 + $0x5] sm:$0x1] %v1289
    %v1292 = vrot.slane %v1284, 6
    %v1293 = vrot.slane %v1292, 4
    %1295 = vst [vmem:[#allocation4 + $0x9] sm:$0x1] %v1293
    %v1296 = vrot.slane %v1284, 7
    %v1297 = vrot.slane %v1296, 4
    %1299 = vst [vmem:[#allocation4 + $0xd] sm:$0x1] %v1297
    %1300 = vst.sshfl [vmem:[#allocation1] sm:$0xff pattern:$0x75316420] %v1284
    %s1301 = scalar_lea.vmem [#allocation1], 1
    %v1302 = vld [vmem:[%s1301] ss:$2 sm:$0xff]
    %1304 = vst [vmem:[#allocation4 + $0x11] sm:$0x1] %v1302
    %1305 = vst.sshfl [vmem:[#allocation1] sm:$0xff pattern:$0x75316420] %v1284
    %s1306 = scalar_lea.vmem [#allocation1], 1
    %v1307 = vld [vmem:[%s1306] ss:$2 sm:$0xff]
    %v1308 = vrot.slane %v1307, 5
    %v1309 = vrot.slane %v1308, 4
    %1311 = vst [vmem:[#allocation4 + $0x15] sm:$0x1] %v1309
    %1312 = vst.sshfl [vmem:[#allocation1] sm:$0xff pattern:$0x75316420] %v1284
    %s1313 = scalar_lea.vmem [#allocation1], 1
    %v1314 = vld [vmem:[%s1313] ss:$2 sm:$0xff]
    %v1315 = vrot.slane %v1314, 6
    %v1316 = vrot.slane %v1315, 4
    %1318 = vst [vmem:[#allocation4 + $0x19] sm:$0x1] %v1316
    %1319 = vst.sshfl [vmem:[#allocation1] sm:$0xff pattern:$0x75316420] %v1284
    %s1320 = scalar_lea.vmem [#allocation1], 1
    %v1321 = vld [vmem:[%s1320] ss:$2 sm:$0xff]
    %v1322 = vrot.slane %v1321, 7
    %v1323 = vrot.slane %v1322, 4
    %1325 = vst [vmem:[#allocation4 + $0x1d] sm:$0x1] %v1323
    %1326 = vst [vmem:[#allocation4 + $0x21] sm:$0x1] %v1285
    %v1328 = vrot.slane %v1285, 5
    %v1329 = vrot.slane %v1328, 4
    %1331 = vst [vmem:[#allocation4 + $0x25] sm:$0x1] %v1329
    %v1332 = vrot.slane %v1285, 6
    %v1333 = vrot.slane %v1332, 4
    %1335 = vst [vmem:[#allocation4 + $0x29] sm:$0x1] %v1333
    %v1336 = vrot.slane %v1285, 7
    %v1337 = vrot.slane %v1336, 4
    %1339 = vst [vmem:[#allocation4 + $0x2d] sm:$0x1] %v1337
    %1340 = vst.sshfl [vmem:[#allocation1] sm:$0xff pattern:$0x75316420] %v1285
    %s1341 = scalar_lea.vmem [#allocation1], 1
    %v1342 = vld [vmem:[%s1341] ss:$2 sm:$0xff]
    %1344 = vst [vmem:[#allocation4 + $0x31] sm:$0x1] %v1342
    %1345 = vst.sshfl [vmem:[#allocation1] sm:$0xff pattern:$0x75316420] %v1285
    %s1346 = scalar_lea.vmem [#allocation1], 1
    %v1347 = vld [vmem:[%s1346] ss:$2 sm:$0xff]
    %v1348 = vrot.slane %v1347, 5
    %v1349 = vrot.slane %v1348, 4
    %1351 = vst [vmem:[#allocation4 + $0x35] sm:$0x1] %v1349
    %v1352 = vld [vmem:[%s1] sm:$0xff]
    %v1353 = vld [vmem:[%s1 + $0x8] sm:$0xff]
    %v1354 = vld [vmem:[%s1 + $0x10] sm:$0xff]
    %v1355 = vld [vmem:[%s1 + $0x18] sm:$0xff]
    %v1356 = vld [vmem:[%s1 + $0x20] sm:$0xff]
    %v1357 = vld [vmem:[%s1 + $0x28] sm:$0xff]
    %v1358 = vld [vmem:[%s1 + $0x30] sm:$0xff]
    %v1359 = vld [vmem:[%s1 + $0x38] sm:$0xff]
    %v1360 = vld [vmem:[#allocation6] sm:$0x1]
    %1362 = vset.pattern.permute.xlu0 1
    %1363 = vperm.xlu0 %1362, %v1352
    %v1364 = vpop.permute.xlu0 %1363
    %1367 = vset.pattern.permute.xlu0 1
    %1368 = vperm.xlu0 %1367, %v1353
    %v1369 = vpop.permute.xlu0 %1368
    %1372 = vset.pattern.permute.xlu0 1
    %1373 = vperm.xlu0 %1372, %v1354
    %v1374 = vpop.permute.xlu0 %1373
    %1377 = vset.pattern.permute.xlu0 1
    %1378 = vperm.xlu0 %1377, %v1355
    %v1379 = vpop.permute.xlu0 %1378
    %1382 = vset.pattern.permute.xlu0 1
    %1383 = vperm.xlu0 %1382, %v1356
    %v1384 = vpop.permute.xlu0 %1383
    %1387 = vset.pattern.permute.xlu0 1
    %1388 = vperm.xlu0 %1387, %v1357
    %v1389 = vpop.permute.xlu0 %1388
    %1392 = vset.pattern.permute.xlu0 1
    %1393 = vperm.xlu0 %1392, %v1358
    %v1394 = vpop.permute.xlu0 %1393
    %1397 = vset.pattern.permute.xlu0 1
    %1398 = vperm.xlu0 %1397, %v1359
    %v1399 = vpop.permute.xlu0 %1398
    %v1401 = vperm.slane %v1360, 0
    %v1402 = vmul.f32 %v1364, %v1401
    %v1403 = vmul.f32 %v1369, %v1401
    %v1404 = vmul.f32 %v1374, %v1401
    %v1405 = vmul.f32 %v1379, %v1401
    %v1406 = vmul.f32 %v1384, %v1401
    %v1407 = vmul.f32 %v1389, %v1401
    %v1408 = vmul.f32 %v1394, %v1401
    %v1409 = vmul.f32 %v1399, %v1401
    %v1410 = vld [vmem:[#allocation6 + $0x1] sm:$0x1]
    %v1411 = vperm.slane %v1410, 0
    %v1412 = vmul.f32 %v1364, %v1411
    %v1413 = vmul.f32 %v1369, %v1411
    %v1414 = vmul.f32 %v1374, %v1411
    %v1415 = vmul.f32 %v1379, %v1411
    %v1416 = vmul.f32 %v1384, %v1411
    %v1417 = vmul.f32 %v1389, %v1411
    %v1418 = vmul.f32 %v1394, %v1411
    %v1419 = vmul.f32 %v1399, %v1411
    %v1428 = vrot.slane %v1412, 1
    %v1429 = vrot.slane %v1413, 1
    %v1430 = vsel %vm202, %v1428, %v1429
    %v1431 = vrot.slane %v1414, 1
    %v1432 = vsel %vm202, %v1429, %v1431
    %v1433 = vrot.slane %v1415, 1
    %v1434 = vsel %vm202, %v1431, %v1433
    %v1435 = vrot.slane %v1416, 1
    %v1436 = vsel %vm202, %v1433, %v1435
    %v1437 = vrot.slane %v1417, 1
    %v1438 = vsel %vm202, %v1435, %v1437
    %v1439 = vrot.slane %v1418, 1
    %v1440 = vsel %vm202, %v1437, %v1439
    %v1441 = vrot.slane %v1419, 1
    %v1442 = vsel %vm202, %v1439, %v1441
    %v1451 = vadd.f32 %v1402, %v1430
    %v1452 = vadd.f32 %v1403, %v1432
    %v1453 = vadd.f32 %v1404, %v1434
    %v1454 = vadd.f32 %v1405, %v1436
    %v1455 = vadd.f32 %v1406, %v1438
    %v1456 = vadd.f32 %v1407, %v1440
    %v1457 = vadd.f32 %v1408, %v1442
    %v1458 = vadd.f32 %v1409, %v1441
    %v1459 = vld [vmem:[#allocation6 + $0x2] sm:$0x1]
    %v1460 = vperm.slane %v1459, 0
    %v1461 = vmul.f32 %v1364, %v1460
    %v1462 = vmul.f32 %v1369, %v1460
    %v1463 = vmul.f32 %v1374, %v1460
    %v1464 = vmul.f32 %v1379, %v1460
    %v1465 = vmul.f32 %v1384, %v1460
    %v1466 = vmul.f32 %v1389, %v1460
    %v1467 = vmul.f32 %v1394, %v1460
    %v1468 = vmul.f32 %v1399, %v1460
    %v1477 = vrot.slane %v1461, 2
    %v1478 = vrot.slane %v1462, 2
    %v1479 = vsel %vm252, %v1477, %v1478
    %v1480 = vrot.slane %v1463, 2
    %v1481 = vsel %vm252, %v1478, %v1480
    %v1482 = vrot.slane %v1464, 2
    %v1483 = vsel %vm252, %v1480, %v1482
    %v1484 = vrot.slane %v1465, 2
    %v1485 = vsel %vm252, %v1482, %v1484
    %v1486 = vrot.slane %v1466, 2
    %v1487 = vsel %vm252, %v1484, %v1486
    %v1488 = vrot.slane %v1467, 2
    %v1489 = vsel %vm252, %v1486, %v1488
    %v1490 = vrot.slane %v1468, 2
    %v1491 = vsel %vm252, %v1488, %v1490
    %v1500 = vadd.f32 %v1451, %v1479
    %v1501 = vadd.f32 %v1452, %v1481
    %v1502 = vadd.f32 %v1453, %v1483
    %v1503 = vadd.f32 %v1454, %v1485
    %v1504 = vadd.f32 %v1455, %v1487
    %v1505 = vadd.f32 %v1456, %v1489
    %v1506 = vadd.f32 %v1457, %v1491
    %v1507 = vadd.f32 %v1458, %v1490
    %v1508 = vld [vmem:[#allocation9] sm:$0x1]
    %v1510 = vperm.slane %v1508, 0
    %v1512 = vadd.f32 %v1500, %v1510
    %v1513 = vadd.f32 %v1501, %v1510
    %v1514 = vadd.f32 %v1502, %v1510
    %v1515 = vadd.f32 %v1503, %v1510
    %v1516 = vadd.f32 %v1504, %v1510
    %v1517 = vadd.f32 %v1505, %v1510
    %v1518 = vadd.f32 %v1506, %v1510
    %v1519 = vadd.f32 %v1507, %v1510
    %v1520 = vmax.f32 %v1512, 0.0
    %v1521 = vmax.f32 %v1513, 0.0
    %v1522 = vmax.f32 %v1514, 0.0
    %v1523 = vmax.f32 %v1515, 0.0
    %v1524 = vmax.f32 %v1516, 0.0
    %v1525 = vmax.f32 %v1517, 0.0
    %v1526 = vmax.f32 %v1518, 0.0
    %v1527 = vmax.f32 %v1519, 0.0
    %1528 = vst.msk [vmem:[#allocation2] sm:$0xff] %vm304, %v1520
    %1529 = vst.msk [vmem:[#allocation2 + $0x8] sm:$0xff] %vm304, %v1521
    %1530 = vst.msk [vmem:[#allocation2 + $0x10] sm:$0xff] %vm304, %v1522
    %1531 = vst.msk [vmem:[#allocation2 + $0x18] sm:$0xff] %vm304, %v1523
    %1532 = vst.msk [vmem:[#allocation2 + $0x20] sm:$0xff] %vm304, %v1524
    %1533 = vst.msk [vmem:[#allocation2 + $0x28] sm:$0xff] %vm304, %v1525
    %1534 = vst.msk [vmem:[#allocation2 + $0x30] sm:$0xff] %vm304, %v1526
    %1535 = vst.msk [vmem:[#allocation2 + $0x38] sm:$0x3f] %vm312, %v1527
    %v1536 = vld [vmem:[#allocation2] ss:$2 sm:$0xff]
    %v1537 = vld [vmem:[%s315] ss:$2 sm:$0xff]
    %v1538 = vld [vmem:[%s317] ss:$2 sm:$0xff]
    %v1539 = vld [vmem:[%s319] ss:$2 sm:$0x7f]
    %v1540 = vld [vmem:[%s321] ss:$2 sm:$0xff]
    %v1541 = vld [vmem:[%s323] ss:$2 sm:$0xff]
    %v1542 = vld [vmem:[%s325] ss:$2 sm:$0xff]
    %v1543 = vld [vmem:[%s327] ss:$2 sm:$0x7f]
    %v1544 = vmax.f32 %v1536, %v1540
    %v1545 = vmax.f32 %v1537, %v1541
    %v1546 = vmax.f32 %v1538, %v1542
    %v1547 = vmax.f32 %v1539, %v1543
    %v1552 = vrot.slane %v1544, 1
    %v1553 = vrot.slane %v1545, 1
    %v1554 = vsel %vm202, %v1552, %v1553
    %v1555 = vrot.slane %v1546, 1
    %v1556 = vsel %vm202, %v1553, %v1555
    %v1557 = vrot.slane %v1547, 1
    %v1558 = vsel %vm202, %v1555, %v1557
    %1559 = vrot.lane.b32.xlu0 %v1554, 64
    %v1560 = vpop.permute.xlu0 %1559
    %1561 = vrot.lane.b32.xlu0 %v1556, 64
    %v1562 = vpop.permute.xlu0 %1561
    %1563 = vrot.lane.b32.xlu0 %v1558, 64
    %v1564 = vpop.permute.xlu0 %1563
    %1565 = vrot.lane.b32.xlu0 %v1557, 64
    %v1566 = vpop.permute.xlu0 %1565
    %v1571 = vrot.slane %v1544, 2
    %v1572 = vrot.slane %v1545, 2
    %v1573 = vsel %vm252, %v1571, %v1572
    %v1574 = vrot.slane %v1546, 2
    %v1575 = vsel %vm252, %v1572, %v1574
    %v1576 = vrot.slane %v1547, 2
    %v1577 = vsel %vm252, %v1574, %v1576
    %v1578 = vsel %vm304, %v1544, %v1560
    %v1579 = vsel %vm304, %v1545, %v1562
    %v1580 = vsel %vm304, %v1546, %v1564
    %v1581 = vsel %vm304, %v1547, %v1566
    %v1582 = vld [vmem:[#allocation11] sm:$0xff]
    %v1583 = vld [vmem:[#allocation11 + $0x8] sm:$0xff]
    %v1584 = vld [vmem:[#allocation11 + $0x10] sm:$0xff]
    %v1585 = vld [vmem:[#allocation11 + $0x18] sm:$0xff]
    %v1586 = vld [vmem:[#allocation11 + $0x20] sm:$0xff]
    %v1587 = vld [vmem:[#allocation11 + $0x28] sm:$0xff]
    %v1588 = vld [vmem:[#allocation11 + $0x30] sm:$0xff]
    %v1589 = vld [vmem:[#allocation11 + $0x38] sm:$0xff]
    %v1590 = vld [vmem:[#allocation11 + $0x40] sm:$0xff]
    %v1591 = vld [vmem:[#allocation11 + $0x48] sm:$0xff]
    %v1592 = vld [vmem:[#allocation11 + $0x50] sm:$0xff]
    %v1593 = vld [vmem:[#allocation11 + $0x58] sm:$0xff]
    %v1594 = vld [vmem:[#allocation11 + $0x60] sm:$0xff]
    %v1595 = vld [vmem:[#allocation11 + $0x68] sm:$0xff]
    %v1596 = vld [vmem:[#allocation11 + $0x70] sm:$0xff]
    %v1597 = vld [vmem:[#allocation11 + $0x78] sm:$0xff]
    %v1598 = vld [vmem:[#allocation11 + $0x80] sm:$0xff]
    %v1599 = vld [vmem:[#allocation11 + $0x88] sm:$0xff]
    %v1600 = vld [vmem:[#allocation11 + $0x90] sm:$0xff]
    %v1601 = vld [vmem:[#allocation11 + $0x98] sm:$0xff]
    %v1602 = vld [vmem:[#allocation11 + $0xa0] sm:$0xff]
    %v1603 = vld [vmem:[#allocation11 + $0xa8] sm:$0xff]
    %v1604 = vld [vmem:[#allocation11 + $0xb0] sm:$0xff]
    %v1605 = vld [vmem:[#allocation11 + $0xb8] sm:$0xff]
    %v1606 = vld [vmem:[#allocation12] sm:$0x1]
    %v1608 = vperm.slane %v1606, 0
    %v1610 = vsel %vm304, %v1573, 0
    %v1612 = vsel %vm304, %v1575, 0
    %v1614 = vsel %vm304, %v1577, 0
    %v1616 = vsel %vm304, %v1576, 0
    %1618 = vmatpush.msra.mxu0 %v1597
    %1619 = vmatpush.msra.mxu0 %v1596
    %1620 = vmatpush.msra.mxu0 %v1595
    %1621 = vmatpush.msra.mxu0 %v1594
    %1622 = vmatpush.msra.mxu0 %v1593
    %1623 = vmatpush.msra.mxu0 %v1592
    %1624 = vmatpush.msra.mxu0 %v1591
    %1625 = vmatpush.msra.mxu0 %v1590
    %1626 = vmatpush.msra.mxu0 %v1589
    %1627 = vmatpush.msra.mxu0 %v1588
    %1628 = vmatpush.msra.mxu0 %v1587
    %1629 = vmatpush.msra.mxu0 %v1586
    %1630 = vmatpush.msra.mxu0 %v1585
    %1631 = vmatpush.msra.mxu0 %v1584
    %1632 = vmatpush.msra.mxu0 %v1583
    %1633 = vmatpush.msra.mxu0 %v1582
    %1634 = vmatmul.f32.gmra.mxu0 %v1578
    %v1635 = vpop.f32.mrf.mxu0
    %v1636 = vadd.f32 %v1608, %v1635
    %1637 = vmatmul.f32.gmra.mxu0 %v1579
    %v1638 = vpop.f32.mrf.mxu0
    %v1639 = vadd.f32 %v1608, %v1638
    %1640 = vmatmul.f32.gmra.mxu0 %v1580
    %v1641 = vpop.f32.mrf.mxu0
    %v1642 = vadd.f32 %v1608, %v1641
    %1643 = vmatmul.f32.gmra.mxu0 %v1581
    %v1644 = vpop.f32.mrf.mxu0
    %v1645 = vadd.f32 %v1608, %v1644
    %1646 = vdwg.mxu0
    %1647 = vmatpush.msra.mxu0 0.0
    %1648 = vmatpush.msra.mxu0 0.0
    %1649 = vmatpush.msra.mxu0 0.0
    %1650 = vmatpush.msra.mxu0 0.0
    %1651 = vmatpush.msra.mxu0 0.0
    %1652 = vmatpush.msra.mxu0 0.0
    %1653 = vmatpush.msra.mxu0 0.0
    %1654 = vmatpush.msra.mxu0 0.0
    %1655 = vmatpush.msra.mxu0 %v1605
    %1656 = vmatpush.msra.mxu0 %v1604
    %1657 = vmatpush.msra.mxu0 %v1603
    %1658 = vmatpush.msra.mxu0 %v1602
    %1659 = vmatpush.msra.mxu0 %v1601
    %1660 = vmatpush.msra.mxu0 %v1600
    %1661 = vmatpush.msra.mxu0 %v1599
    %1662 = vmatpush.msra.mxu0 %v1598
    %1663 = vmatmul.f32.gmra.mxu0 %v1610
    %v1664 = vpop.f32.mrf.mxu0
    %v1665 = vadd.f32 %v1636, %v1664
    %1666 = vmatmul.f32.gmra.mxu0 %v1612
    %v1667 = vpop.f32.mrf.mxu0
    %v1668 = vadd.f32 %v1639, %v1667
    %1669 = vmatmul.f32.gmra.mxu0 %v1614
    %v1670 = vpop.f32.mrf.mxu0
    %v1671 = vadd.f32 %v1642, %v1670
    %1672 = vmatmul.f32.gmra.mxu0 %v1616
    %v1673 = vpop.f32.mrf.mxu0
    %v1674 = vadd.f32 %v1645, %v1673
    %1675 = vdwg.mxu0
    %v1676 = vmax.f32 %v1665, 0.0
    %v1677 = vmax.f32 %v1668, 0.0
    %v1678 = vmax.f32 %v1671, 0.0
    %v1679 = vmax.f32 %v1674, 0.0
    %1680 = vst [vmem:[#allocation3] sm:$0xff] %v1676
    %1681 = vst [vmem:[#allocation3 + $0x8] sm:$0xff] %v1677
    %1682 = vst [vmem:[#allocation3 + $0x10] sm:$0xff] %v1678
    %1683 = vst [vmem:[#allocation3 + $0x18] sm:$0x1f] %v1679
    %v1684 = vld [vmem:[#allocation3] ss:$2 sm:$0xff]
    %v1685 = vld [vmem:[%s470] ss:$2 sm:$0x3f]
    %v1686 = vld [vmem:[%s472] ss:$2 sm:$0xff]
    %v1687 = vld [vmem:[%s474] ss:$2 sm:$0x3f]
    %v1688 = vmax.f32 %v1684, %v1686
    %v1689 = vmax.f32 %v1685, %v1687
    %1690 = vst [vmem:[#allocation4 + $0x3] sm:$0x1] %v1688
    %v1692 = vrot.slane %v1688, 5
    %v1693 = vrot.slane %v1692, 4
    %1695 = vst [vmem:[#allocation4 + $0x7] sm:$0x1] %v1693
    %v1696 = vrot.slane %v1688, 6
    %v1697 = vrot.slane %v1696, 4
    %1699 = vst [vmem:[#allocation4 + $0xb] sm:$0x1] %v1697
    %v1700 = vrot.slane %v1688, 7
    %v1701 = vrot.slane %v1700, 4
    %1703 = vst [vmem:[#allocation4 + $0xf] sm:$0x1] %v1701
    %1704 = vst.sshfl [vmem:[#allocation1] sm:$0xff pattern:$0x75316420] %v1688
    %s1705 = scalar_lea.vmem [#allocation1], 1
    %v1706 = vld [vmem:[%s1705] ss:$2 sm:$0xff]
    %1708 = vst [vmem:[#allocation4 + $0x13] sm:$0x1] %v1706
    %1709 = vst.sshfl [vmem:[#allocation1] sm:$0xff pattern:$0x75316420] %v1688
    %s1710 = scalar_lea.vmem [#allocation1], 1
    %v1711 = vld [vmem:[%s1710] ss:$2 sm:$0xff]
    %v1712 = vrot.slane %v1711, 5
    %v1713 = vrot.slane %v1712, 4
    %1715 = vst [vmem:[#allocation4 + $0x17] sm:$0x1] %v1713
    %1716 = vst.sshfl [vmem:[#allocation1] sm:$0xff pattern:$0x75316420] %v1688
    %s1717 = scalar_lea.vmem [#allocation1], 1
    %v1718 = vld [vmem:[%s1717] ss:$2 sm:$0xff]
    %v1719 = vrot.slane %v1718, 6
    %v1720 = vrot.slane %v1719, 4
    %1722 = vst [vmem:[#allocation4 + $0x1b] sm:$0x1] %v1720
    %1723 = vst.sshfl [vmem:[#allocation1] sm:$0xff pattern:$0x75316420] %v1688
    %s1724 = scalar_lea.vmem [#allocation1], 1
    %v1725 = vld [vmem:[%s1724] ss:$2 sm:$0xff]
    %v1726 = vrot.slane %v1725, 7
    %v1727 = vrot.slane %v1726, 4
    %1729 = vst [vmem:[#allocation4 + $0x1f] sm:$0x1] %v1727
    %1730 = vst [vmem:[#allocation4 + $0x23] sm:$0x1] %v1689
    %v1732 = vrot.slane %v1689, 5
    %v1733 = vrot.slane %v1732, 4
    %1735 = vst [vmem:[#allocation4 + $0x27] sm:$0x1] %v1733
    %v1736 = vrot.slane %v1689, 6
    %v1737 = vrot.slane %v1736, 4
    %1739 = vst [vmem:[#allocation4 + $0x2b] sm:$0x1] %v1737
    %v1740 = vrot.slane %v1689, 7
    %v1741 = vrot.slane %v1740, 4
    %1743 = vst [vmem:[#allocation4 + $0x2f] sm:$0x1] %v1741
    %1744 = vst.sshfl [vmem:[#allocation1] sm:$0xff pattern:$0x75316420] %v1689
    %s1745 = scalar_lea.vmem [#allocation1], 1
    %v1746 = vld [vmem:[%s1745] ss:$2 sm:$0xff]
    %1748 = vst [vmem:[#allocation4 + $0x33] sm:$0x1] %v1746
    %1749 = vst.sshfl [vmem:[#allocation1] sm:$0xff pattern:$0x75316420] %v1689
    %s1750 = scalar_lea.vmem [#allocation1], 1
    %v1751 = vld [vmem:[%s1750] ss:$2 sm:$0xff]
    %v1752 = vrot.slane %v1751, 5
    %v1753 = vrot.slane %v1752, 4
    %1755 = vst [vmem:[#allocation4 + $0x37] sm:$0x1] %v1753
    %v1756 = vld [vmem:[#allocation4] sm:$0xff]
    %v1757 = vld [vmem:[#allocation4 + $0x8] sm:$0xff]
    %v1758 = vld [vmem:[#allocation4 + $0x10] sm:$0xff]
    %v1759 = vld [vmem:[#allocation4 + $0x18] sm:$0xff]
    %v1760 = vld [vmem:[#allocation4 + $0x20] sm:$0xff]
    %v1761 = vld [vmem:[#allocation4 + $0x28] sm:$0xff]
    %v1762 = vld [vmem:[#allocation4 + $0x30] sm:$0xff]
    %1770 = vst [vmem:[#allocation1] ss:$2 sm:$0xff] %v1756
    %s1771 = scalar_lea.vmem [#allocation1], 16
    %1772 = vst [vmem:[%s1771] ss:$2 sm:$0xff] %v1757
    %s1773 = scalar_lea.vmem [#allocation1], 32
    %1774 = vst [vmem:[%s1773] ss:$2 sm:$0xff] %v1758
    %s1775 = scalar_lea.vmem [#allocation1], 48
    %1776 = vst [vmem:[%s1775] ss:$2 sm:$0xff] %v1759
    %v1777 = vld.sshfl [vmem:[#allocation1] sm:$0xff pattern:$0x75316420]
    %v1778 = vld.sshfl [vmem:[#allocation1 + $0x8] sm:$0xff pattern:$0x75316420]
    %v1779 = vld.sshfl [vmem:[#allocation1 + $0x10] sm:$0xff pattern:$0x75316420]
    %v1780 = vld.sshfl [vmem:[#allocation1 + $0x18] sm:$0xff pattern:$0x75316420]
    %v1781 = vld.sshfl [vmem:[#allocation1 + $0x20] sm:$0xff pattern:$0x75316420]
    %v1782 = vld.sshfl [vmem:[#allocation1 + $0x28] sm:$0xff pattern:$0x75316420]
    %v1783 = vld.sshfl [vmem:[#allocation1 + $0x30] sm:$0xff pattern:$0x75316420]
    %v1784 = vld.sshfl [vmem:[#allocation1 + $0x38] sm:$0xff pattern:$0x75316420]
    %1785 = vst [vmem:[#allocation1] ss:$2 sm:$0xff] %v1760
    %1786 = vst [vmem:[%s1771] ss:$2 sm:$0xff] %v1761
    %1787 = vst [vmem:[%s1773] ss:$2 sm:$0xff] %v1762
    %v1788 = vld.sshfl [vmem:[#allocation1] sm:$0xff pattern:$0x75316420]
    %v1789 = vld.sshfl [vmem:[#allocation1 + $0x8] sm:$0xff pattern:$0x75316420]
    %v1790 = vld.sshfl [vmem:[#allocation1 + $0x10] sm:$0xff pattern:$0x75316420]
    %v1791 = vld.sshfl [vmem:[#allocation1 + $0x18] sm:$0xff pattern:$0x75316420]
    %v1792 = vld.sshfl [vmem:[#allocation1 + $0x20] sm:$0xff pattern:$0x75316420]
    %v1793 = vld.sshfl [vmem:[#allocation1 + $0x28] sm:$0xff pattern:$0x75316420]
    %v1808 = vpack.c.bf16 %v1777, %v1777
    %v1809 = vpack.c.bf16 %v1778, %v1778
    %v1810 = vpack.c.bf16 %v1779, %v1779
    %v1811 = vpack.c.bf16 %v1780, %v1780
    %v1812 = vpack.c.bf16 %v1781, %v1781
    %v1813 = vpack.c.bf16 %v1782, %v1782
    %v1814 = vpack.c.bf16 %v1783, %v1783
    %v1815 = vpack.c.bf16 %v1784, %v1784
    %v1816 = vpack.c.bf16 %v1788, %v1788
    %v1817 = vpack.c.bf16 %v1789, %v1789
    %v1818 = vpack.c.bf16 %v1790, %v1790
    %v1819 = vpack.c.bf16 %v1791, %v1791
    %v1820 = vpack.c.bf16 %v1792, %v1792
    %v1821 = vpack.c.bf16 %v1793, %v1793
    %v1822 = vld [vmem:[#allocation14] sm:$0xff]
    %v1823 = vld [vmem:[#allocation14 + $0x8] sm:$0xff]
    %v1824 = vld [vmem:[#allocation14 + $0x10] sm:$0xff]
    %v1825 = vld [vmem:[#allocation14 + $0x18] sm:$0xff]
    %v1826 = vld [vmem:[#allocation14 + $0x20] sm:$0xff]
    %v1827 = vld [vmem:[#allocation14 + $0x28] sm:$0xff]
    %v1828 = vld [vmem:[#allocation14 + $0x30] sm:$0xff]
    %v1829 = vld [vmem:[#allocation14 + $0x38] sm:$0xff]
    %v1830 = vld [vmem:[#allocation14 + $0x40] sm:$0xff]
    %v1831 = vld [vmem:[#allocation14 + $0x48] sm:$0xff]
    %v1832 = vld [vmem:[#allocation14 + $0x50] sm:$0xff]
    %v1833 = vld [vmem:[#allocation14 + $0x58] sm:$0xff]
    %v1834 = vld [vmem:[#allocation14 + $0x60] sm:$0xff]
    %v1835 = vld [vmem:[#allocation14 + $0x68] sm:$0xff]
    %v1836 = vld [vmem:[#allocation14 + $0x70] sm:$0xff]
    %v1837 = vld [vmem:[#allocation14 + $0x78] sm:$0xff]
    %v1838 = vld [vmem:[#allocation14 + $0x80] sm:$0xff]
    %v1839 = vld [vmem:[#allocation14 + $0x88] sm:$0xff]
    %v1840 = vld [vmem:[#allocation14 + $0x90] sm:$0xff]
    %v1841 = vld [vmem:[#allocation14 + $0x98] sm:$0xff]
    %v1842 = vld [vmem:[#allocation14 + $0xa0] sm:$0xff]
    %v1843 = vld [vmem:[#allocation14 + $0xa8] sm:$0xff]
    %v1844 = vld [vmem:[#allocation14 + $0xb0] sm:$0xff]
    %v1845 = vld [vmem:[#allocation14 + $0xb8] sm:$0xff]
    %v1846 = vld [vmem:[#allocation14 + $0xc0] sm:$0xff]
    %v1847 = vld [vmem:[#allocation14 + $0xc8] sm:$0xff]
    %v1848 = vld [vmem:[#allocation14 + $0xd0] sm:$0xff]
    %v1849 = vld [vmem:[#allocation14 + $0xd8] sm:$0xff]
    %v1850 = vld [vmem:[#allocation14 + $0xe0] sm:$0xff]
    %v1851 = vld [vmem:[#allocation14 + $0xe8] sm:$0xff]
    %v1852 = vld [vmem:[#allocation14 + $0xf0] sm:$0xff]
    %v1853 = vld [vmem:[#allocation14 + $0xf8] sm:$0xff]
    %v1854 = vld [vmem:[#allocation14 + $0x100] sm:$0xff]
    %v1855 = vld [vmem:[#allocation14 + $0x108] sm:$0xff]
    %v1856 = vld [vmem:[#allocation14 + $0x110] sm:$0xff]
    %v1857 = vld [vmem:[#allocation14 + $0x118] sm:$0xff]
    %v1858 = vld [vmem:[#allocation14 + $0x120] sm:$0xff]
    %v1859 = vld [vmem:[#allocation14 + $0x128] sm:$0xff]
    %v1860 = vld [vmem:[#allocation14 + $0x130] sm:$0xff]
    %v1861 = vld [vmem:[#allocation14 + $0x138] sm:$0xff]
    %v1862 = vld [vmem:[#allocation14 + $0x140] sm:$0xff]
    %v1863 = vld [vmem:[#allocation14 + $0x148] sm:$0xff]
    %v1864 = vld [vmem:[#allocation14 + $0x150] sm:$0xff]
    %v1865 = vld [vmem:[#allocation14 + $0x158] sm:$0xff]
    %v1866 = vld [vmem:[#allocation14 + $0x160] sm:$0xff]
    %v1867 = vld [vmem:[#allocation14 + $0x168] sm:$0xff]
    %v1868 = vld [vmem:[#allocation14 + $0x170] sm:$0xff]
    %v1869 = vld [vmem:[#allocation14 + $0x178] sm:$0xff]
    %v1870 = vld [vmem:[#allocation14 + $0x180] sm:$0xff]
    %v1871 = vld [vmem:[#allocation14 + $0x188] sm:$0xff]
    %v1872 = vld [vmem:[#allocation14 + $0x190] sm:$0xff]
    %v1873 = vld [vmem:[#allocation14 + $0x198] sm:$0xff]
    %v1874 = vld [vmem:[#allocation14 + $0x1a0] sm:$0xff]
    %v1875 = vld [vmem:[#allocation14 + $0x1a8] sm:$0xff]
    %v1876 = vld [vmem:[#allocation14 + $0x1b0] sm:$0xff]
    %v1877 = vld [vmem:[#allocation14 + $0x1b8] sm:$0xff]
    %v1878 = vld [vmem:[#allocation14 + $0x1c0] sm:$0xff]
    %v1879 = vld [vmem:[#allocation14 + $0x1c8] sm:$0xff]
    %v1880 = vld [vmem:[#allocation14 + $0x1d0] sm:$0xff]
    %v1881 = vld [vmem:[#allocation14 + $0x1d8] sm:$0xff]
    %v1882 = vld [vmem:[#allocation14 + $0x1e0] sm:$0xff]
    %v1883 = vld [vmem:[#allocation14 + $0x1e8] sm:$0xff]
    %v1884 = vld [vmem:[#allocation14 + $0x1f0] sm:$0xff]
    %v1885 = vld [vmem:[#allocation14 + $0x1f8] sm:$0xff]
    %v1886 = vld [vmem:[#allocation14 + $0x200] sm:$0xff]
    %v1887 = vld [vmem:[#allocation14 + $0x208] sm:$0xff]
    %v1888 = vld [vmem:[#allocation14 + $0x210] sm:$0xff]
    %v1889 = vld [vmem:[#allocation14 + $0x218] sm:$0xff]
    %v1890 = vld [vmem:[#allocation14 + $0x220] sm:$0xff]
    %v1891 = vld [vmem:[#allocation14 + $0x228] sm:$0xff]
    %v1892 = vld [vmem:[#allocation14 + $0x230] sm:$0xff]
    %v1893 = vld [vmem:[#allocation14 + $0x238] sm:$0xff]
    %v1894 = vld [vmem:[#allocation14 + $0x240] sm:$0xff]
    %v1895 = vld [vmem:[#allocation14 + $0x248] sm:$0xff]
    %v1896 = vld [vmem:[#allocation14 + $0x250] sm:$0xff]
    %v1897 = vld [vmem:[#allocation14 + $0x258] sm:$0xff]
    %v1898 = vld [vmem:[#allocation14 + $0x260] sm:$0xff]
    %v1899 = vld [vmem:[#allocation14 + $0x268] sm:$0xff]
    %v1900 = vld [vmem:[#allocation14 + $0x270] sm:$0xff]
    %v1901 = vld [vmem:[#allocation14 + $0x278] sm:$0xff]
    %v1902 = vld [vmem:[#allocation14 + $0x280] sm:$0xff]
    %v1903 = vld [vmem:[#allocation14 + $0x288] sm:$0xff]
    %v1904 = vld [vmem:[#allocation14 + $0x290] sm:$0xff]
    %v1905 = vld [vmem:[#allocation14 + $0x298] sm:$0xff]
    %v1906 = vld [vmem:[#allocation14 + $0x2a0] sm:$0xff]
    %v1907 = vld [vmem:[#allocation14 + $0x2a8] sm:$0xff]
    %v1908 = vld [vmem:[#allocation14 + $0x2b0] sm:$0xff]
    %v1909 = vld [vmem:[#allocation14 + $0x2b8] sm:$0xff]
    %v1910 = vld [vmem:[#allocation14 + $0x2c0] sm:$0xff]
    %v1911 = vld [vmem:[#allocation14 + $0x2c8] sm:$0xff]
    %v1912 = vld [vmem:[#allocation14 + $0x2d0] sm:$0xff]
    %v1913 = vld [vmem:[#allocation14 + $0x2d8] sm:$0xff]
    %v1914 = vld [vmem:[#allocation14 + $0x2e0] sm:$0xff]
    %v1915 = vld [vmem:[#allocation14 + $0x2e8] sm:$0xff]
    %v1916 = vld [vmem:[#allocation14 + $0x2f0] sm:$0xff]
    %v1917 = vld [vmem:[#allocation14 + $0x2f8] sm:$0xff]
    %v1918 = vld [vmem:[#allocation14 + $0x300] sm:$0xff]
    %v1919 = vld [vmem:[#allocation14 + $0x308] sm:$0xff]
    %v1920 = vld [vmem:[#allocation14 + $0x310] sm:$0xff]
    %v1921 = vld [vmem:[#allocation14 + $0x318] sm:$0xff]
    %v1922 = vld [vmem:[#allocation14 + $0x320] sm:$0xff]
    %v1923 = vld [vmem:[#allocation14 + $0x328] sm:$0xff]
    %v1924 = vld [vmem:[#allocation14 + $0x330] sm:$0xff]
    %v1925 = vld [vmem:[#allocation14 + $0x338] sm:$0xff]
    %v1926 = vld [vmem:[#allocation14 + $0x340] sm:$0xff]
    %v1927 = vld [vmem:[#allocation14 + $0x348] sm:$0xff]
    %v1928 = vld [vmem:[#allocation14 + $0x350] sm:$0xff]
    %v1929 = vld [vmem:[#allocation14 + $0x358] sm:$0xff]
    %v1930 = vld [vmem:[#allocation14 + $0x360] sm:$0xff]
    %v1931 = vld [vmem:[#allocation14 + $0x368] sm:$0xff]
    %v1932 = vld [vmem:[#allocation14 + $0x370] sm:$0xff]
    %v1933 = vld [vmem:[#allocation14 + $0x378] sm:$0xff]
    %v1934 = vld [vmem:[#allocation14 + $0x380] sm:$0xff]
    %v1935 = vld [vmem:[#allocation14 + $0x388] sm:$0xff]
    %v1936 = vld [vmem:[#allocation14 + $0x390] sm:$0xff]
    %v1937 = vld [vmem:[#allocation14 + $0x398] sm:$0xff]
    %v1938 = vld [vmem:[#allocation14 + $0x3a0] sm:$0xff]
    %v1939 = vld [vmem:[#allocation14 + $0x3a8] sm:$0xff]
    %v1940 = vld [vmem:[#allocation14 + $0x3b0] sm:$0xff]
    %v1941 = vld [vmem:[#allocation14 + $0x3b8] sm:$0xff]
    %v1942 = vld [vmem:[#allocation14 + $0x3c0] sm:$0xff]
    %v1943 = vld [vmem:[#allocation14 + $0x3c8] sm:$0xff]
    %v1944 = vld [vmem:[#allocation14 + $0x3d0] sm:$0xff]
    %v1945 = vld [vmem:[#allocation14 + $0x3d8] sm:$0xff]
    %v1946 = vld [vmem:[#allocation14 + $0x3e0] sm:$0xff]
    %v1947 = vld [vmem:[#allocation14 + $0x3e8] sm:$0xff]
    %v1948 = vld [vmem:[#allocation14 + $0x3f0] sm:$0xff]
    %v1949 = vld [vmem:[#allocation14 + $0x3f8] sm:$0xff]
    %v1950 = vld [vmem:[#allocation14 + $0x400] sm:$0xff]
    %v1951 = vld [vmem:[#allocation14 + $0x408] sm:$0xff]
    %v1952 = vld [vmem:[#allocation14 + $0x410] sm:$0xff]
    %v1953 = vld [vmem:[#allocation14 + $0x418] sm:$0xff]
    %v1954 = vld [vmem:[#allocation14 + $0x420] sm:$0xff]
    %v1955 = vld [vmem:[#allocation14 + $0x428] sm:$0xff]
    %v1956 = vld [vmem:[#allocation14 + $0x430] sm:$0xff]
    %v1957 = vld [vmem:[#allocation14 + $0x438] sm:$0xff]
    %v1958 = vld [vmem:[#allocation14 + $0x440] sm:$0xff]
    %v1959 = vld [vmem:[#allocation14 + $0x448] sm:$0xff]
    %v1960 = vld [vmem:[#allocation14 + $0x450] sm:$0xff]
    %v1961 = vld [vmem:[#allocation14 + $0x458] sm:$0xff]
    %v1962 = vld [vmem:[#allocation14 + $0x460] sm:$0xff]
    %v1963 = vld [vmem:[#allocation14 + $0x468] sm:$0xff]
    %v1964 = vld [vmem:[#allocation14 + $0x470] sm:$0xff]
    %v1965 = vld [vmem:[#allocation14 + $0x478] sm:$0xff]
    %v1966 = vld [vmem:[#allocation14 + $0x480] sm:$0xff]
    %v1967 = vld [vmem:[#allocation14 + $0x488] sm:$0xff]
    %v1968 = vld [vmem:[#allocation14 + $0x490] sm:$0xff]
    %v1969 = vld [vmem:[#allocation14 + $0x498] sm:$0xff]
    %v1970 = vld [vmem:[#allocation14 + $0x4a0] sm:$0xff]
    %v1971 = vld [vmem:[#allocation14 + $0x4a8] sm:$0xff]
    %v1972 = vld [vmem:[#allocation14 + $0x4b0] sm:$0xff]
    %v1973 = vld [vmem:[#allocation14 + $0x4b8] sm:$0xff]
    %v1974 = vld [vmem:[#allocation14 + $0x4c0] sm:$0xff]
    %v1975 = vld [vmem:[#allocation14 + $0x4c8] sm:$0xff]
    %v1976 = vld [vmem:[#allocation14 + $0x4d0] sm:$0xff]
    %v1977 = vld [vmem:[#allocation14 + $0x4d8] sm:$0xff]
    %v1978 = vld [vmem:[#allocation14 + $0x4e0] sm:$0xff]
    %v1979 = vld [vmem:[#allocation14 + $0x4e8] sm:$0xff]
    %v1980 = vld [vmem:[#allocation14 + $0x4f0] sm:$0xff]
    %v1981 = vld [vmem:[#allocation14 + $0x4f8] sm:$0xff]
    %v1982 = vld [vmem:[#allocation14 + $0x500] sm:$0xff]
    %v1983 = vld [vmem:[#allocation14 + $0x508] sm:$0xff]
    %v1984 = vld [vmem:[#allocation14 + $0x510] sm:$0xff]
    %v1985 = vld [vmem:[#allocation14 + $0x518] sm:$0xff]
    %v1986 = vld [vmem:[#allocation14 + $0x520] sm:$0xff]
    %v1987 = vld [vmem:[#allocation14 + $0x528] sm:$0xff]
    %v1988 = vld [vmem:[#allocation14 + $0x530] sm:$0xff]
    %v1989 = vld [vmem:[#allocation14 + $0x538] sm:$0xff]
    %v1990 = vld [vmem:[#allocation14 + $0x540] sm:$0xff]
    %v1991 = vld [vmem:[#allocation14 + $0x548] sm:$0xff]
    %v1992 = vld [vmem:[#allocation14 + $0x550] sm:$0xff]
    %v1993 = vld [vmem:[#allocation14 + $0x558] sm:$0xff]
    %v1994 = vld [vmem:[#allocation14 + $0x560] sm:$0xff]
    %v1995 = vld [vmem:[#allocation14 + $0x568] sm:$0xff]
    %v1996 = vld [vmem:[#allocation14 + $0x570] sm:$0xff]
    %v1997 = vld [vmem:[#allocation14 + $0x578] sm:$0xff]
    %v1998 = vld [vmem:[#allocation14 + $0x580] sm:$0xff]
    %v1999 = vld [vmem:[#allocation14 + $0x588] sm:$0xff]
    %v2000 = vld [vmem:[#allocation14 + $0x590] sm:$0xff]
    %v2001 = vld [vmem:[#allocation14 + $0x598] sm:$0xff]
    %v2002 = vld [vmem:[#allocation14 + $0x5a0] sm:$0xff]
    %v2003 = vld [vmem:[#allocation14 + $0x5a8] sm:$0xff]
    %v2004 = vld [vmem:[#allocation14 + $0x5b0] sm:$0xff]
    %v2005 = vld [vmem:[#allocation14 + $0x5b8] sm:$0xff]
    %v2006 = vld [vmem:[#allocation14 + $0x5c0] sm:$0xff]
    %v2007 = vld [vmem:[#allocation14 + $0x5c8] sm:$0xff]
    %v2008 = vld [vmem:[#allocation14 + $0x5d0] sm:$0xff]
    %v2009 = vld [vmem:[#allocation14 + $0x5d8] sm:$0xff]
    %v2010 = vld [vmem:[#allocation14 + $0x5e0] sm:$0xff]
    %v2011 = vld [vmem:[#allocation14 + $0x5e8] sm:$0xff]
    %v2012 = vld [vmem:[#allocation14 + $0x5f0] sm:$0xff]
    %v2013 = vld [vmem:[#allocation14 + $0x5f8] sm:$0xff]
    %v2014 = vld [vmem:[#allocation14 + $0x600] sm:$0xff]
    %v2015 = vld [vmem:[#allocation14 + $0x608] sm:$0xff]
    %v2016 = vld [vmem:[#allocation14 + $0x610] sm:$0xff]
    %v2017 = vld [vmem:[#allocation14 + $0x618] sm:$0xff]
    %v2018 = vld [vmem:[#allocation14 + $0x620] sm:$0xff]
    %v2019 = vld [vmem:[#allocation14 + $0x628] sm:$0xff]
    %v2020 = vld [vmem:[#allocation14 + $0x630] sm:$0xff]
    %v2021 = vld [vmem:[#allocation14 + $0x638] sm:$0xff]
    %v2022 = vld [vmem:[#allocation14 + $0x640] sm:$0xff]
    %v2023 = vld [vmem:[#allocation14 + $0x648] sm:$0xff]
    %v2024 = vld [vmem:[#allocation14 + $0x650] sm:$0xff]
    %v2025 = vld [vmem:[#allocation14 + $0x658] sm:$0xff]
    %v2026 = vld [vmem:[#allocation14 + $0x660] sm:$0xff]
    %v2027 = vld [vmem:[#allocation14 + $0x668] sm:$0xff]
    %v2028 = vld [vmem:[#allocation14 + $0x670] sm:$0xff]
    %v2029 = vld [vmem:[#allocation14 + $0x678] sm:$0xff]
    %v2030 = vld [vmem:[#allocation14 + $0x680] sm:$0xff]
    %v2031 = vld [vmem:[#allocation14 + $0x688] sm:$0xff]
    %v2032 = vld [vmem:[#allocation14 + $0x690] sm:$0xff]
    %v2033 = vld [vmem:[#allocation14 + $0x698] sm:$0xff]
    %v2034 = vld [vmem:[#allocation14 + $0x6a0] sm:$0xff]
    %v2035 = vld [vmem:[#allocation14 + $0x6a8] sm:$0xff]
    %v2036 = vld [vmem:[#allocation14 + $0x6b0] sm:$0xff]
    %v2037 = vld [vmem:[#allocation14 + $0x6b8] sm:$0xff]
    %v2038 = vld [vmem:[#allocation14 + $0x6c0] sm:$0xff]
    %v2039 = vld [vmem:[#allocation14 + $0x6c8] sm:$0xff]
    %v2040 = vld [vmem:[#allocation14 + $0x6d0] sm:$0xff]
    %v2041 = vld [vmem:[#allocation14 + $0x6d8] sm:$0xff]
    %v2042 = vld [vmem:[#allocation14 + $0x6e0] sm:$0xff]
    %v2043 = vld [vmem:[#allocation14 + $0x6e8] sm:$0xff]
    %v2044 = vld [vmem:[#allocation14 + $0x6f0] sm:$0xff]
    %v2045 = vld [vmem:[#allocation14 + $0x6f8] sm:$0xff]
    %v2046 = vld [vmem:[#allocation14 + $0x700] sm:$0xff]
    %v2047 = vld [vmem:[#allocation14 + $0x708] sm:$0xff]
    %v2048 = vld [vmem:[#allocation14 + $0x710] sm:$0xff]
    %v2049 = vld [vmem:[#allocation14 + $0x718] sm:$0xff]
    %v2050 = vld [vmem:[#allocation14 + $0x720] sm:$0xff]
    %v2051 = vld [vmem:[#allocation14 + $0x728] sm:$0xff]
    %v2052 = vld [vmem:[#allocation14 + $0x730] sm:$0xff]
    %v2053 = vld [vmem:[#allocation14 + $0x738] sm:$0xff]
    %v2054 = vld [vmem:[#allocation14 + $0x740] sm:$0xff]
    %v2055 = vld [vmem:[#allocation14 + $0x748] sm:$0xff]
    %v2056 = vld [vmem:[#allocation14 + $0x750] sm:$0xff]
    %v2057 = vld [vmem:[#allocation14 + $0x758] sm:$0xff]
    %v2058 = vld [vmem:[#allocation14 + $0x760] sm:$0xff]
    %v2059 = vld [vmem:[#allocation14 + $0x768] sm:$0xff]
    %v2060 = vld [vmem:[#allocation14 + $0x770] sm:$0xff]
    %v2061 = vld [vmem:[#allocation14 + $0x778] sm:$0xff]
    %v2062 = vld [vmem:[#allocation14 + $0x780] sm:$0xff]
    %v2063 = vld [vmem:[#allocation14 + $0x788] sm:$0xff]
    %v2064 = vld [vmem:[#allocation14 + $0x790] sm:$0xff]
    %v2065 = vld [vmem:[#allocation14 + $0x798] sm:$0xff]
    %v2066 = vld [vmem:[#allocation14 + $0x7a0] sm:$0xff]
    %v2067 = vld [vmem:[#allocation14 + $0x7a8] sm:$0xff]
    %v2068 = vld [vmem:[#allocation14 + $0x7b0] sm:$0xff]
    %v2069 = vld [vmem:[#allocation14 + $0x7b8] sm:$0xff]
    %v2070 = vld [vmem:[#allocation14 + $0x7c0] sm:$0xff]
    %v2071 = vld [vmem:[#allocation14 + $0x7c8] sm:$0xff]
    %v2072 = vld [vmem:[#allocation14 + $0x7d0] sm:$0xff]
    %v2073 = vld [vmem:[#allocation14 + $0x7d8] sm:$0xff]
    %v2074 = vld [vmem:[#allocation14 + $0x7e0] sm:$0xff]
    %v2075 = vld [vmem:[#allocation14 + $0x7e8] sm:$0xff]
    %v2076 = vld [vmem:[#allocation14 + $0x7f0] sm:$0xff]
    %v2077 = vld [vmem:[#allocation14 + $0x7f8] sm:$0xff]
    %v2078 = vld [vmem:[#allocation14 + $0x800] sm:$0xff]
    %v2079 = vld [vmem:[#allocation14 + $0x808] sm:$0xff]
    %v2080 = vld [vmem:[#allocation14 + $0x810] sm:$0xff]
    %v2081 = vld [vmem:[#allocation14 + $0x818] sm:$0xff]
    %v2082 = vld [vmem:[#allocation14 + $0x820] sm:$0xff]
    %v2083 = vld [vmem:[#allocation14 + $0x828] sm:$0xff]
    %v2084 = vld [vmem:[#allocation14 + $0x830] sm:$0xff]
    %v2085 = vld [vmem:[#allocation14 + $0x838] sm:$0xff]
    %v2086 = vld [vmem:[#allocation14 + $0x840] sm:$0xff]
    %v2087 = vld [vmem:[#allocation14 + $0x848] sm:$0xff]
    %v2088 = vld [vmem:[#allocation14 + $0x850] sm:$0xff]
    %v2089 = vld [vmem:[#allocation14 + $0x858] sm:$0xff]
    %v2090 = vld [vmem:[#allocation14 + $0x860] sm:$0xff]
    %v2091 = vld [vmem:[#allocation14 + $0x868] sm:$0xff]
    %v2092 = vld [vmem:[#allocation14 + $0x870] sm:$0xff]
    %v2093 = vld [vmem:[#allocation14 + $0x878] sm:$0xff]
    %v2094 = vld [vmem:[#allocation14 + $0x880] sm:$0xff]
    %v2095 = vld [vmem:[#allocation14 + $0x888] sm:$0xff]
    %v2096 = vld [vmem:[#allocation14 + $0x890] sm:$0xff]
    %v2097 = vld [vmem:[#allocation14 + $0x898] sm:$0xff]
    %v2098 = vld [vmem:[#allocation14 + $0x8a0] sm:$0xff]
    %v2099 = vld [vmem:[#allocation14 + $0x8a8] sm:$0xff]
    %v2100 = vld [vmem:[#allocation14 + $0x8b0] sm:$0xff]
    %v2101 = vld [vmem:[#allocation14 + $0x8b8] sm:$0xff]
    %v2102 = vld [vmem:[#allocation14 + $0x8c0] sm:$0xff]
    %v2103 = vld [vmem:[#allocation14 + $0x8c8] sm:$0xff]
    %v2104 = vld [vmem:[#allocation14 + $0x8d0] sm:$0xff]
    %v2105 = vld [vmem:[#allocation14 + $0x8d8] sm:$0xff]
    %v2106 = vld [vmem:[#allocation14 + $0x8e0] sm:$0xff]
    %v2107 = vld [vmem:[#allocation14 + $0x8e8] sm:$0xff]
    %v2108 = vld [vmem:[#allocation14 + $0x8f0] sm:$0xff]
    %v2109 = vld [vmem:[#allocation14 + $0x8f8] sm:$0xff]
    %v2110 = vld [vmem:[#allocation14 + $0x900] sm:$0xff]
    %v2111 = vld [vmem:[#allocation14 + $0x908] sm:$0xff]
    %v2112 = vld [vmem:[#allocation14 + $0x910] sm:$0xff]
    %v2113 = vld [vmem:[#allocation14 + $0x918] sm:$0xff]
    %v2114 = vld [vmem:[#allocation14 + $0x920] sm:$0xff]
    %v2115 = vld [vmem:[#allocation14 + $0x928] sm:$0xff]
    %v2116 = vld [vmem:[#allocation14 + $0x930] sm:$0xff]
    %v2117 = vld [vmem:[#allocation14 + $0x938] sm:$0xff]
    %v2118 = vld [vmem:[#allocation14 + $0x940] sm:$0xff]
    %v2119 = vld [vmem:[#allocation14 + $0x948] sm:$0xff]
    %v2120 = vld [vmem:[#allocation14 + $0x950] sm:$0xff]
    %v2121 = vld [vmem:[#allocation14 + $0x958] sm:$0xff]
    %v2122 = vld [vmem:[#allocation14 + $0x960] sm:$0xff]
    %v2123 = vld [vmem:[#allocation14 + $0x968] sm:$0xff]
    %v2124 = vld [vmem:[#allocation14 + $0x970] sm:$0xff]
    %v2125 = vld [vmem:[#allocation14 + $0x978] sm:$0xff]
    %v2126 = vld [vmem:[#allocation14 + $0x980] sm:$0xff]
    %v2127 = vld [vmem:[#allocation14 + $0x988] sm:$0xff]
    %v2128 = vld [vmem:[#allocation14 + $0x990] sm:$0xff]
    %v2129 = vld [vmem:[#allocation14 + $0x998] sm:$0xff]
    %v2130 = vld [vmem:[#allocation14 + $0x9a0] sm:$0xff]
    %v2131 = vld [vmem:[#allocation14 + $0x9a8] sm:$0xff]
    %v2132 = vld [vmem:[#allocation14 + $0x9b0] sm:$0xff]
    %v2133 = vld [vmem:[#allocation14 + $0x9b8] sm:$0xff]
    %v2134 = vld [vmem:[#allocation14 + $0x9c0] sm:$0xff]
    %v2135 = vld [vmem:[#allocation14 + $0x9c8] sm:$0xff]
    %v2136 = vld [vmem:[#allocation14 + $0x9d0] sm:$0xff]
    %v2137 = vld [vmem:[#allocation14 + $0x9d8] sm:$0xff]
    %v2138 = vld [vmem:[#allocation14 + $0x9e0] sm:$0xff]
    %v2139 = vld [vmem:[#allocation14 + $0x9e8] sm:$0xff]
    %v2140 = vld [vmem:[#allocation14 + $0x9f0] sm:$0xff]
    %v2141 = vld [vmem:[#allocation14 + $0x9f8] sm:$0xff]
    %v2142 = vld [vmem:[#allocation14 + $0xa00] sm:$0xff]
    %v2143 = vld [vmem:[#allocation14 + $0xa08] sm:$0xff]
    %v2144 = vld [vmem:[#allocation14 + $0xa10] sm:$0xff]
    %v2145 = vld [vmem:[#allocation14 + $0xa18] sm:$0xff]
    %v2146 = vld [vmem:[#allocation14 + $0xa20] sm:$0xff]
    %v2147 = vld [vmem:[#allocation14 + $0xa28] sm:$0xff]
    %v2148 = vld [vmem:[#allocation14 + $0xa30] sm:$0xff]
    %v2149 = vld [vmem:[#allocation14 + $0xa38] sm:$0xff]
    %v2150 = vld [vmem:[#allocation14 + $0xa40] sm:$0xff]
    %v2151 = vld [vmem:[#allocation14 + $0xa48] sm:$0xff]
    %v2152 = vld [vmem:[#allocation14 + $0xa50] sm:$0xff]
    %v2153 = vld [vmem:[#allocation14 + $0xa58] sm:$0xff]
    %v2154 = vld [vmem:[#allocation14 + $0xa60] sm:$0xff]
    %v2155 = vld [vmem:[#allocation14 + $0xa68] sm:$0xff]
    %v2156 = vld [vmem:[#allocation14 + $0xa70] sm:$0xff]
    %v2157 = vld [vmem:[#allocation14 + $0xa78] sm:$0xff]
    %v2158 = vld [vmem:[#allocation14 + $0xa80] sm:$0xff]
    %v2159 = vld [vmem:[#allocation14 + $0xa88] sm:$0xff]
    %v2160 = vld [vmem:[#allocation14 + $0xa90] sm:$0xff]
    %v2161 = vld [vmem:[#allocation14 + $0xa98] sm:$0xff]
    %v2162 = vld [vmem:[#allocation14 + $0xaa0] sm:$0xff]
    %v2163 = vld [vmem:[#allocation14 + $0xaa8] sm:$0xff]
    %v2164 = vld [vmem:[#allocation14 + $0xab0] sm:$0xff]
    %v2165 = vld [vmem:[#allocation14 + $0xab8] sm:$0xff]
    %v2166 = vld [vmem:[#allocation14 + $0xac0] sm:$0xff]
    %v2167 = vld [vmem:[#allocation14 + $0xac8] sm:$0xff]
    %v2168 = vld [vmem:[#allocation14 + $0xad0] sm:$0xff]
    %v2169 = vld [vmem:[#allocation14 + $0xad8] sm:$0xff]
    %v2170 = vld [vmem:[#allocation14 + $0xae0] sm:$0xff]
    %v2171 = vld [vmem:[#allocation14 + $0xae8] sm:$0xff]
    %v2172 = vld [vmem:[#allocation14 + $0xaf0] sm:$0xff]
    %v2173 = vld [vmem:[#allocation14 + $0xaf8] sm:$0xff]
    %v2174 = vld [vmem:[#allocation14 + $0xb00] sm:$0xff]
    %v2175 = vld [vmem:[#allocation14 + $0xb08] sm:$0xff]
    %v2176 = vld [vmem:[#allocation14 + $0xb10] sm:$0xff]
    %v2177 = vld [vmem:[#allocation14 + $0xb18] sm:$0xff]
    %v2178 = vld [vmem:[#allocation14 + $0xb20] sm:$0xff]
    %v2179 = vld [vmem:[#allocation14 + $0xb28] sm:$0xff]
    %v2180 = vld [vmem:[#allocation14 + $0xb30] sm:$0xff]
    %v2181 = vld [vmem:[#allocation14 + $0xb38] sm:$0xff]
    %v2182 = vld [vmem:[#allocation14 + $0xb40] sm:$0xff]
    %v2183 = vld [vmem:[#allocation14 + $0xb48] sm:$0xff]
    %v2184 = vld [vmem:[#allocation14 + $0xb50] sm:$0xff]
    %v2185 = vld [vmem:[#allocation14 + $0xb58] sm:$0xff]
    %v2186 = vld [vmem:[#allocation14 + $0xb60] sm:$0xff]
    %v2187 = vld [vmem:[#allocation14 + $0xb68] sm:$0xff]
    %v2188 = vld [vmem:[#allocation14 + $0xb70] sm:$0xff]
    %v2189 = vld [vmem:[#allocation14 + $0xb78] sm:$0xff]
    %v2190 = vld [vmem:[#allocation14 + $0xb80] sm:$0xff]
    %v2191 = vld [vmem:[#allocation14 + $0xb88] sm:$0xff]
    %v2192 = vld [vmem:[#allocation14 + $0xb90] sm:$0xff]
    %v2193 = vld [vmem:[#allocation14 + $0xb98] sm:$0xff]
    %v2194 = vld [vmem:[#allocation14 + $0xba0] sm:$0xff]
    %v2195 = vld [vmem:[#allocation14 + $0xba8] sm:$0xff]
    %v2196 = vld [vmem:[#allocation14 + $0xbb0] sm:$0xff]
    %v2197 = vld [vmem:[#allocation14 + $0xbb8] sm:$0xff]
    %v2198 = vld [vmem:[#allocation14 + $0xbc0] sm:$0xff]
    %v2199 = vld [vmem:[#allocation14 + $0xbc8] sm:$0xff]
    %v2200 = vld [vmem:[#allocation14 + $0xbd0] sm:$0xff]
    %v2201 = vld [vmem:[#allocation14 + $0xbd8] sm:$0xff]
    %v2202 = vld [vmem:[#allocation14 + $0xbe0] sm:$0xff]
    %v2203 = vld [vmem:[#allocation14 + $0xbe8] sm:$0xff]
    %v2204 = vld [vmem:[#allocation14 + $0xbf0] sm:$0xff]
    %v2205 = vld [vmem:[#allocation14 + $0xbf8] sm:$0xff]
    %v2206 = vld [vmem:[#allocation14 + $0xc00] sm:$0xff]
    %v2207 = vld [vmem:[#allocation14 + $0xc08] sm:$0xff]
    %v2208 = vld [vmem:[#allocation14 + $0xc10] sm:$0xff]
    %v2209 = vld [vmem:[#allocation14 + $0xc18] sm:$0xff]
    %v2210 = vld [vmem:[#allocation14 + $0xc20] sm:$0xff]
    %v2211 = vld [vmem:[#allocation14 + $0xc28] sm:$0xff]
    %v2212 = vld [vmem:[#allocation14 + $0xc30] sm:$0xff]
    %v2213 = vld [vmem:[#allocation14 + $0xc38] sm:$0xff]
    %v2214 = vld [vmem:[#allocation14 + $0xc40] sm:$0xff]
    %v2215 = vld [vmem:[#allocation14 + $0xc48] sm:$0xff]
    %v2216 = vld [vmem:[#allocation14 + $0xc50] sm:$0xff]
    %v2217 = vld [vmem:[#allocation14 + $0xc58] sm:$0xff]
    %v2218 = vld [vmem:[#allocation14 + $0xc60] sm:$0xff]
    %v2219 = vld [vmem:[#allocation14 + $0xc68] sm:$0xff]
    %v2220 = vld [vmem:[#allocation14 + $0xc70] sm:$0xff]
    %v2221 = vld [vmem:[#allocation14 + $0xc78] sm:$0xff]
    %v2222 = vld [vmem:[#allocation14 + $0xc80] sm:$0xff]
    %v2223 = vld [vmem:[#allocation14 + $0xc88] sm:$0xff]
    %v2224 = vld [vmem:[#allocation14 + $0xc90] sm:$0xff]
    %v2225 = vld [vmem:[#allocation14 + $0xc98] sm:$0xff]
    %v2226 = vld [vmem:[#allocation14 + $0xca0] sm:$0xff]
    %v2227 = vld [vmem:[#allocation14 + $0xca8] sm:$0xff]
    %v2228 = vld [vmem:[#allocation14 + $0xcb0] sm:$0xff]
    %v2229 = vld [vmem:[#allocation14 + $0xcb8] sm:$0xff]
    %v2230 = vld [vmem:[#allocation14 + $0xcc0] sm:$0xff]
    %v2231 = vld [vmem:[#allocation14 + $0xcc8] sm:$0xff]
    %v2232 = vld [vmem:[#allocation14 + $0xcd0] sm:$0xff]
    %v2233 = vld [vmem:[#allocation14 + $0xcd8] sm:$0xff]
    %v2234 = vld [vmem:[#allocation14 + $0xce0] sm:$0xff]
    %v2235 = vld [vmem:[#allocation14 + $0xce8] sm:$0xff]
    %v2236 = vld [vmem:[#allocation14 + $0xcf0] sm:$0xff]
    %v2237 = vld [vmem:[#allocation14 + $0xcf8] sm:$0xff]
    %v2238 = vld [vmem:[#allocation14 + $0xd00] sm:$0xff]
    %v2239 = vld [vmem:[#allocation14 + $0xd08] sm:$0xff]
    %v2240 = vld [vmem:[#allocation14 + $0xd10] sm:$0xff]
    %v2241 = vld [vmem:[#allocation14 + $0xd18] sm:$0xff]
    %v2242 = vld [vmem:[#allocation14 + $0xd20] sm:$0xff]
    %v2243 = vld [vmem:[#allocation14 + $0xd28] sm:$0xff]
    %v2244 = vld [vmem:[#allocation14 + $0xd30] sm:$0xff]
    %v2245 = vld [vmem:[#allocation14 + $0xd38] sm:$0xff]
    %v2246 = vld [vmem:[#allocation14 + $0xd40] sm:$0xff]
    %v2247 = vld [vmem:[#allocation14 + $0xd48] sm:$0xff]
    %v2248 = vld [vmem:[#allocation14 + $0xd50] sm:$0xff]
    %v2249 = vld [vmem:[#allocation14 + $0xd58] sm:$0xff]
    %v2250 = vld [vmem:[#allocation14 + $0xd60] sm:$0xff]
    %v2251 = vld [vmem:[#allocation14 + $0xd68] sm:$0xff]
    %v2252 = vld [vmem:[#allocation14 + $0xd70] sm:$0xff]
    %v2253 = vld [vmem:[#allocation14 + $0xd78] sm:$0xff]
    %v2254 = vld [vmem:[#allocation14 + $0xd80] sm:$0xff]
    %v2255 = vld [vmem:[#allocation14 + $0xd88] sm:$0xff]
    %v2256 = vld [vmem:[#allocation14 + $0xd90] sm:$0xff]
    %v2257 = vld [vmem:[#allocation14 + $0xd98] sm:$0xff]
    %v2258 = vld [vmem:[#allocation14 + $0xda0] sm:$0xff]
    %v2259 = vld [vmem:[#allocation14 + $0xda8] sm:$0xff]
    %v2260 = vld [vmem:[#allocation14 + $0xdb0] sm:$0xff]
    %v2261 = vld [vmem:[#allocation14 + $0xdb8] sm:$0xff]
    %v2262 = vld [vmem:[#allocation14 + $0xdc0] sm:$0xff]
    %v2263 = vld [vmem:[#allocation14 + $0xdc8] sm:$0xff]
    %v2264 = vld [vmem:[#allocation14 + $0xdd0] sm:$0xff]
    %v2265 = vld [vmem:[#allocation14 + $0xdd8] sm:$0xff]
    %v2266 = vld [vmem:[#allocation14 + $0xde0] sm:$0xff]
    %v2267 = vld [vmem:[#allocation14 + $0xde8] sm:$0xff]
    %v2268 = vld [vmem:[#allocation14 + $0xdf0] sm:$0xff]
    %v2269 = vld [vmem:[#allocation14 + $0xdf8] sm:$0xff]
    %v2270 = vld [vmem:[#allocation15] sm:$0xf]
    %v2272 = vperm.slane %v2270, 0
    %v2273 = vperm.slane %v2270, 1
    %v2274 = vperm.slane %v2270, 2
    %v2275 = vperm.slane %v2270, 3
    %v2728 = vunpack.c.l.b16 %v1822
    %v2729 = vunpack.c.h.b16 %v1822
    %v2730 = vunpack.c.l.b16 %v1823
    %v2731 = vunpack.c.h.b16 %v1823
    %v2732 = vunpack.c.l.b16 %v1824
    %v2733 = vunpack.c.h.b16 %v1824
    %v2734 = vunpack.c.l.b16 %v1825
    %v2735 = vunpack.c.h.b16 %v1825
    %v2736 = vunpack.c.l.b16 %v1826
    %v2737 = vunpack.c.h.b16 %v1826
    %v2738 = vunpack.c.l.b16 %v1827
    %v2739 = vunpack.c.h.b16 %v1827
    %v2740 = vunpack.c.l.b16 %v1828
    %v2741 = vunpack.c.h.b16 %v1828
    %v2742 = vunpack.c.l.b16 %v1829
    %v2743 = vunpack.c.h.b16 %v1829
    %v2744 = vunpack.c.l.b16 %v1830
    %v2745 = vunpack.c.h.b16 %v1830
    %v2746 = vunpack.c.l.b16 %v1831
    %v2747 = vunpack.c.h.b16 %v1831
    %v2748 = vunpack.c.l.b16 %v1832
    %v2749 = vunpack.c.h.b16 %v1832
    %v2750 = vunpack.c.l.b16 %v1833
    %v2751 = vunpack.c.h.b16 %v1833
    %v2752 = vunpack.c.l.b16 %v1834
    %v2753 = vunpack.c.h.b16 %v1834
    %v2754 = vunpack.c.l.b16 %v1835
    %v2755 = vunpack.c.h.b16 %v1835
    %v2756 = vunpack.c.l.b16 %v1836
    %v2757 = vunpack.c.h.b16 %v1836
    %v2758 = vunpack.c.l.b16 %v1837
    %v2759 = vunpack.c.h.b16 %v1837
    %v2760 = vunpack.c.l.b16 %v1838
    %v2761 = vunpack.c.h.b16 %v1838
    %v2762 = vunpack.c.l.b16 %v1839
    %v2763 = vunpack.c.h.b16 %v1839
    %v2764 = vunpack.c.l.b16 %v1840
    %v2765 = vunpack.c.h.b16 %v1840
    %v2766 = vunpack.c.l.b16 %v1841
    %v2767 = vunpack.c.h.b16 %v1841
    %v2768 = vunpack.c.l.b16 %v1842
    %v2769 = vunpack.c.h.b16 %v1842
    %v2770 = vunpack.c.l.b16 %v1843
    %v2771 = vunpack.c.h.b16 %v1843
    %v2772 = vunpack.c.l.b16 %v1844
    %v2773 = vunpack.c.h.b16 %v1844
    %v2774 = vunpack.c.l.b16 %v1845
    %v2775 = vunpack.c.h.b16 %v1845
    %v2776 = vunpack.c.l.b16 %v1846
    %v2777 = vunpack.c.h.b16 %v1846
    %v2778 = vunpack.c.l.b16 %v1847
    %v2779 = vunpack.c.h.b16 %v1847
    %v2780 = vunpack.c.l.b16 %v1848
    %v2781 = vunpack.c.h.b16 %v1848
    %v2782 = vunpack.c.l.b16 %v1849
    %v2783 = vunpack.c.h.b16 %v1849
    %v2784 = vunpack.c.l.b16 %v1850
    %v2785 = vunpack.c.h.b16 %v1850
    %v2786 = vunpack.c.l.b16 %v1851
    %v2787 = vunpack.c.h.b16 %v1851
    %v2788 = vunpack.c.l.b16 %v1852
    %v2789 = vunpack.c.h.b16 %v1852
    %v2790 = vunpack.c.l.b16 %v1853
    %v2791 = vunpack.c.h.b16 %v1853
    %v2792 = vunpack.c.l.b16 %v1854
    %v2793 = vunpack.c.h.b16 %v1854
    %v2794 = vunpack.c.l.b16 %v1855
    %v2795 = vunpack.c.h.b16 %v1855
    %v2796 = vunpack.c.l.b16 %v1856
    %v2797 = vunpack.c.h.b16 %v1856
    %v2798 = vunpack.c.l.b16 %v1857
    %v2799 = vunpack.c.h.b16 %v1857
    %v2800 = vunpack.c.l.b16 %v1858
    %v2801 = vunpack.c.h.b16 %v1858
    %v2802 = vunpack.c.l.b16 %v1859
    %v2803 = vunpack.c.h.b16 %v1859
    %v2804 = vunpack.c.l.b16 %v1860
    %v2805 = vunpack.c.h.b16 %v1860
    %v2806 = vunpack.c.l.b16 %v1861
    %v2807 = vunpack.c.h.b16 %v1861
    %v2808 = vunpack.c.l.b16 %v1862
    %v2809 = vunpack.c.h.b16 %v1862
    %v2810 = vunpack.c.l.b16 %v1863
    %v2811 = vunpack.c.h.b16 %v1863
    %v2812 = vunpack.c.l.b16 %v1864
    %v2813 = vunpack.c.h.b16 %v1864
    %v2814 = vunpack.c.l.b16 %v1865
    %v2815 = vunpack.c.h.b16 %v1865
    %v2816 = vunpack.c.l.b16 %v1866
    %v2817 = vunpack.c.h.b16 %v1866
    %v2818 = vunpack.c.l.b16 %v1867
    %v2819 = vunpack.c.h.b16 %v1867
    %v2820 = vunpack.c.l.b16 %v1868
    %v2821 = vunpack.c.h.b16 %v1868
    %v2822 = vunpack.c.l.b16 %v1869
    %v2823 = vunpack.c.h.b16 %v1869
    %v2824 = vunpack.c.l.b16 %v1870
    %v2825 = vunpack.c.h.b16 %v1870
    %v2826 = vunpack.c.l.b16 %v1871
    %v2827 = vunpack.c.h.b16 %v1871
    %v2828 = vunpack.c.l.b16 %v1872
    %v2829 = vunpack.c.h.b16 %v1872
    %v2830 = vunpack.c.l.b16 %v1873
    %v2831 = vunpack.c.h.b16 %v1873
    %v2832 = vunpack.c.l.b16 %v1874
    %v2833 = vunpack.c.h.b16 %v1874
    %v2834 = vunpack.c.l.b16 %v1875
    %v2835 = vunpack.c.h.b16 %v1875
    %v2836 = vunpack.c.l.b16 %v1876
    %v2837 = vunpack.c.h.b16 %v1876
    %v2838 = vunpack.c.l.b16 %v1877
    %v2839 = vunpack.c.h.b16 %v1877
    %v2840 = vunpack.c.l.b16 %v1878
    %v2841 = vunpack.c.h.b16 %v1878
    %v2842 = vunpack.c.l.b16 %v1879
    %v2843 = vunpack.c.h.b16 %v1879
    %v2844 = vunpack.c.l.b16 %v1880
    %v2845 = vunpack.c.h.b16 %v1880
    %v2846 = vunpack.c.l.b16 %v1881
    %v2847 = vunpack.c.h.b16 %v1881
    %v2848 = vunpack.c.l.b16 %v1882
    %v2849 = vunpack.c.h.b16 %v1882
    %v2850 = vunpack.c.l.b16 %v1883
    %v2851 = vunpack.c.h.b16 %v1883
    %v2852 = vunpack.c.l.b16 %v1884
    %v2853 = vunpack.c.h.b16 %v1884
    %v2854 = vunpack.c.l.b16 %v1885
    %v2855 = vunpack.c.h.b16 %v1885
    %v2856 = vunpack.c.l.b16 %v1886
    %v2857 = vunpack.c.h.b16 %v1886
    %v2858 = vunpack.c.l.b16 %v1887
    %v2859 = vunpack.c.h.b16 %v1887
    %v2860 = vunpack.c.l.b16 %v1888
    %v2861 = vunpack.c.h.b16 %v1888
    %v2862 = vunpack.c.l.b16 %v1889
    %v2863 = vunpack.c.h.b16 %v1889
    %v2864 = vunpack.c.l.b16 %v1890
    %v2865 = vunpack.c.h.b16 %v1890
    %v2866 = vunpack.c.l.b16 %v1891
    %v2867 = vunpack.c.h.b16 %v1891
    %v2868 = vunpack.c.l.b16 %v1892
    %v2869 = vunpack.c.h.b16 %v1892
    %v2870 = vunpack.c.l.b16 %v1893
    %v2871 = vunpack.c.h.b16 %v1893
    %v2872 = vunpack.c.l.b16 %v1894
    %v2873 = vunpack.c.h.b16 %v1894
    %v2874 = vunpack.c.l.b16 %v1895
    %v2875 = vunpack.c.h.b16 %v1895
    %v2876 = vunpack.c.l.b16 %v1896
    %v2877 = vunpack.c.h.b16 %v1896
    %v2878 = vunpack.c.l.b16 %v1897
    %v2879 = vunpack.c.h.b16 %v1897
    %v2880 = vunpack.c.l.b16 %v1898
    %v2881 = vunpack.c.h.b16 %v1898
    %v2882 = vunpack.c.l.b16 %v1899
    %v2883 = vunpack.c.h.b16 %v1899
    %v2884 = vunpack.c.l.b16 %v1900
    %v2885 = vunpack.c.h.b16 %v1900
    %v2886 = vunpack.c.l.b16 %v1901
    %v2887 = vunpack.c.h.b16 %v1901
    %v2888 = vunpack.c.l.b16 %v1902
    %v2889 = vunpack.c.h.b16 %v1902
    %v2890 = vunpack.c.l.b16 %v1903
    %v2891 = vunpack.c.h.b16 %v1903
    %v2892 = vunpack.c.l.b16 %v1904
    %v2893 = vunpack.c.h.b16 %v1904
    %v2894 = vunpack.c.l.b16 %v1905
    %v2895 = vunpack.c.h.b16 %v1905
    %v2896 = vunpack.c.l.b16 %v1906
    %v2897 = vunpack.c.h.b16 %v1906
    %v2898 = vunpack.c.l.b16 %v1907
    %v2899 = vunpack.c.h.b16 %v1907
    %v2900 = vunpack.c.l.b16 %v1908
    %v2901 = vunpack.c.h.b16 %v1908
    %v2902 = vunpack.c.l.b16 %v1909
    %v2903 = vunpack.c.h.b16 %v1909
    %v2904 = vunpack.c.l.b16 %v1910
    %v2905 = vunpack.c.h.b16 %v1910
    %v2906 = vunpack.c.l.b16 %v1911
    %v2907 = vunpack.c.h.b16 %v1911
    %v2908 = vunpack.c.l.b16 %v1912
    %v2909 = vunpack.c.h.b16 %v1912
    %v2910 = vunpack.c.l.b16 %v1913
    %v2911 = vunpack.c.h.b16 %v1913
    %v2912 = vunpack.c.l.b16 %v1914
    %v2913 = vunpack.c.h.b16 %v1914
    %v2914 = vunpack.c.l.b16 %v1915
    %v2915 = vunpack.c.h.b16 %v1915
    %v2916 = vunpack.c.l.b16 %v1916
    %v2917 = vunpack.c.h.b16 %v1916
    %v2918 = vunpack.c.l.b16 %v1917
    %v2919 = vunpack.c.h.b16 %v1917
    %v2920 = vunpack.c.l.b16 %v1918
    %v2921 = vunpack.c.h.b16 %v1918
    %v2922 = vunpack.c.l.b16 %v1919
    %v2923 = vunpack.c.h.b16 %v1919
    %v2924 = vunpack.c.l.b16 %v1920
    %v2925 = vunpack.c.h.b16 %v1920
    %v2926 = vunpack.c.l.b16 %v1921
    %v2927 = vunpack.c.h.b16 %v1921
    %v2928 = vunpack.c.l.b16 %v1922
    %v2929 = vunpack.c.h.b16 %v1922
    %v2930 = vunpack.c.l.b16 %v1923
    %v2931 = vunpack.c.h.b16 %v1923
    %v2932 = vunpack.c.l.b16 %v1924
    %v2933 = vunpack.c.h.b16 %v1924
    %v2934 = vunpack.c.l.b16 %v1925
    %v2935 = vunpack.c.h.b16 %v1925
    %v2936 = vunpack.c.l.b16 %v1926
    %v2937 = vunpack.c.h.b16 %v1926
    %v2938 = vunpack.c.l.b16 %v1927
    %v2939 = vunpack.c.h.b16 %v1927
    %v2940 = vunpack.c.l.b16 %v1928
    %v2941 = vunpack.c.h.b16 %v1928
    %v2942 = vunpack.c.l.b16 %v1929
    %v2943 = vunpack.c.h.b16 %v1929
    %v2944 = vunpack.c.l.b16 %v1930
    %v2945 = vunpack.c.h.b16 %v1930
    %v2946 = vunpack.c.l.b16 %v1931
    %v2947 = vunpack.c.h.b16 %v1931
    %v2948 = vunpack.c.l.b16 %v1932
    %v2949 = vunpack.c.h.b16 %v1932
    %v2950 = vunpack.c.l.b16 %v1933
    %v2951 = vunpack.c.h.b16 %v1933
    %v2952 = vunpack.c.l.b16 %v1934
    %v2953 = vunpack.c.h.b16 %v1934
    %v2954 = vunpack.c.l.b16 %v1935
    %v2955 = vunpack.c.h.b16 %v1935
    %v2956 = vunpack.c.l.b16 %v1936
    %v2957 = vunpack.c.h.b16 %v1936
    %v2958 = vunpack.c.l.b16 %v1937
    %v2959 = vunpack.c.h.b16 %v1937
    %v2960 = vunpack.c.l.b16 %v1938
    %v2961 = vunpack.c.h.b16 %v1938
    %v2962 = vunpack.c.l.b16 %v1939
    %v2963 = vunpack.c.h.b16 %v1939
    %v2964 = vunpack.c.l.b16 %v1940
    %v2965 = vunpack.c.h.b16 %v1940
    %v2966 = vunpack.c.l.b16 %v1941
    %v2967 = vunpack.c.h.b16 %v1941
    %v2968 = vunpack.c.l.b16 %v1942
    %v2969 = vunpack.c.h.b16 %v1942
    %v2970 = vunpack.c.l.b16 %v1943
    %v2971 = vunpack.c.h.b16 %v1943
    %v2972 = vunpack.c.l.b16 %v1944
    %v2973 = vunpack.c.h.b16 %v1944
    %v2974 = vunpack.c.l.b16 %v1945
    %v2975 = vunpack.c.h.b16 %v1945
    %v2976 = vunpack.c.l.b16 %v1946
    %v2977 = vunpack.c.h.b16 %v1946
    %v2978 = vunpack.c.l.b16 %v1947
    %v2979 = vunpack.c.h.b16 %v1947
    %v2980 = vunpack.c.l.b16 %v1948
    %v2981 = vunpack.c.h.b16 %v1948
    %v2982 = vunpack.c.l.b16 %v1949
    %v2983 = vunpack.c.h.b16 %v1949
    %v2984 = vunpack.c.l.b16 %v1950
    %v2985 = vunpack.c.h.b16 %v1950
    %v2986 = vunpack.c.l.b16 %v1951
    %v2987 = vunpack.c.h.b16 %v1951
    %v2988 = vunpack.c.l.b16 %v1952
    %v2989 = vunpack.c.h.b16 %v1952
    %v2990 = vunpack.c.l.b16 %v1953
    %v2991 = vunpack.c.h.b16 %v1953
    %v2992 = vunpack.c.l.b16 %v1954
    %v2993 = vunpack.c.h.b16 %v1954
    %v2994 = vunpack.c.l.b16 %v1955
    %v2995 = vunpack.c.h.b16 %v1955
    %v2996 = vunpack.c.l.b16 %v1956
    %v2997 = vunpack.c.h.b16 %v1956
    %v2998 = vunpack.c.l.b16 %v1957
    %v2999 = vunpack.c.h.b16 %v1957
    %v3000 = vunpack.c.l.b16 %v1958
    %v3001 = vunpack.c.h.b16 %v1958
    %v3002 = vunpack.c.l.b16 %v1959
    %v3003 = vunpack.c.h.b16 %v1959
    %v3004 = vunpack.c.l.b16 %v1960
    %v3005 = vunpack.c.h.b16 %v1960
    %v3006 = vunpack.c.l.b16 %v1961
    %v3007 = vunpack.c.h.b16 %v1961
    %v3008 = vunpack.c.l.b16 %v1962
    %v3009 = vunpack.c.h.b16 %v1962
    %v3010 = vunpack.c.l.b16 %v1963
    %v3011 = vunpack.c.h.b16 %v1963
    %v3012 = vunpack.c.l.b16 %v1964
    %v3013 = vunpack.c.h.b16 %v1964
    %v3014 = vunpack.c.l.b16 %v1965
    %v3015 = vunpack.c.h.b16 %v1965
    %v3016 = vunpack.c.l.b16 %v1966
    %v3017 = vunpack.c.h.b16 %v1966
    %v3018 = vunpack.c.l.b16 %v1967
    %v3019 = vunpack.c.h.b16 %v1967
    %v3020 = vunpack.c.l.b16 %v1968
    %v3021 = vunpack.c.h.b16 %v1968
    %v3022 = vunpack.c.l.b16 %v1969
    %v3023 = vunpack.c.h.b16 %v1969
    %v3024 = vunpack.c.l.b16 %v1970
    %v3025 = vunpack.c.h.b16 %v1970
    %v3026 = vunpack.c.l.b16 %v1971
    %v3027 = vunpack.c.h.b16 %v1971
    %v3028 = vunpack.c.l.b16 %v1972
    %v3029 = vunpack.c.h.b16 %v1972
    %v3030 = vunpack.c.l.b16 %v1973
    %v3031 = vunpack.c.h.b16 %v1973
    %v3032 = vunpack.c.l.b16 %v1974
    %v3033 = vunpack.c.h.b16 %v1974
    %v3034 = vunpack.c.l.b16 %v1975
    %v3035 = vunpack.c.h.b16 %v1975
    %v3036 = vunpack.c.l.b16 %v1976
    %v3037 = vunpack.c.h.b16 %v1976
    %v3038 = vunpack.c.l.b16 %v1977
    %v3039 = vunpack.c.h.b16 %v1977
    %v3040 = vunpack.c.l.b16 %v1978
    %v3041 = vunpack.c.h.b16 %v1978
    %v3042 = vunpack.c.l.b16 %v1979
    %v3043 = vunpack.c.h.b16 %v1979
    %v3044 = vunpack.c.l.b16 %v1980
    %v3045 = vunpack.c.h.b16 %v1980
    %v3046 = vunpack.c.l.b16 %v1981
    %v3047 = vunpack.c.h.b16 %v1981
    %v3048 = vunpack.c.l.b16 %v1982
    %v3049 = vunpack.c.h.b16 %v1982
    %v3050 = vunpack.c.l.b16 %v1983
    %v3051 = vunpack.c.h.b16 %v1983
    %v3052 = vunpack.c.l.b16 %v1984
    %v3053 = vunpack.c.h.b16 %v1984
    %v3054 = vunpack.c.l.b16 %v1985
    %v3055 = vunpack.c.h.b16 %v1985
    %v3056 = vunpack.c.l.b16 %v1986
    %v3057 = vunpack.c.h.b16 %v1986
    %v3058 = vunpack.c.l.b16 %v1987
    %v3059 = vunpack.c.h.b16 %v1987
    %v3060 = vunpack.c.l.b16 %v1988
    %v3061 = vunpack.c.h.b16 %v1988
    %v3062 = vunpack.c.l.b16 %v1989
    %v3063 = vunpack.c.h.b16 %v1989
    %v3064 = vunpack.c.l.b16 %v1990
    %v3065 = vunpack.c.h.b16 %v1990
    %v3066 = vunpack.c.l.b16 %v1991
    %v3067 = vunpack.c.h.b16 %v1991
    %v3068 = vunpack.c.l.b16 %v1992
    %v3069 = vunpack.c.h.b16 %v1992
    %v3070 = vunpack.c.l.b16 %v1993
    %v3071 = vunpack.c.h.b16 %v1993
    %v3072 = vunpack.c.l.b16 %v1994
    %v3073 = vunpack.c.h.b16 %v1994
    %v3074 = vunpack.c.l.b16 %v1995
    %v3075 = vunpack.c.h.b16 %v1995
    %v3076 = vunpack.c.l.b16 %v1996
    %v3077 = vunpack.c.h.b16 %v1996
    %v3078 = vunpack.c.l.b16 %v1997
    %v3079 = vunpack.c.h.b16 %v1997
    %v3080 = vunpack.c.l.b16 %v1998
    %v3081 = vunpack.c.h.b16 %v1998
    %v3082 = vunpack.c.l.b16 %v1999
    %v3083 = vunpack.c.h.b16 %v1999
    %v3084 = vunpack.c.l.b16 %v2000
    %v3085 = vunpack.c.h.b16 %v2000
    %v3086 = vunpack.c.l.b16 %v2001
    %v3087 = vunpack.c.h.b16 %v2001
    %v3088 = vunpack.c.l.b16 %v2002
    %v3089 = vunpack.c.h.b16 %v2002
    %v3090 = vunpack.c.l.b16 %v2003
    %v3091 = vunpack.c.h.b16 %v2003
    %v3092 = vunpack.c.l.b16 %v2004
    %v3093 = vunpack.c.h.b16 %v2004
    %v3094 = vunpack.c.l.b16 %v2005
    %v3095 = vunpack.c.h.b16 %v2005
    %v3096 = vunpack.c.l.b16 %v2006
    %v3097 = vunpack.c.h.b16 %v2006
    %v3098 = vunpack.c.l.b16 %v2007
    %v3099 = vunpack.c.h.b16 %v2007
    %v3100 = vunpack.c.l.b16 %v2008
    %v3101 = vunpack.c.h.b16 %v2008
    %v3102 = vunpack.c.l.b16 %v2009
    %v3103 = vunpack.c.h.b16 %v2009
    %v3104 = vunpack.c.l.b16 %v2010
    %v3105 = vunpack.c.h.b16 %v2010
    %v3106 = vunpack.c.l.b16 %v2011
    %v3107 = vunpack.c.h.b16 %v2011
    %v3108 = vunpack.c.l.b16 %v2012
    %v3109 = vunpack.c.h.b16 %v2012
    %v3110 = vunpack.c.l.b16 %v2013
    %v3111 = vunpack.c.h.b16 %v2013
    %v3112 = vunpack.c.l.b16 %v2014
    %v3113 = vunpack.c.h.b16 %v2014
    %v3114 = vunpack.c.l.b16 %v2015
    %v3115 = vunpack.c.h.b16 %v2015
    %v3116 = vunpack.c.l.b16 %v2016
    %v3117 = vunpack.c.h.b16 %v2016
    %v3118 = vunpack.c.l.b16 %v2017
    %v3119 = vunpack.c.h.b16 %v2017
    %v3120 = vunpack.c.l.b16 %v2018
    %v3121 = vunpack.c.h.b16 %v2018
    %v3122 = vunpack.c.l.b16 %v2019
    %v3123 = vunpack.c.h.b16 %v2019
    %v3124 = vunpack.c.l.b16 %v2020
    %v3125 = vunpack.c.h.b16 %v2020
    %v3126 = vunpack.c.l.b16 %v2021
    %v3127 = vunpack.c.h.b16 %v2021
    %v3128 = vunpack.c.l.b16 %v2022
    %v3129 = vunpack.c.h.b16 %v2022
    %v3130 = vunpack.c.l.b16 %v2023
    %v3131 = vunpack.c.h.b16 %v2023
    %v3132 = vunpack.c.l.b16 %v2024
    %v3133 = vunpack.c.h.b16 %v2024
    %v3134 = vunpack.c.l.b16 %v2025
    %v3135 = vunpack.c.h.b16 %v2025
    %v3136 = vunpack.c.l.b16 %v2026
    %v3137 = vunpack.c.h.b16 %v2026
    %v3138 = vunpack.c.l.b16 %v2027
    %v3139 = vunpack.c.h.b16 %v2027
    %v3140 = vunpack.c.l.b16 %v2028
    %v3141 = vunpack.c.h.b16 %v2028
    %v3142 = vunpack.c.l.b16 %v2029
    %v3143 = vunpack.c.h.b16 %v2029
    %v3144 = vunpack.c.l.b16 %v2030
    %v3145 = vunpack.c.h.b16 %v2030
    %v3146 = vunpack.c.l.b16 %v2031
    %v3147 = vunpack.c.h.b16 %v2031
    %v3148 = vunpack.c.l.b16 %v2032
    %v3149 = vunpack.c.h.b16 %v2032
    %v3150 = vunpack.c.l.b16 %v2033
    %v3151 = vunpack.c.h.b16 %v2033
    %v3152 = vunpack.c.l.b16 %v2034
    %v3153 = vunpack.c.h.b16 %v2034
    %v3154 = vunpack.c.l.b16 %v2035
    %v3155 = vunpack.c.h.b16 %v2035
    %v3156 = vunpack.c.l.b16 %v2036
    %v3157 = vunpack.c.h.b16 %v2036
    %v3158 = vunpack.c.l.b16 %v2037
    %v3159 = vunpack.c.h.b16 %v2037
    %v3160 = vunpack.c.l.b16 %v2038
    %v3161 = vunpack.c.h.b16 %v2038
    %v3162 = vunpack.c.l.b16 %v2039
    %v3163 = vunpack.c.h.b16 %v2039
    %v3164 = vunpack.c.l.b16 %v2040
    %v3165 = vunpack.c.h.b16 %v2040
    %v3166 = vunpack.c.l.b16 %v2041
    %v3167 = vunpack.c.h.b16 %v2041
    %v3168 = vunpack.c.l.b16 %v2042
    %v3169 = vunpack.c.h.b16 %v2042
    %v3170 = vunpack.c.l.b16 %v2043
    %v3171 = vunpack.c.h.b16 %v2043
    %v3172 = vunpack.c.l.b16 %v2044
    %v3173 = vunpack.c.h.b16 %v2044
    %v3174 = vunpack.c.l.b16 %v2045
    %v3175 = vunpack.c.h.b16 %v2045
    %v3176 = vunpack.c.l.b16 %v2046
    %v3177 = vunpack.c.h.b16 %v2046
    %v3178 = vunpack.c.l.b16 %v2047
    %v3179 = vunpack.c.h.b16 %v2047
    %v3180 = vunpack.c.l.b16 %v2048
    %v3181 = vunpack.c.h.b16 %v2048
    %v3182 = vunpack.c.l.b16 %v2049
    %v3183 = vunpack.c.h.b16 %v2049
    %v3184 = vunpack.c.l.b16 %v2050
    %v3185 = vunpack.c.h.b16 %v2050
    %v3186 = vunpack.c.l.b16 %v2051
    %v3187 = vunpack.c.h.b16 %v2051
    %v3188 = vunpack.c.l.b16 %v2052
    %v3189 = vunpack.c.h.b16 %v2052
    %v3190 = vunpack.c.l.b16 %v2053
    %v3191 = vunpack.c.h.b16 %v2053
    %v3192 = vunpack.c.l.b16 %v2054
    %v3193 = vunpack.c.h.b16 %v2054
    %v3194 = vunpack.c.l.b16 %v2055
    %v3195 = vunpack.c.h.b16 %v2055
    %v3196 = vunpack.c.l.b16 %v2056
    %v3197 = vunpack.c.h.b16 %v2056
    %v3198 = vunpack.c.l.b16 %v2057
    %v3199 = vunpack.c.h.b16 %v2057
    %v3200 = vunpack.c.l.b16 %v2058
    %v3201 = vunpack.c.h.b16 %v2058
    %v3202 = vunpack.c.l.b16 %v2059
    %v3203 = vunpack.c.h.b16 %v2059
    %v3204 = vunpack.c.l.b16 %v2060
    %v3205 = vunpack.c.h.b16 %v2060
    %v3206 = vunpack.c.l.b16 %v2061
    %v3207 = vunpack.c.h.b16 %v2061
    %v3208 = vunpack.c.l.b16 %v2062
    %v3209 = vunpack.c.h.b16 %v2062
    %v3210 = vunpack.c.l.b16 %v2063
    %v3211 = vunpack.c.h.b16 %v2063
    %v3212 = vunpack.c.l.b16 %v2064
    %v3213 = vunpack.c.h.b16 %v2064
    %v3214 = vunpack.c.l.b16 %v2065
    %v3215 = vunpack.c.h.b16 %v2065
    %v3216 = vunpack.c.l.b16 %v2066
    %v3217 = vunpack.c.h.b16 %v2066
    %v3218 = vunpack.c.l.b16 %v2067
    %v3219 = vunpack.c.h.b16 %v2067
    %v3220 = vunpack.c.l.b16 %v2068
    %v3221 = vunpack.c.h.b16 %v2068
    %v3222 = vunpack.c.l.b16 %v2069
    %v3223 = vunpack.c.h.b16 %v2069
    %v3224 = vunpack.c.l.b16 %v2070
    %v3225 = vunpack.c.h.b16 %v2070
    %v3226 = vunpack.c.l.b16 %v2071
    %v3227 = vunpack.c.h.b16 %v2071
    %v3228 = vunpack.c.l.b16 %v2072
    %v3229 = vunpack.c.h.b16 %v2072
    %v3230 = vunpack.c.l.b16 %v2073
    %v3231 = vunpack.c.h.b16 %v2073
    %v3232 = vunpack.c.l.b16 %v2074
    %v3233 = vunpack.c.h.b16 %v2074
    %v3234 = vunpack.c.l.b16 %v2075
    %v3235 = vunpack.c.h.b16 %v2075
    %v3236 = vunpack.c.l.b16 %v2076
    %v3237 = vunpack.c.h.b16 %v2076
    %v3238 = vunpack.c.l.b16 %v2077
    %v3239 = vunpack.c.h.b16 %v2077
    %v3240 = vunpack.c.l.b16 %v2078
    %v3241 = vunpack.c.h.b16 %v2078
    %v3242 = vunpack.c.l.b16 %v2079
    %v3243 = vunpack.c.h.b16 %v2079
    %v3244 = vunpack.c.l.b16 %v2080
    %v3245 = vunpack.c.h.b16 %v2080
    %v3246 = vunpack.c.l.b16 %v2081
    %v3247 = vunpack.c.h.b16 %v2081
    %v3248 = vunpack.c.l.b16 %v2082
    %v3249 = vunpack.c.h.b16 %v2082
    %v3250 = vunpack.c.l.b16 %v2083
    %v3251 = vunpack.c.h.b16 %v2083
    %v3252 = vunpack.c.l.b16 %v2084
    %v3253 = vunpack.c.h.b16 %v2084
    %v3254 = vunpack.c.l.b16 %v2085
    %v3255 = vunpack.c.h.b16 %v2085
    %v3256 = vunpack.c.l.b16 %v2086
    %v3257 = vunpack.c.h.b16 %v2086
    %v3258 = vunpack.c.l.b16 %v2087
    %v3259 = vunpack.c.h.b16 %v2087
    %v3260 = vunpack.c.l.b16 %v2088
    %v3261 = vunpack.c.h.b16 %v2088
    %v3262 = vunpack.c.l.b16 %v2089
    %v3263 = vunpack.c.h.b16 %v2089
    %v3264 = vunpack.c.l.b16 %v2090
    %v3265 = vunpack.c.h.b16 %v2090
    %v3266 = vunpack.c.l.b16 %v2091
    %v3267 = vunpack.c.h.b16 %v2091
    %v3268 = vunpack.c.l.b16 %v2092
    %v3269 = vunpack.c.h.b16 %v2092
    %v3270 = vunpack.c.l.b16 %v2093
    %v3271 = vunpack.c.h.b16 %v2093
    %v3272 = vunpack.c.l.b16 %v2094
    %v3273 = vunpack.c.h.b16 %v2094
    %v3274 = vunpack.c.l.b16 %v2095
    %v3275 = vunpack.c.h.b16 %v2095
    %v3276 = vunpack.c.l.b16 %v2096
    %v3277 = vunpack.c.h.b16 %v2096
    %v3278 = vunpack.c.l.b16 %v2097
    %v3279 = vunpack.c.h.b16 %v2097
    %v3280 = vunpack.c.l.b16 %v2098
    %v3281 = vunpack.c.h.b16 %v2098
    %v3282 = vunpack.c.l.b16 %v2099
    %v3283 = vunpack.c.h.b16 %v2099
    %v3284 = vunpack.c.l.b16 %v2100
    %v3285 = vunpack.c.h.b16 %v2100
    %v3286 = vunpack.c.l.b16 %v2101
    %v3287 = vunpack.c.h.b16 %v2101
    %v3288 = vunpack.c.l.b16 %v2102
    %v3289 = vunpack.c.h.b16 %v2102
    %v3290 = vunpack.c.l.b16 %v2103
    %v3291 = vunpack.c.h.b16 %v2103
    %v3292 = vunpack.c.l.b16 %v2104
    %v3293 = vunpack.c.h.b16 %v2104
    %v3294 = vunpack.c.l.b16 %v2105
    %v3295 = vunpack.c.h.b16 %v2105
    %v3296 = vunpack.c.l.b16 %v2106
    %v3297 = vunpack.c.h.b16 %v2106
    %v3298 = vunpack.c.l.b16 %v2107
    %v3299 = vunpack.c.h.b16 %v2107
    %v3300 = vunpack.c.l.b16 %v2108
    %v3301 = vunpack.c.h.b16 %v2108
    %v3302 = vunpack.c.l.b16 %v2109
    %v3303 = vunpack.c.h.b16 %v2109
    %v3304 = vunpack.c.l.b16 %v2110
    %v3305 = vunpack.c.h.b16 %v2110
    %v3306 = vunpack.c.l.b16 %v2111
    %v3307 = vunpack.c.h.b16 %v2111
    %v3308 = vunpack.c.l.b16 %v2112
    %v3309 = vunpack.c.h.b16 %v2112
    %v3310 = vunpack.c.l.b16 %v2113
    %v3311 = vunpack.c.h.b16 %v2113
    %v3312 = vunpack.c.l.b16 %v2114
    %v3313 = vunpack.c.h.b16 %v2114
    %v3314 = vunpack.c.l.b16 %v2115
    %v3315 = vunpack.c.h.b16 %v2115
    %v3316 = vunpack.c.l.b16 %v2116
    %v3317 = vunpack.c.h.b16 %v2116
    %v3318 = vunpack.c.l.b16 %v2117
    %v3319 = vunpack.c.h.b16 %v2117
    %v3320 = vunpack.c.l.b16 %v2118
    %v3321 = vunpack.c.h.b16 %v2118
    %v3322 = vunpack.c.l.b16 %v2119
    %v3323 = vunpack.c.h.b16 %v2119
    %v3324 = vunpack.c.l.b16 %v2120
    %v3325 = vunpack.c.h.b16 %v2120
    %v3326 = vunpack.c.l.b16 %v2121
    %v3327 = vunpack.c.h.b16 %v2121
    %v3328 = vunpack.c.l.b16 %v2122
    %v3329 = vunpack.c.h.b16 %v2122
    %v3330 = vunpack.c.l.b16 %v2123
    %v3331 = vunpack.c.h.b16 %v2123
    %v3332 = vunpack.c.l.b16 %v2124
    %v3333 = vunpack.c.h.b16 %v2124
    %v3334 = vunpack.c.l.b16 %v2125
    %v3335 = vunpack.c.h.b16 %v2125
    %v3336 = vunpack.c.l.b16 %v2126
    %v3337 = vunpack.c.h.b16 %v2126
    %v3338 = vunpack.c.l.b16 %v2127
    %v3339 = vunpack.c.h.b16 %v2127
    %v3340 = vunpack.c.l.b16 %v2128
    %v3341 = vunpack.c.h.b16 %v2128
    %v3342 = vunpack.c.l.b16 %v2129
    %v3343 = vunpack.c.h.b16 %v2129
    %v3344 = vunpack.c.l.b16 %v2130
    %v3345 = vunpack.c.h.b16 %v2130
    %v3346 = vunpack.c.l.b16 %v2131
    %v3347 = vunpack.c.h.b16 %v2131
    %v3348 = vunpack.c.l.b16 %v2132
    %v3349 = vunpack.c.h.b16 %v2132
    %v3350 = vunpack.c.l.b16 %v2133
    %v3351 = vunpack.c.h.b16 %v2133
    %v3352 = vunpack.c.l.b16 %v2134
    %v3353 = vunpack.c.h.b16 %v2134
    %v3354 = vunpack.c.l.b16 %v2135
    %v3355 = vunpack.c.h.b16 %v2135
    %v3356 = vunpack.c.l.b16 %v2136
    %v3357 = vunpack.c.h.b16 %v2136
    %v3358 = vunpack.c.l.b16 %v2137
    %v3359 = vunpack.c.h.b16 %v2137
    %v3360 = vunpack.c.l.b16 %v2138
    %v3361 = vunpack.c.h.b16 %v2138
    %v3362 = vunpack.c.l.b16 %v2139
    %v3363 = vunpack.c.h.b16 %v2139
    %v3364 = vunpack.c.l.b16 %v2140
    %v3365 = vunpack.c.h.b16 %v2140
    %v3366 = vunpack.c.l.b16 %v2141
    %v3367 = vunpack.c.h.b16 %v2141
    %v3368 = vunpack.c.l.b16 %v2142
    %v3369 = vunpack.c.h.b16 %v2142
    %v3370 = vunpack.c.l.b16 %v2143
    %v3371 = vunpack.c.h.b16 %v2143
    %v3372 = vunpack.c.l.b16 %v2144
    %v3373 = vunpack.c.h.b16 %v2144
    %v3374 = vunpack.c.l.b16 %v2145
    %v3375 = vunpack.c.h.b16 %v2145
    %v3376 = vunpack.c.l.b16 %v2146
    %v3377 = vunpack.c.h.b16 %v2146
    %v3378 = vunpack.c.l.b16 %v2147
    %v3379 = vunpack.c.h.b16 %v2147
    %v3380 = vunpack.c.l.b16 %v2148
    %v3381 = vunpack.c.h.b16 %v2148
    %v3382 = vunpack.c.l.b16 %v2149
    %v3383 = vunpack.c.h.b16 %v2149
    %v3384 = vunpack.c.l.b16 %v2150
    %v3385 = vunpack.c.h.b16 %v2150
    %v3386 = vunpack.c.l.b16 %v2151
    %v3387 = vunpack.c.h.b16 %v2151
    %v3388 = vunpack.c.l.b16 %v2152
    %v3389 = vunpack.c.h.b16 %v2152
    %v3390 = vunpack.c.l.b16 %v2153
    %v3391 = vunpack.c.h.b16 %v2153
    %v3392 = vunpack.c.l.b16 %v2154
    %v3393 = vunpack.c.h.b16 %v2154
    %v3394 = vunpack.c.l.b16 %v2155
    %v3395 = vunpack.c.h.b16 %v2155
    %v3396 = vunpack.c.l.b16 %v2156
    %v3397 = vunpack.c.h.b16 %v2156
    %v3398 = vunpack.c.l.b16 %v2157
    %v3399 = vunpack.c.h.b16 %v2157
    %v3400 = vunpack.c.l.b16 %v2158
    %v3401 = vunpack.c.h.b16 %v2158
    %v3402 = vunpack.c.l.b16 %v2159
    %v3403 = vunpack.c.h.b16 %v2159
    %v3404 = vunpack.c.l.b16 %v2160
    %v3405 = vunpack.c.h.b16 %v2160
    %v3406 = vunpack.c.l.b16 %v2161
    %v3407 = vunpack.c.h.b16 %v2161
    %v3408 = vunpack.c.l.b16 %v2162
    %v3409 = vunpack.c.h.b16 %v2162
    %v3410 = vunpack.c.l.b16 %v2163
    %v3411 = vunpack.c.h.b16 %v2163
    %v3412 = vunpack.c.l.b16 %v2164
    %v3413 = vunpack.c.h.b16 %v2164
    %v3414 = vunpack.c.l.b16 %v2165
    %v3415 = vunpack.c.h.b16 %v2165
    %v3416 = vunpack.c.l.b16 %v2166
    %v3417 = vunpack.c.h.b16 %v2166
    %v3418 = vunpack.c.l.b16 %v2167
    %v3419 = vunpack.c.h.b16 %v2167
    %v3420 = vunpack.c.l.b16 %v2168
    %v3421 = vunpack.c.h.b16 %v2168
    %v3422 = vunpack.c.l.b16 %v2169
    %v3423 = vunpack.c.h.b16 %v2169
    %v3424 = vunpack.c.l.b16 %v2170
    %v3425 = vunpack.c.h.b16 %v2170
    %v3426 = vunpack.c.l.b16 %v2171
    %v3427 = vunpack.c.h.b16 %v2171
    %v3428 = vunpack.c.l.b16 %v2172
    %v3429 = vunpack.c.h.b16 %v2172
    %v3430 = vunpack.c.l.b16 %v2173
    %v3431 = vunpack.c.h.b16 %v2173
    %v3432 = vunpack.c.l.b16 %v2174
    %v3433 = vunpack.c.h.b16 %v2174
    %v3434 = vunpack.c.l.b16 %v2175
    %v3435 = vunpack.c.h.b16 %v2175
    %v3436 = vunpack.c.l.b16 %v2176
    %v3437 = vunpack.c.h.b16 %v2176
    %v3438 = vunpack.c.l.b16 %v2177
    %v3439 = vunpack.c.h.b16 %v2177
    %v3440 = vunpack.c.l.b16 %v2178
    %v3441 = vunpack.c.h.b16 %v2178
    %v3442 = vunpack.c.l.b16 %v2179
    %v3443 = vunpack.c.h.b16 %v2179
    %v3444 = vunpack.c.l.b16 %v2180
    %v3445 = vunpack.c.h.b16 %v2180
    %v3446 = vunpack.c.l.b16 %v2181
    %v3447 = vunpack.c.h.b16 %v2181
    %v3448 = vunpack.c.l.b16 %v2182
    %v3449 = vunpack.c.h.b16 %v2182
    %v3450 = vunpack.c.l.b16 %v2183
    %v3451 = vunpack.c.h.b16 %v2183
    %v3452 = vunpack.c.l.b16 %v2184
    %v3453 = vunpack.c.h.b16 %v2184
    %v3454 = vunpack.c.l.b16 %v2185
    %v3455 = vunpack.c.h.b16 %v2185
    %v3456 = vunpack.c.l.b16 %v2186
    %v3457 = vunpack.c.h.b16 %v2186
    %v3458 = vunpack.c.l.b16 %v2187
    %v3459 = vunpack.c.h.b16 %v2187
    %v3460 = vunpack.c.l.b16 %v2188
    %v3461 = vunpack.c.h.b16 %v2188
    %v3462 = vunpack.c.l.b16 %v2189
    %v3463 = vunpack.c.h.b16 %v2189
    %v3464 = vunpack.c.l.b16 %v2190
    %v3465 = vunpack.c.h.b16 %v2190
    %v3466 = vunpack.c.l.b16 %v2191
    %v3467 = vunpack.c.h.b16 %v2191
    %v3468 = vunpack.c.l.b16 %v2192
    %v3469 = vunpack.c.h.b16 %v2192
    %v3470 = vunpack.c.l.b16 %v2193
    %v3471 = vunpack.c.h.b16 %v2193
    %v3472 = vunpack.c.l.b16 %v2194
    %v3473 = vunpack.c.h.b16 %v2194
    %v3474 = vunpack.c.l.b16 %v2195
    %v3475 = vunpack.c.h.b16 %v2195
    %v3476 = vunpack.c.l.b16 %v2196
    %v3477 = vunpack.c.h.b16 %v2196
    %v3478 = vunpack.c.l.b16 %v2197
    %v3479 = vunpack.c.h.b16 %v2197
    %v3480 = vunpack.c.l.b16 %v2198
    %v3481 = vunpack.c.h.b16 %v2198
    %v3482 = vunpack.c.l.b16 %v2199
    %v3483 = vunpack.c.h.b16 %v2199
    %v3484 = vunpack.c.l.b16 %v2200
    %v3485 = vunpack.c.h.b16 %v2200
    %v3486 = vunpack.c.l.b16 %v2201
    %v3487 = vunpack.c.h.b16 %v2201
    %v3488 = vunpack.c.l.b16 %v2202
    %v3489 = vunpack.c.h.b16 %v2202
    %v3490 = vunpack.c.l.b16 %v2203
    %v3491 = vunpack.c.h.b16 %v2203
    %v3492 = vunpack.c.l.b16 %v2204
    %v3493 = vunpack.c.h.b16 %v2204
    %v3494 = vunpack.c.l.b16 %v2205
    %v3495 = vunpack.c.h.b16 %v2205
    %v3496 = vunpack.c.l.b16 %v2206
    %v3497 = vunpack.c.h.b16 %v2206
    %v3498 = vunpack.c.l.b16 %v2207
    %v3499 = vunpack.c.h.b16 %v2207
    %v3500 = vunpack.c.l.b16 %v2208
    %v3501 = vunpack.c.h.b16 %v2208
    %v3502 = vunpack.c.l.b16 %v2209
    %v3503 = vunpack.c.h.b16 %v2209
    %v3504 = vunpack.c.l.b16 %v2210
    %v3505 = vunpack.c.h.b16 %v2210
    %v3506 = vunpack.c.l.b16 %v2211
    %v3507 = vunpack.c.h.b16 %v2211
    %v3508 = vunpack.c.l.b16 %v2212
    %v3509 = vunpack.c.h.b16 %v2212
    %v3510 = vunpack.c.l.b16 %v2213
    %v3511 = vunpack.c.h.b16 %v2213
    %v3512 = vunpack.c.l.b16 %v2214
    %v3513 = vunpack.c.h.b16 %v2214
    %v3514 = vunpack.c.l.b16 %v2215
    %v3515 = vunpack.c.h.b16 %v2215
    %v3516 = vunpack.c.l.b16 %v2216
    %v3517 = vunpack.c.h.b16 %v2216
    %v3518 = vunpack.c.l.b16 %v2217
    %v3519 = vunpack.c.h.b16 %v2217
    %v3520 = vunpack.c.l.b16 %v2218
    %v3521 = vunpack.c.h.b16 %v2218
    %v3522 = vunpack.c.l.b16 %v2219
    %v3523 = vunpack.c.h.b16 %v2219
    %v3524 = vunpack.c.l.b16 %v2220
    %v3525 = vunpack.c.h.b16 %v2220
    %v3526 = vunpack.c.l.b16 %v2221
    %v3527 = vunpack.c.h.b16 %v2221
    %v3528 = vunpack.c.l.b16 %v2222
    %v3529 = vunpack.c.h.b16 %v2222
    %v3530 = vunpack.c.l.b16 %v2223
    %v3531 = vunpack.c.h.b16 %v2223
    %v3532 = vunpack.c.l.b16 %v2224
    %v3533 = vunpack.c.h.b16 %v2224
    %v3534 = vunpack.c.l.b16 %v2225
    %v3535 = vunpack.c.h.b16 %v2225
    %v3536 = vunpack.c.l.b16 %v2226
    %v3537 = vunpack.c.h.b16 %v2226
    %v3538 = vunpack.c.l.b16 %v2227
    %v3539 = vunpack.c.h.b16 %v2227
    %v3540 = vunpack.c.l.b16 %v2228
    %v3541 = vunpack.c.h.b16 %v2228
    %v3542 = vunpack.c.l.b16 %v2229
    %v3543 = vunpack.c.h.b16 %v2229
    %v3544 = vunpack.c.l.b16 %v2230
    %v3545 = vunpack.c.h.b16 %v2230
    %v3546 = vunpack.c.l.b16 %v2231
    %v3547 = vunpack.c.h.b16 %v2231
    %v3548 = vunpack.c.l.b16 %v2232
    %v3549 = vunpack.c.h.b16 %v2232
    %v3550 = vunpack.c.l.b16 %v2233
    %v3551 = vunpack.c.h.b16 %v2233
    %v3552 = vunpack.c.l.b16 %v2234
    %v3553 = vunpack.c.h.b16 %v2234
    %v3554 = vunpack.c.l.b16 %v2235
    %v3555 = vunpack.c.h.b16 %v2235
    %v3556 = vunpack.c.l.b16 %v2236
    %v3557 = vunpack.c.h.b16 %v2236
    %v3558 = vunpack.c.l.b16 %v2237
    %v3559 = vunpack.c.h.b16 %v2237
    %v3560 = vunpack.c.l.b16 %v2238
    %v3561 = vunpack.c.h.b16 %v2238
    %v3562 = vunpack.c.l.b16 %v2239
    %v3563 = vunpack.c.h.b16 %v2239
    %v3564 = vunpack.c.l.b16 %v2240
    %v3565 = vunpack.c.h.b16 %v2240
    %v3566 = vunpack.c.l.b16 %v2241
    %v3567 = vunpack.c.h.b16 %v2241
    %v3568 = vunpack.c.l.b16 %v2242
    %v3569 = vunpack.c.h.b16 %v2242
    %v3570 = vunpack.c.l.b16 %v2243
    %v3571 = vunpack.c.h.b16 %v2243
    %v3572 = vunpack.c.l.b16 %v2244
    %v3573 = vunpack.c.h.b16 %v2244
    %v3574 = vunpack.c.l.b16 %v2245
    %v3575 = vunpack.c.h.b16 %v2245
    %v3576 = vunpack.c.l.b16 %v2246
    %v3577 = vunpack.c.h.b16 %v2246
    %v3578 = vunpack.c.l.b16 %v2247
    %v3579 = vunpack.c.h.b16 %v2247
    %v3580 = vunpack.c.l.b16 %v2248
    %v3581 = vunpack.c.h.b16 %v2248
    %v3582 = vunpack.c.l.b16 %v2249
    %v3583 = vunpack.c.h.b16 %v2249
    %v3584 = vunpack.c.l.b16 %v2250
    %v3585 = vunpack.c.h.b16 %v2250
    %v3586 = vunpack.c.l.b16 %v2251
    %v3587 = vunpack.c.h.b16 %v2251
    %v3588 = vunpack.c.l.b16 %v2252
    %v3589 = vunpack.c.h.b16 %v2252
    %v3590 = vunpack.c.l.b16 %v2253
    %v3591 = vunpack.c.h.b16 %v2253
    %v3592 = vunpack.c.l.b16 %v2254
    %v3593 = vunpack.c.h.b16 %v2254
    %v3594 = vunpack.c.l.b16 %v2255
    %v3595 = vunpack.c.h.b16 %v2255
    %v3596 = vunpack.c.l.b16 %v2256
    %v3597 = vunpack.c.h.b16 %v2256
    %v3598 = vunpack.c.l.b16 %v2257
    %v3599 = vunpack.c.h.b16 %v2257
    %v3600 = vunpack.c.l.b16 %v2258
    %v3601 = vunpack.c.h.b16 %v2258
    %v3602 = vunpack.c.l.b16 %v2259
    %v3603 = vunpack.c.h.b16 %v2259
    %v3604 = vunpack.c.l.b16 %v2260
    %v3605 = vunpack.c.h.b16 %v2260
    %v3606 = vunpack.c.l.b16 %v2261
    %v3607 = vunpack.c.h.b16 %v2261
    %v3608 = vunpack.c.l.b16 %v2262
    %v3609 = vunpack.c.h.b16 %v2262
    %v3610 = vunpack.c.l.b16 %v2263
    %v3611 = vunpack.c.h.b16 %v2263
    %v3612 = vunpack.c.l.b16 %v2264
    %v3613 = vunpack.c.h.b16 %v2264
    %v3614 = vunpack.c.l.b16 %v2265
    %v3615 = vunpack.c.h.b16 %v2265
    %v3616 = vunpack.c.l.b16 %v2266
    %v3617 = vunpack.c.h.b16 %v2266
    %v3618 = vunpack.c.l.b16 %v2267
    %v3619 = vunpack.c.h.b16 %v2267
    %v3620 = vunpack.c.l.b16 %v2268
    %v3621 = vunpack.c.h.b16 %v2268
    %v3622 = vunpack.c.l.b16 %v2269
    %v3623 = vunpack.c.h.b16 %v2269
    %v3624 = vpack.c.b16 %v2732, %v2728
    %v3625 = vpack.c.b16 %v2733, %v2729
    %v3626 = vpack.c.b16 %v2734, %v2730
    %v3627 = vpack.c.b16 %v2735, %v2731
    %v3628 = vpack.c.b16 %v2740, %v2736
    %v3629 = vpack.c.b16 %v2741, %v2737
    %v3630 = vpack.c.b16 %v2742, %v2738
    %v3631 = vpack.c.b16 %v2743, %v2739
    %v3632 = vpack.c.b16 %v2748, %v2744
    %v3633 = vpack.c.b16 %v2749, %v2745
    %v3634 = vpack.c.b16 %v2750, %v2746
    %v3635 = vpack.c.b16 %v2751, %v2747
    %v3636 = vpack.c.b16 %v2756, %v2752
    %v3637 = vpack.c.b16 %v2757, %v2753
    %v3638 = vpack.c.b16 %v2758, %v2754
    %v3639 = vpack.c.b16 %v2759, %v2755
    %v3640 = vpack.c.b16 %v2764, %v2760
    %v3641 = vpack.c.b16 %v2765, %v2761
    %v3642 = vpack.c.b16 %v2766, %v2762
    %v3643 = vpack.c.b16 %v2767, %v2763
    %v3644 = vpack.c.b16 %v2772, %v2768
    %v3645 = vpack.c.b16 %v2773, %v2769
    %v3646 = vpack.c.b16 %v2774, %v2770
    %v3647 = vpack.c.b16 %v2775, %v2771
    %v3648 = vpack.c.b16 %v2780, %v2776
    %v3649 = vpack.c.b16 %v2781, %v2777
    %v3650 = vpack.c.b16 %v2782, %v2778
    %v3651 = vpack.c.b16 %v2783, %v2779
    %v3652 = vpack.c.b16 %v2788, %v2784
    %v3653 = vpack.c.b16 %v2789, %v2785
    %v3654 = vpack.c.b16 %v2790, %v2786
    %v3655 = vpack.c.b16 %v2791, %v2787
    %v3656 = vpack.c.b16 %v2796, %v2792
    %v3657 = vpack.c.b16 %v2797, %v2793
    %v3658 = vpack.c.b16 %v2798, %v2794
    %v3659 = vpack.c.b16 %v2799, %v2795
    %v3660 = vpack.c.b16 %v2804, %v2800
    %v3661 = vpack.c.b16 %v2805, %v2801
    %v3662 = vpack.c.b16 %v2806, %v2802
    %v3663 = vpack.c.b16 %v2807, %v2803
    %v3664 = vpack.c.b16 %v2812, %v2808
    %v3665 = vpack.c.b16 %v2813, %v2809
    %v3666 = vpack.c.b16 %v2814, %v2810
    %v3667 = vpack.c.b16 %v2815, %v2811
    %v3668 = vpack.c.b16 %v2820, %v2816
    %v3669 = vpack.c.b16 %v2821, %v2817
    %v3670 = vpack.c.b16 %v2822, %v2818
    %v3671 = vpack.c.b16 %v2823, %v2819
    %v3672 = vpack.c.b16 %v2828, %v2824
    %v3673 = vpack.c.b16 %v2829, %v2825
    %v3674 = vpack.c.b16 %v2830, %v2826
    %v3675 = vpack.c.b16 %v2831, %v2827
    %v3676 = vpack.c.b16 %v2836, %v2832
    %v3677 = vpack.c.b16 %v2837, %v2833
    %v3678 = vpack.c.b16 %v2838, %v2834
    %v3679 = vpack.c.b16 %v2839, %v2835
    %v3680 = vpack.c.b16 %v2844, %v2840
    %v3681 = vpack.c.b16 %v2845, %v2841
    %v3682 = vpack.c.b16 %v2846, %v2842
    %v3683 = vpack.c.b16 %v2847, %v2843
    %v3684 = vpack.c.b16 %v2852, %v2848
    %v3685 = vpack.c.b16 %v2853, %v2849
    %v3686 = vpack.c.b16 %v2854, %v2850
    %v3687 = vpack.c.b16 %v2855, %v2851
    %v3688 = vpack.c.b16 %v2860, %v2856
    %v3689 = vpack.c.b16 %v2861, %v2857
    %v3690 = vpack.c.b16 %v2862, %v2858
    %v3691 = vpack.c.b16 %v2863, %v2859
    %v3692 = vpack.c.b16 %v2868, %v2864
    %v3693 = vpack.c.b16 %v2869, %v2865
    %v3694 = vpack.c.b16 %v2870, %v2866
    %v3695 = vpack.c.b16 %v2871, %v2867
    %v3696 = vpack.c.b16 %v2876, %v2872
    %v3697 = vpack.c.b16 %v2877, %v2873
    %v3698 = vpack.c.b16 %v2878, %v2874
    %v3699 = vpack.c.b16 %v2879, %v2875
    %v3700 = vpack.c.b16 %v2884, %v2880
    %v3701 = vpack.c.b16 %v2885, %v2881
    %v3702 = vpack.c.b16 %v2886, %v2882
    %v3703 = vpack.c.b16 %v2887, %v2883
    %v3704 = vpack.c.b16 %v2892, %v2888
    %v3705 = vpack.c.b16 %v2893, %v2889
    %v3706 = vpack.c.b16 %v2894, %v2890
    %v3707 = vpack.c.b16 %v2895, %v2891
    %v3708 = vpack.c.b16 %v2900, %v2896
    %v3709 = vpack.c.b16 %v2901, %v2897
    %v3710 = vpack.c.b16 %v2902, %v2898
    %v3711 = vpack.c.b16 %v2903, %v2899
    %v3712 = vpack.c.b16 %v2908, %v2904
    %v3713 = vpack.c.b16 %v2909, %v2905
    %v3714 = vpack.c.b16 %v2910, %v2906
    %v3715 = vpack.c.b16 %v2911, %v2907
    %v3716 = vpack.c.b16 %v2916, %v2912
    %v3717 = vpack.c.b16 %v2917, %v2913
    %v3718 = vpack.c.b16 %v2918, %v2914
    %v3719 = vpack.c.b16 %v2919, %v2915
    %v3720 = vpack.c.b16 %v2924, %v2920
    %v3721 = vpack.c.b16 %v2925, %v2921
    %v3722 = vpack.c.b16 %v2926, %v2922
    %v3723 = vpack.c.b16 %v2927, %v2923
    %v3724 = vpack.c.b16 %v2932, %v2928
    %v3725 = vpack.c.b16 %v2933, %v2929
    %v3726 = vpack.c.b16 %v2934, %v2930
    %v3727 = vpack.c.b16 %v2935, %v2931
    %v3728 = vpack.c.b16 %v2940, %v2936
    %v3729 = vpack.c.b16 %v2941, %v2937
    %v3730 = vpack.c.b16 %v2942, %v2938
    %v3731 = vpack.c.b16 %v2943, %v2939
    %v3732 = vpack.c.b16 %v2948, %v2944
    %v3733 = vpack.c.b16 %v2949, %v2945
    %v3734 = vpack.c.b16 %v2950, %v2946
    %v3735 = vpack.c.b16 %v2951, %v2947
    %v3736 = vpack.c.b16 %v2956, %v2952
    %v3737 = vpack.c.b16 %v2957, %v2953
    %v3738 = vpack.c.b16 %v2958, %v2954
    %v3739 = vpack.c.b16 %v2959, %v2955
    %v3740 = vpack.c.b16 %v2964, %v2960
    %v3741 = vpack.c.b16 %v2965, %v2961
    %v3742 = vpack.c.b16 %v2966, %v2962
    %v3743 = vpack.c.b16 %v2967, %v2963
    %v3744 = vpack.c.b16 %v2972, %v2968
    %v3745 = vpack.c.b16 %v2973, %v2969
    %v3746 = vpack.c.b16 %v2974, %v2970
    %v3747 = vpack.c.b16 %v2975, %v2971
    %v3748 = vpack.c.b16 %v2980, %v2976
    %v3749 = vpack.c.b16 %v2981, %v2977
    %v3750 = vpack.c.b16 %v2982, %v2978
    %v3751 = vpack.c.b16 %v2983, %v2979
    %v3752 = vpack.c.b16 %v2988, %v2984
    %v3753 = vpack.c.b16 %v2989, %v2985
    %v3754 = vpack.c.b16 %v2990, %v2986
    %v3755 = vpack.c.b16 %v2991, %v2987
    %v3756 = vpack.c.b16 %v2996, %v2992
    %v3757 = vpack.c.b16 %v2997, %v2993
    %v3758 = vpack.c.b16 %v2998, %v2994
    %v3759 = vpack.c.b16 %v2999, %v2995
    %v3760 = vpack.c.b16 %v3004, %v3000
    %v3761 = vpack.c.b16 %v3005, %v3001
    %v3762 = vpack.c.b16 %v3006, %v3002
    %v3763 = vpack.c.b16 %v3007, %v3003
    %v3764 = vpack.c.b16 %v3012, %v3008
    %v3765 = vpack.c.b16 %v3013, %v3009
    %v3766 = vpack.c.b16 %v3014, %v3010
    %v3767 = vpack.c.b16 %v3015, %v3011
    %v3768 = vpack.c.b16 %v3020, %v3016
    %v3769 = vpack.c.b16 %v3021, %v3017
    %v3770 = vpack.c.b16 %v3022, %v3018
    %v3771 = vpack.c.b16 %v3023, %v3019
    %v3772 = vpack.c.b16 %v3028, %v3024
    %v3773 = vpack.c.b16 %v3029, %v3025
    %v3774 = vpack.c.b16 %v3030, %v3026
    %v3775 = vpack.c.b16 %v3031, %v3027
    %v3776 = vpack.c.b16 %v3036, %v3032
    %v3777 = vpack.c.b16 %v3037, %v3033
    %v3778 = vpack.c.b16 %v3038, %v3034
    %v3779 = vpack.c.b16 %v3039, %v3035
    %v3780 = vpack.c.b16 %v3044, %v3040
    %v3781 = vpack.c.b16 %v3045, %v3041
    %v3782 = vpack.c.b16 %v3046, %v3042
    %v3783 = vpack.c.b16 %v3047, %v3043
    %v3784 = vpack.c.b16 %v3052, %v3048
    %v3785 = vpack.c.b16 %v3053, %v3049
    %v3786 = vpack.c.b16 %v3054, %v3050
    %v3787 = vpack.c.b16 %v3055, %v3051
    %v3788 = vpack.c.b16 %v3060, %v3056
    %v3789 = vpack.c.b16 %v3061, %v3057
    %v3790 = vpack.c.b16 %v3062, %v3058
    %v3791 = vpack.c.b16 %v3063, %v3059
    %v3792 = vpack.c.b16 %v3068, %v3064
    %v3793 = vpack.c.b16 %v3069, %v3065
    %v3794 = vpack.c.b16 %v3070, %v3066
    %v3795 = vpack.c.b16 %v3071, %v3067
    %v3796 = vpack.c.b16 %v3076, %v3072
    %v3797 = vpack.c.b16 %v3077, %v3073
    %v3798 = vpack.c.b16 %v3078, %v3074
    %v3799 = vpack.c.b16 %v3079, %v3075
    %v3800 = vpack.c.b16 %v3084, %v3080
    %v3801 = vpack.c.b16 %v3085, %v3081
    %v3802 = vpack.c.b16 %v3086, %v3082
    %v3803 = vpack.c.b16 %v3087, %v3083
    %v3804 = vpack.c.b16 %v3092, %v3088
    %v3805 = vpack.c.b16 %v3093, %v3089
    %v3806 = vpack.c.b16 %v3094, %v3090
    %v3807 = vpack.c.b16 %v3095, %v3091
    %v3808 = vpack.c.b16 %v3100, %v3096
    %v3809 = vpack.c.b16 %v3101, %v3097
    %v3810 = vpack.c.b16 %v3102, %v3098
    %v3811 = vpack.c.b16 %v3103, %v3099
    %v3812 = vpack.c.b16 %v3108, %v3104
    %v3813 = vpack.c.b16 %v3109, %v3105
    %v3814 = vpack.c.b16 %v3110, %v3106
    %v3815 = vpack.c.b16 %v3111, %v3107
    %v3816 = vpack.c.b16 %v3116, %v3112
    %v3817 = vpack.c.b16 %v3117, %v3113
    %v3818 = vpack.c.b16 %v3118, %v3114
    %v3819 = vpack.c.b16 %v3119, %v3115
    %v3820 = vpack.c.b16 %v3124, %v3120
    %v3821 = vpack.c.b16 %v3125, %v3121
    %v3822 = vpack.c.b16 %v3126, %v3122
    %v3823 = vpack.c.b16 %v3127, %v3123
    %v3824 = vpack.c.b16 %v3132, %v3128
    %v3825 = vpack.c.b16 %v3133, %v3129
    %v3826 = vpack.c.b16 %v3134, %v3130
    %v3827 = vpack.c.b16 %v3135, %v3131
    %v3828 = vpack.c.b16 %v3140, %v3136
    %v3829 = vpack.c.b16 %v3141, %v3137
    %v3830 = vpack.c.b16 %v3142, %v3138
    %v3831 = vpack.c.b16 %v3143, %v3139
    %v3832 = vpack.c.b16 %v3148, %v3144
    %v3833 = vpack.c.b16 %v3149, %v3145
    %v3834 = vpack.c.b16 %v3150, %v3146
    %v3835 = vpack.c.b16 %v3151, %v3147
    %v3836 = vpack.c.b16 %v3156, %v3152
    %v3837 = vpack.c.b16 %v3157, %v3153
    %v3838 = vpack.c.b16 %v3158, %v3154
    %v3839 = vpack.c.b16 %v3159, %v3155
    %v3840 = vpack.c.b16 %v3164, %v3160
    %v3841 = vpack.c.b16 %v3165, %v3161
    %v3842 = vpack.c.b16 %v3166, %v3162
    %v3843 = vpack.c.b16 %v3167, %v3163
    %v3844 = vpack.c.b16 %v3172, %v3168
    %v3845 = vpack.c.b16 %v3173, %v3169
    %v3846 = vpack.c.b16 %v3174, %v3170
    %v3847 = vpack.c.b16 %v3175, %v3171
    %v3848 = vpack.c.b16 %v3180, %v3176
    %v3849 = vpack.c.b16 %v3181, %v3177
    %v3850 = vpack.c.b16 %v3182, %v3178
    %v3851 = vpack.c.b16 %v3183, %v3179
    %v3852 = vpack.c.b16 %v3188, %v3184
    %v3853 = vpack.c.b16 %v3189, %v3185
    %v3854 = vpack.c.b16 %v3190, %v3186
    %v3855 = vpack.c.b16 %v3191, %v3187
    %v3856 = vpack.c.b16 %v3196, %v3192
    %v3857 = vpack.c.b16 %v3197, %v3193
    %v3858 = vpack.c.b16 %v3198, %v3194
    %v3859 = vpack.c.b16 %v3199, %v3195
    %v3860 = vpack.c.b16 %v3204, %v3200
    %v3861 = vpack.c.b16 %v3205, %v3201
    %v3862 = vpack.c.b16 %v3206, %v3202
    %v3863 = vpack.c.b16 %v3207, %v3203
    %v3864 = vpack.c.b16 %v3212, %v3208
    %v3865 = vpack.c.b16 %v3213, %v3209
    %v3866 = vpack.c.b16 %v3214, %v3210
    %v3867 = vpack.c.b16 %v3215, %v3211
    %v3868 = vpack.c.b16 %v3220, %v3216
    %v3869 = vpack.c.b16 %v3221, %v3217
    %v3870 = vpack.c.b16 %v3222, %v3218
    %v3871 = vpack.c.b16 %v3223, %v3219
    %v3872 = vpack.c.b16 %v3228, %v3224
    %v3873 = vpack.c.b16 %v3229, %v3225
    %v3874 = vpack.c.b16 %v3230, %v3226
    %v3875 = vpack.c.b16 %v3231, %v3227
    %v3876 = vpack.c.b16 %v3236, %v3232
    %v3877 = vpack.c.b16 %v3237, %v3233
    %v3878 = vpack.c.b16 %v3238, %v3234
    %v3879 = vpack.c.b16 %v3239, %v3235
    %v3880 = vpack.c.b16 %v3244, %v3240
    %v3881 = vpack.c.b16 %v3245, %v3241
    %v3882 = vpack.c.b16 %v3246, %v3242
    %v3883 = vpack.c.b16 %v3247, %v3243
    %v3884 = vpack.c.b16 %v3252, %v3248
    %v3885 = vpack.c.b16 %v3253, %v3249
    %v3886 = vpack.c.b16 %v3254, %v3250
    %v3887 = vpack.c.b16 %v3255, %v3251
    %v3888 = vpack.c.b16 %v3260, %v3256
    %v3889 = vpack.c.b16 %v3261, %v3257
    %v3890 = vpack.c.b16 %v3262, %v3258
    %v3891 = vpack.c.b16 %v3263, %v3259
    %v3892 = vpack.c.b16 %v3268, %v3264
    %v3893 = vpack.c.b16 %v3269, %v3265
    %v3894 = vpack.c.b16 %v3270, %v3266
    %v3895 = vpack.c.b16 %v3271, %v3267
    %v3896 = vpack.c.b16 %v3276, %v3272
    %v3897 = vpack.c.b16 %v3277, %v3273
    %v3898 = vpack.c.b16 %v3278, %v3274
    %v3899 = vpack.c.b16 %v3279, %v3275
    %v3900 = vpack.c.b16 %v3284, %v3280
    %v3901 = vpack.c.b16 %v3285, %v3281
    %v3902 = vpack.c.b16 %v3286, %v3282
    %v3903 = vpack.c.b16 %v3287, %v3283
    %v3904 = vpack.c.b16 %v3292, %v3288
    %v3905 = vpack.c.b16 %v3293, %v3289
    %v3906 = vpack.c.b16 %v3294, %v3290
    %v3907 = vpack.c.b16 %v3295, %v3291
    %v3908 = vpack.c.b16 %v3300, %v3296
    %v3909 = vpack.c.b16 %v3301, %v3297
    %v3910 = vpack.c.b16 %v3302, %v3298
    %v3911 = vpack.c.b16 %v3303, %v3299
    %v3912 = vpack.c.b16 %v3308, %v3304
    %v3913 = vpack.c.b16 %v3309, %v3305
    %v3914 = vpack.c.b16 %v3310, %v3306
    %v3915 = vpack.c.b16 %v3311, %v3307
    %v3916 = vpack.c.b16 %v3316, %v3312
    %v3917 = vpack.c.b16 %v3317, %v3313
    %v3918 = vpack.c.b16 %v3318, %v3314
    %v3919 = vpack.c.b16 %v3319, %v3315
    %v3920 = vpack.c.b16 %v3324, %v3320
    %v3921 = vpack.c.b16 %v3325, %v3321
    %v3922 = vpack.c.b16 %v3326, %v3322
    %v3923 = vpack.c.b16 %v3327, %v3323
    %v3924 = vpack.c.b16 %v3332, %v3328
    %v3925 = vpack.c.b16 %v3333, %v3329
    %v3926 = vpack.c.b16 %v3334, %v3330
    %v3927 = vpack.c.b16 %v3335, %v3331
    %v3928 = vpack.c.b16 %v3340, %v3336
    %v3929 = vpack.c.b16 %v3341, %v3337
    %v3930 = vpack.c.b16 %v3342, %v3338
    %v3931 = vpack.c.b16 %v3343, %v3339
    %v3932 = vpack.c.b16 %v3348, %v3344
    %v3933 = vpack.c.b16 %v3349, %v3345
    %v3934 = vpack.c.b16 %v3350, %v3346
    %v3935 = vpack.c.b16 %v3351, %v3347
    %v3936 = vpack.c.b16 %v3356, %v3352
    %v3937 = vpack.c.b16 %v3357, %v3353
    %v3938 = vpack.c.b16 %v3358, %v3354
    %v3939 = vpack.c.b16 %v3359, %v3355
    %v3940 = vpack.c.b16 %v3364, %v3360
    %v3941 = vpack.c.b16 %v3365, %v3361
    %v3942 = vpack.c.b16 %v3366, %v3362
    %v3943 = vpack.c.b16 %v3367, %v3363
    %v3944 = vpack.c.b16 %v3372, %v3368
    %v3945 = vpack.c.b16 %v3373, %v3369
    %v3946 = vpack.c.b16 %v3374, %v3370
    %v3947 = vpack.c.b16 %v3375, %v3371
    %v3948 = vpack.c.b16 %v3380, %v3376
    %v3949 = vpack.c.b16 %v3381, %v3377
    %v3950 = vpack.c.b16 %v3382, %v3378
    %v3951 = vpack.c.b16 %v3383, %v3379
    %v3952 = vpack.c.b16 %v3388, %v3384
    %v3953 = vpack.c.b16 %v3389, %v3385
    %v3954 = vpack.c.b16 %v3390, %v3386
    %v3955 = vpack.c.b16 %v3391, %v3387
    %v3956 = vpack.c.b16 %v3396, %v3392
    %v3957 = vpack.c.b16 %v3397, %v3393
    %v3958 = vpack.c.b16 %v3398, %v3394
    %v3959 = vpack.c.b16 %v3399, %v3395
    %v3960 = vpack.c.b16 %v3404, %v3400
    %v3961 = vpack.c.b16 %v3405, %v3401
    %v3962 = vpack.c.b16 %v3406, %v3402
    %v3963 = vpack.c.b16 %v3407, %v3403
    %v3964 = vpack.c.b16 %v3412, %v3408
    %v3965 = vpack.c.b16 %v3413, %v3409
    %v3966 = vpack.c.b16 %v3414, %v3410
    %v3967 = vpack.c.b16 %v3415, %v3411
    %v3968 = vpack.c.b16 %v3420, %v3416
    %v3969 = vpack.c.b16 %v3421, %v3417
    %v3970 = vpack.c.b16 %v3422, %v3418
    %v3971 = vpack.c.b16 %v3423, %v3419
    %v3972 = vpack.c.b16 %v3428, %v3424
    %v3973 = vpack.c.b16 %v3429, %v3425
    %v3974 = vpack.c.b16 %v3430, %v3426
    %v3975 = vpack.c.b16 %v3431, %v3427
    %v3976 = vpack.c.b16 %v3436, %v3432
    %v3977 = vpack.c.b16 %v3437, %v3433
    %v3978 = vpack.c.b16 %v3438, %v3434
    %v3979 = vpack.c.b16 %v3439, %v3435
    %v3980 = vpack.c.b16 %v3444, %v3440
    %v3981 = vpack.c.b16 %v3445, %v3441
    %v3982 = vpack.c.b16 %v3446, %v3442
    %v3983 = vpack.c.b16 %v3447, %v3443
    %v3984 = vpack.c.b16 %v3452, %v3448
    %v3985 = vpack.c.b16 %v3453, %v3449
    %v3986 = vpack.c.b16 %v3454, %v3450
    %v3987 = vpack.c.b16 %v3455, %v3451
    %v3988 = vpack.c.b16 %v3460, %v3456
    %v3989 = vpack.c.b16 %v3461, %v3457
    %v3990 = vpack.c.b16 %v3462, %v3458
    %v3991 = vpack.c.b16 %v3463, %v3459
    %v3992 = vpack.c.b16 %v3468, %v3464
    %v3993 = vpack.c.b16 %v3469, %v3465
    %v3994 = vpack.c.b16 %v3470, %v3466
    %v3995 = vpack.c.b16 %v3471, %v3467
    %v3996 = vpack.c.b16 %v3476, %v3472
    %v3997 = vpack.c.b16 %v3477, %v3473
    %v3998 = vpack.c.b16 %v3478, %v3474
    %v3999 = vpack.c.b16 %v3479, %v3475
    %v4000 = vpack.c.b16 %v3484, %v3480
    %v4001 = vpack.c.b16 %v3485, %v3481
    %v4002 = vpack.c.b16 %v3486, %v3482
    %v4003 = vpack.c.b16 %v3487, %v3483
    %v4004 = vpack.c.b16 %v3492, %v3488
    %v4005 = vpack.c.b16 %v3493, %v3489
    %v4006 = vpack.c.b16 %v3494, %v3490
    %v4007 = vpack.c.b16 %v3495, %v3491
    %v4008 = vpack.c.b16 %v3500, %v3496
    %v4009 = vpack.c.b16 %v3501, %v3497
    %v4010 = vpack.c.b16 %v3502, %v3498
    %v4011 = vpack.c.b16 %v3503, %v3499
    %v4012 = vpack.c.b16 %v3508, %v3504
    %v4013 = vpack.c.b16 %v3509, %v3505
    %v4014 = vpack.c.b16 %v3510, %v3506
    %v4015 = vpack.c.b16 %v3511, %v3507
    %v4016 = vpack.c.b16 %v3516, %v3512
    %v4017 = vpack.c.b16 %v3517, %v3513
    %v4018 = vpack.c.b16 %v3518, %v3514
    %v4019 = vpack.c.b16 %v3519, %v3515
    %v4020 = vpack.c.b16 %v3524, %v3520
    %v4021 = vpack.c.b16 %v3525, %v3521
    %v4022 = vpack.c.b16 %v3526, %v3522
    %v4023 = vpack.c.b16 %v3527, %v3523
    %v4024 = vpack.c.b16 %v3532, %v3528
    %v4025 = vpack.c.b16 %v3533, %v3529
    %v4026 = vpack.c.b16 %v3534, %v3530
    %v4027 = vpack.c.b16 %v3535, %v3531
    %v4028 = vpack.c.b16 %v3540, %v3536
    %v4029 = vpack.c.b16 %v3541, %v3537
    %v4030 = vpack.c.b16 %v3542, %v3538
    %v4031 = vpack.c.b16 %v3543, %v3539
    %v4032 = vpack.c.b16 %v3548, %v3544
    %v4033 = vpack.c.b16 %v3549, %v3545
    %v4034 = vpack.c.b16 %v3550, %v3546
    %v4035 = vpack.c.b16 %v3551, %v3547
    %v4036 = vpack.c.b16 %v3556, %v3552
    %v4037 = vpack.c.b16 %v3557, %v3553
    %v4038 = vpack.c.b16 %v3558, %v3554
    %v4039 = vpack.c.b16 %v3559, %v3555
    %v4040 = vpack.c.b16 %v3564, %v3560
    %v4041 = vpack.c.b16 %v3565, %v3561
    %v4042 = vpack.c.b16 %v3566, %v3562
    %v4043 = vpack.c.b16 %v3567, %v3563
    %v4044 = vpack.c.b16 %v3572, %v3568
    %v4045 = vpack.c.b16 %v3573, %v3569
    %v4046 = vpack.c.b16 %v3574, %v3570
    %v4047 = vpack.c.b16 %v3575, %v3571
    %v4048 = vpack.c.b16 %v3580, %v3576
    %v4049 = vpack.c.b16 %v3581, %v3577
    %v4050 = vpack.c.b16 %v3582, %v3578
    %v4051 = vpack.c.b16 %v3583, %v3579
    %v4052 = vpack.c.b16 %v3588, %v3584
    %v4053 = vpack.c.b16 %v3589, %v3585
    %v4054 = vpack.c.b16 %v3590, %v3586
    %v4055 = vpack.c.b16 %v3591, %v3587
    %v4056 = vpack.c.b16 %v3596, %v3592
    %v4057 = vpack.c.b16 %v3597, %v3593
    %v4058 = vpack.c.b16 %v3598, %v3594
    %v4059 = vpack.c.b16 %v3599, %v3595
    %v4060 = vpack.c.b16 %v3604, %v3600
    %v4061 = vpack.c.b16 %v3605, %v3601
    %v4062 = vpack.c.b16 %v3606, %v3602
    %v4063 = vpack.c.b16 %v3607, %v3603
    %v4064 = vpack.c.b16 %v3612, %v3608
    %v4065 = vpack.c.b16 %v3613, %v3609
    %v4066 = vpack.c.b16 %v3614, %v3610
    %v4067 = vpack.c.b16 %v3615, %v3611
    %v4068 = vpack.c.b16 %v3620, %v3616
    %v4069 = vpack.c.b16 %v3621, %v3617
    %v4070 = vpack.c.b16 %v3622, %v3618
    %v4071 = vpack.c.b16 %v3623, %v3619
    %4520 = vmatpush.bf16.msra.mxu0 %v3652
    %4521 = vmatpush.bf16.msra.mxu0 %v3648
    %4522 = vmatpush.bf16.msra.mxu0 %v3644
    %4523 = vmatpush.bf16.msra.mxu0 %v3640
    %4524 = vmatpush.bf16.msra.mxu0 %v3636
    %4525 = vmatpush.bf16.msra.mxu0 %v3632
    %4526 = vmatpush.bf16.msra.mxu0 %v3628
    %4527 = vmatpush.bf16.msra.mxu0 %v3624
    %4528 = vmatmul.bf16.gmra.mxu0 %v1808
    %v4529 = vpop.f32.mrf.mxu0
    %v4530 = vadd.f32 %v2272, %v4529
    %v4531 = vpop.f32.mrf.mxu0
    %4532 = vdwg.mxu0
    %4533 = vmatpush.bf16.msra.mxu0 %v3684
    %4534 = vmatpush.bf16.msra.mxu0 %v3680
    %4535 = vmatpush.bf16.msra.mxu0 %v3676
    %4536 = vmatpush.bf16.msra.mxu0 %v3672
    %4537 = vmatpush.bf16.msra.mxu0 %v3668
    %4538 = vmatpush.bf16.msra.mxu0 %v3664
    %4539 = vmatpush.bf16.msra.mxu0 %v3660
    %4540 = vmatpush.bf16.msra.mxu0 %v3656
    %4541 = vmatmul.bf16.gmra.mxu0 %v1809
    %v4542 = vpop.f32.mrf.mxu0
    %v4543 = vadd.f32 %v4530, %v4542
    %v4544 = vpop.f32.mrf.mxu0
    %4545 = vdwg.mxu0
    %4546 = vmatpush.bf16.msra.mxu0 %v3716
    %4547 = vmatpush.bf16.msra.mxu0 %v3712
    %4548 = vmatpush.bf16.msra.mxu0 %v3708
    %4549 = vmatpush.bf16.msra.mxu0 %v3704
    %4550 = vmatpush.bf16.msra.mxu0 %v3700
    %4551 = vmatpush.bf16.msra.mxu0 %v3696
    %4552 = vmatpush.bf16.msra.mxu0 %v3692
    %4553 = vmatpush.bf16.msra.mxu0 %v3688
    %4554 = vmatmul.bf16.gmra.mxu0 %v1810
    %v4555 = vpop.f32.mrf.mxu0
    %v4556 = vadd.f32 %v4543, %v4555
    %v4557 = vpop.f32.mrf.mxu0
    %4558 = vdwg.mxu0
    %4559 = vmatpush.bf16.msra.mxu0 %v3748
    %4560 = vmatpush.bf16.msra.mxu0 %v3744
    %4561 = vmatpush.bf16.msra.mxu0 %v3740
    %4562 = vmatpush.bf16.msra.mxu0 %v3736
    %4563 = vmatpush.bf16.msra.mxu0 %v3732
    %4564 = vmatpush.bf16.msra.mxu0 %v3728
    %4565 = vmatpush.bf16.msra.mxu0 %v3724
    %4566 = vmatpush.bf16.msra.mxu0 %v3720
    %4567 = vmatmul.bf16.gmra.mxu0 %v1811
    %v4568 = vpop.f32.mrf.mxu0
    %v4569 = vadd.f32 %v4556, %v4568
    %v4570 = vpop.f32.mrf.mxu0
    %4571 = vdwg.mxu0
    %4572 = vmatpush.bf16.msra.mxu0 %v3780
    %4573 = vmatpush.bf16.msra.mxu0 %v3776
    %4574 = vmatpush.bf16.msra.mxu0 %v3772
    %4575 = vmatpush.bf16.msra.mxu0 %v3768
    %4576 = vmatpush.bf16.msra.mxu0 %v3764
    %4577 = vmatpush.bf16.msra.mxu0 %v3760
    %4578 = vmatpush.bf16.msra.mxu0 %v3756
    %4579 = vmatpush.bf16.msra.mxu0 %v3752
    %4580 = vmatmul.bf16.gmra.mxu0 %v1812
    %v4581 = vpop.f32.mrf.mxu0
    %v4582 = vadd.f32 %v4569, %v4581
    %v4583 = vpop.f32.mrf.mxu0
    %4584 = vdwg.mxu0
    %4585 = vmatpush.bf16.msra.mxu0 %v3812
    %4586 = vmatpush.bf16.msra.mxu0 %v3808
    %4587 = vmatpush.bf16.msra.mxu0 %v3804
    %4588 = vmatpush.bf16.msra.mxu0 %v3800
    %4589 = vmatpush.bf16.msra.mxu0 %v3796
    %4590 = vmatpush.bf16.msra.mxu0 %v3792
    %4591 = vmatpush.bf16.msra.mxu0 %v3788
    %4592 = vmatpush.bf16.msra.mxu0 %v3784
    %4593 = vmatmul.bf16.gmra.mxu0 %v1813
    %v4594 = vpop.f32.mrf.mxu0
    %v4595 = vadd.f32 %v4582, %v4594
    %v4596 = vpop.f32.mrf.mxu0
    %4597 = vdwg.mxu0
    %4598 = vmatpush.bf16.msra.mxu0 %v3844
    %4599 = vmatpush.bf16.msra.mxu0 %v3840
    %4600 = vmatpush.bf16.msra.mxu0 %v3836
    %4601 = vmatpush.bf16.msra.mxu0 %v3832
    %4602 = vmatpush.bf16.msra.mxu0 %v3828
    %4603 = vmatpush.bf16.msra.mxu0 %v3824
    %4604 = vmatpush.bf16.msra.mxu0 %v3820
    %4605 = vmatpush.bf16.msra.mxu0 %v3816
    %4606 = vmatmul.bf16.gmra.mxu0 %v1814
    %v4607 = vpop.f32.mrf.mxu0
    %v4608 = vadd.f32 %v4595, %v4607
    %v4609 = vpop.f32.mrf.mxu0
    %4610 = vdwg.mxu0
    %4611 = vmatpush.bf16.msra.mxu0 %v3876
    %4612 = vmatpush.bf16.msra.mxu0 %v3872
    %4613 = vmatpush.bf16.msra.mxu0 %v3868
    %4614 = vmatpush.bf16.msra.mxu0 %v3864
    %4615 = vmatpush.bf16.msra.mxu0 %v3860
    %4616 = vmatpush.bf16.msra.mxu0 %v3856
    %4617 = vmatpush.bf16.msra.mxu0 %v3852
    %4618 = vmatpush.bf16.msra.mxu0 %v3848
    %4619 = vmatmul.bf16.gmra.mxu0 %v1815
    %v4620 = vpop.f32.mrf.mxu0
    %v4621 = vadd.f32 %v4608, %v4620
    %v4622 = vpop.f32.mrf.mxu0
    %4623 = vdwg.mxu0
    %4624 = vmatpush.bf16.msra.mxu0 %v3908
    %4625 = vmatpush.bf16.msra.mxu0 %v3904
    %4626 = vmatpush.bf16.msra.mxu0 %v3900
    %4627 = vmatpush.bf16.msra.mxu0 %v3896
    %4628 = vmatpush.bf16.msra.mxu0 %v3892
    %4629 = vmatpush.bf16.msra.mxu0 %v3888
    %4630 = vmatpush.bf16.msra.mxu0 %v3884
    %4631 = vmatpush.bf16.msra.mxu0 %v3880
    %4632 = vmatmul.bf16.gmra.mxu0 %v1816
    %v4633 = vpop.f32.mrf.mxu0
    %v4634 = vadd.f32 %v4621, %v4633
    %v4635 = vpop.f32.mrf.mxu0
    %4636 = vdwg.mxu0
    %4637 = vmatpush.bf16.msra.mxu0 %v3940
    %4638 = vmatpush.bf16.msra.mxu0 %v3936
    %4639 = vmatpush.bf16.msra.mxu0 %v3932
    %4640 = vmatpush.bf16.msra.mxu0 %v3928
    %4641 = vmatpush.bf16.msra.mxu0 %v3924
    %4642 = vmatpush.bf16.msra.mxu0 %v3920
    %4643 = vmatpush.bf16.msra.mxu0 %v3916
    %4644 = vmatpush.bf16.msra.mxu0 %v3912
    %4645 = vmatmul.bf16.gmra.mxu0 %v1817
    %v4646 = vpop.f32.mrf.mxu0
    %v4647 = vadd.f32 %v4634, %v4646
    %v4648 = vpop.f32.mrf.mxu0
    %4649 = vdwg.mxu0
    %4650 = vmatpush.bf16.msra.mxu0 %v3972
    %4651 = vmatpush.bf16.msra.mxu0 %v3968
    %4652 = vmatpush.bf16.msra.mxu0 %v3964
    %4653 = vmatpush.bf16.msra.mxu0 %v3960
    %4654 = vmatpush.bf16.msra.mxu0 %v3956
    %4655 = vmatpush.bf16.msra.mxu0 %v3952
    %4656 = vmatpush.bf16.msra.mxu0 %v3948
    %4657 = vmatpush.bf16.msra.mxu0 %v3944
    %4658 = vmatmul.bf16.gmra.mxu0 %v1818
    %v4659 = vpop.f32.mrf.mxu0
    %v4660 = vadd.f32 %v4647, %v4659
    %v4661 = vpop.f32.mrf.mxu0
    %4662 = vdwg.mxu0
    %4663 = vmatpush.bf16.msra.mxu0 %v4004
    %4664 = vmatpush.bf16.msra.mxu0 %v4000
    %4665 = vmatpush.bf16.msra.mxu0 %v3996
    %4666 = vmatpush.bf16.msra.mxu0 %v3992
    %4667 = vmatpush.bf16.msra.mxu0 %v3988
    %4668 = vmatpush.bf16.msra.mxu0 %v3984
    %4669 = vmatpush.bf16.msra.mxu0 %v3980
    %4670 = vmatpush.bf16.msra.mxu0 %v3976
    %4671 = vmatmul.bf16.gmra.mxu0 %v1819
    %v4672 = vpop.f32.mrf.mxu0
    %v4673 = vadd.f32 %v4660, %v4672
    %v4674 = vpop.f32.mrf.mxu0
    %4675 = vdwg.mxu0
    %4676 = vmatpush.bf16.msra.mxu0 %v4036
    %4677 = vmatpush.bf16.msra.mxu0 %v4032
    %4678 = vmatpush.bf16.msra.mxu0 %v4028
    %4679 = vmatpush.bf16.msra.mxu0 %v4024
    %4680 = vmatpush.bf16.msra.mxu0 %v4020
    %4681 = vmatpush.bf16.msra.mxu0 %v4016
    %4682 = vmatpush.bf16.msra.mxu0 %v4012
    %4683 = vmatpush.bf16.msra.mxu0 %v4008
    %4684 = vmatmul.bf16.gmra.mxu0 %v1820
    %v4685 = vpop.f32.mrf.mxu0
    %v4686 = vadd.f32 %v4673, %v4685
    %v4687 = vpop.f32.mrf.mxu0
    %4688 = vdwg.mxu0
    %4689 = vmatpush.bf16.msra.mxu0 %v4068
    %4690 = vmatpush.bf16.msra.mxu0 %v4064
    %4691 = vmatpush.bf16.msra.mxu0 %v4060
    %4692 = vmatpush.bf16.msra.mxu0 %v4056
    %4693 = vmatpush.bf16.msra.mxu0 %v4052
    %4694 = vmatpush.bf16.msra.mxu0 %v4048
    %4695 = vmatpush.bf16.msra.mxu0 %v4044
    %4696 = vmatpush.bf16.msra.mxu0 %v4040
    %4697 = vmatmul.bf16.gmra.mxu0 %v1821
    %v4698 = vpop.f32.mrf.mxu0
    %v4699 = vadd.f32 %v4686, %v4698
    %v4700 = vpop.f32.mrf.mxu0
    %4701 = vdwg.mxu0
    %4702 = vmatpush.bf16.msra.mxu0 %v3653
    %4703 = vmatpush.bf16.msra.mxu0 %v3649
    %4704 = vmatpush.bf16.msra.mxu0 %v3645
    %4705 = vmatpush.bf16.msra.mxu0 %v3641
    %4706 = vmatpush.bf16.msra.mxu0 %v3637
    %4707 = vmatpush.bf16.msra.mxu0 %v3633
    %4708 = vmatpush.bf16.msra.mxu0 %v3629
    %4709 = vmatpush.bf16.msra.mxu0 %v3625
    %4710 = vmatmul.bf16.gmra.mxu0 %v1808
    %v4711 = vpop.f32.mrf.mxu0
    %v4712 = vadd.f32 %v2273, %v4711
    %v4713 = vpop.f32.mrf.mxu0
    %4714 = vdwg.mxu0
    %4715 = vmatpush.bf16.msra.mxu0 %v3685
    %4716 = vmatpush.bf16.msra.mxu0 %v3681
    %4717 = vmatpush.bf16.msra.mxu0 %v3677
    %4718 = vmatpush.bf16.msra.mxu0 %v3673
    %4719 = vmatpush.bf16.msra.mxu0 %v3669
    %4720 = vmatpush.bf16.msra.mxu0 %v3665
    %4721 = vmatpush.bf16.msra.mxu0 %v3661
    %4722 = vmatpush.bf16.msra.mxu0 %v3657
    %4723 = vmatmul.bf16.gmra.mxu0 %v1809
    %v4724 = vpop.f32.mrf.mxu0
    %v4725 = vadd.f32 %v4712, %v4724
    %v4726 = vpop.f32.mrf.mxu0
    %4727 = vdwg.mxu0
    %4728 = vmatpush.bf16.msra.mxu0 %v3717
    %4729 = vmatpush.bf16.msra.mxu0 %v3713
    %4730 = vmatpush.bf16.msra.mxu0 %v3709
    %4731 = vmatpush.bf16.msra.mxu0 %v3705
    %4732 = vmatpush.bf16.msra.mxu0 %v3701
    %4733 = vmatpush.bf16.msra.mxu0 %v3697
    %4734 = vmatpush.bf16.msra.mxu0 %v3693
    %4735 = vmatpush.bf16.msra.mxu0 %v3689
    %4736 = vmatmul.bf16.gmra.mxu0 %v1810
    %v4737 = vpop.f32.mrf.mxu0
    %v4738 = vadd.f32 %v4725, %v4737
    %v4739 = vpop.f32.mrf.mxu0
    %4740 = vdwg.mxu0
    %4741 = vmatpush.bf16.msra.mxu0 %v3749
    %4742 = vmatpush.bf16.msra.mxu0 %v3745
    %4743 = vmatpush.bf16.msra.mxu0 %v3741
    %4744 = vmatpush.bf16.msra.mxu0 %v3737
    %4745 = vmatpush.bf16.msra.mxu0 %v3733
    %4746 = vmatpush.bf16.msra.mxu0 %v3729
    %4747 = vmatpush.bf16.msra.mxu0 %v3725
    %4748 = vmatpush.bf16.msra.mxu0 %v3721
    %4749 = vmatmul.bf16.gmra.mxu0 %v1811
    %v4750 = vpop.f32.mrf.mxu0
    %v4751 = vadd.f32 %v4738, %v4750
    %v4752 = vpop.f32.mrf.mxu0
    %4753 = vdwg.mxu0
    %4754 = vmatpush.bf16.msra.mxu0 %v3781
    %4755 = vmatpush.bf16.msra.mxu0 %v3777
    %4756 = vmatpush.bf16.msra.mxu0 %v3773
    %4757 = vmatpush.bf16.msra.mxu0 %v3769
    %4758 = vmatpush.bf16.msra.mxu0 %v3765
    %4759 = vmatpush.bf16.msra.mxu0 %v3761
    %4760 = vmatpush.bf16.msra.mxu0 %v3757
    %4761 = vmatpush.bf16.msra.mxu0 %v3753
    %4762 = vmatmul.bf16.gmra.mxu0 %v1812
    %v4763 = vpop.f32.mrf.mxu0
    %v4764 = vadd.f32 %v4751, %v4763
    %v4765 = vpop.f32.mrf.mxu0
    %4766 = vdwg.mxu0
    %4767 = vmatpush.bf16.msra.mxu0 %v3813
    %4768 = vmatpush.bf16.msra.mxu0 %v3809
    %4769 = vmatpush.bf16.msra.mxu0 %v3805
    %4770 = vmatpush.bf16.msra.mxu0 %v3801
    %4771 = vmatpush.bf16.msra.mxu0 %v3797
    %4772 = vmatpush.bf16.msra.mxu0 %v3793
    %4773 = vmatpush.bf16.msra.mxu0 %v3789
    %4774 = vmatpush.bf16.msra.mxu0 %v3785
    %4775 = vmatmul.bf16.gmra.mxu0 %v1813
    %v4776 = vpop.f32.mrf.mxu0
    %v4777 = vadd.f32 %v4764, %v4776
    %v4778 = vpop.f32.mrf.mxu0
    %4779 = vdwg.mxu0
    %4780 = vmatpush.bf16.msra.mxu0 %v3845
    %4781 = vmatpush.bf16.msra.mxu0 %v3841
    %4782 = vmatpush.bf16.msra.mxu0 %v3837
    %4783 = vmatpush.bf16.msra.mxu0 %v3833
    %4784 = vmatpush.bf16.msra.mxu0 %v3829
    %4785 = vmatpush.bf16.msra.mxu0 %v3825
    %4786 = vmatpush.bf16.msra.mxu0 %v3821
    %4787 = vmatpush.bf16.msra.mxu0 %v3817
    %4788 = vmatmul.bf16.gmra.mxu0 %v1814
    %v4789 = vpop.f32.mrf.mxu0
    %v4790 = vadd.f32 %v4777, %v4789
    %v4791 = vpop.f32.mrf.mxu0
    %4792 = vdwg.mxu0
    %4793 = vmatpush.bf16.msra.mxu0 %v3877
    %4794 = vmatpush.bf16.msra.mxu0 %v3873
    %4795 = vmatpush.bf16.msra.mxu0 %v3869
    %4796 = vmatpush.bf16.msra.mxu0 %v3865
    %4797 = vmatpush.bf16.msra.mxu0 %v3861
    %4798 = vmatpush.bf16.msra.mxu0 %v3857
    %4799 = vmatpush.bf16.msra.mxu0 %v3853
    %4800 = vmatpush.bf16.msra.mxu0 %v3849
    %4801 = vmatmul.bf16.gmra.mxu0 %v1815
    %v4802 = vpop.f32.mrf.mxu0
    %v4803 = vadd.f32 %v4790, %v4802
    %v4804 = vpop.f32.mrf.mxu0
    %4805 = vdwg.mxu0
    %4806 = vmatpush.bf16.msra.mxu0 %v3909
    %4807 = vmatpush.bf16.msra.mxu0 %v3905
    %4808 = vmatpush.bf16.msra.mxu0 %v3901
    %4809 = vmatpush.bf16.msra.mxu0 %v3897
    %4810 = vmatpush.bf16.msra.mxu0 %v3893
    %4811 = vmatpush.bf16.msra.mxu0 %v3889
    %4812 = vmatpush.bf16.msra.mxu0 %v3885
    %4813 = vmatpush.bf16.msra.mxu0 %v3881
    %4814 = vmatmul.bf16.gmra.mxu0 %v1816
    %v4815 = vpop.f32.mrf.mxu0
    %v4816 = vadd.f32 %v4803, %v4815
    %v4817 = vpop.f32.mrf.mxu0
    %4818 = vdwg.mxu0
    %4819 = vmatpush.bf16.msra.mxu0 %v3941
    %4820 = vmatpush.bf16.msra.mxu0 %v3937
    %4821 = vmatpush.bf16.msra.mxu0 %v3933
    %4822 = vmatpush.bf16.msra.mxu0 %v3929
    %4823 = vmatpush.bf16.msra.mxu0 %v3925
    %4824 = vmatpush.bf16.msra.mxu0 %v3921
    %4825 = vmatpush.bf16.msra.mxu0 %v3917
    %4826 = vmatpush.bf16.msra.mxu0 %v3913
    %4827 = vmatmul.bf16.gmra.mxu0 %v1817
    %v4828 = vpop.f32.mrf.mxu0
    %v4829 = vadd.f32 %v4816, %v4828
    %v4830 = vpop.f32.mrf.mxu0
    %4831 = vdwg.mxu0
    %4832 = vmatpush.bf16.msra.mxu0 %v3973
    %4833 = vmatpush.bf16.msra.mxu0 %v3969
    %4834 = vmatpush.bf16.msra.mxu0 %v3965
    %4835 = vmatpush.bf16.msra.mxu0 %v3961
    %4836 = vmatpush.bf16.msra.mxu0 %v3957
    %4837 = vmatpush.bf16.msra.mxu0 %v3953
    %4838 = vmatpush.bf16.msra.mxu0 %v3949
    %4839 = vmatpush.bf16.msra.mxu0 %v3945
    %4840 = vmatmul.bf16.gmra.mxu0 %v1818
    %v4841 = vpop.f32.mrf.mxu0
    %v4842 = vadd.f32 %v4829, %v4841
    %v4843 = vpop.f32.mrf.mxu0
    %4844 = vdwg.mxu0
    %4845 = vmatpush.bf16.msra.mxu0 %v4005
    %4846 = vmatpush.bf16.msra.mxu0 %v4001
    %4847 = vmatpush.bf16.msra.mxu0 %v3997
    %4848 = vmatpush.bf16.msra.mxu0 %v3993
    %4849 = vmatpush.bf16.msra.mxu0 %v3989
    %4850 = vmatpush.bf16.msra.mxu0 %v3985
    %4851 = vmatpush.bf16.msra.mxu0 %v3981
    %4852 = vmatpush.bf16.msra.mxu0 %v3977
    %4853 = vmatmul.bf16.gmra.mxu0 %v1819
    %v4854 = vpop.f32.mrf.mxu0
    %v4855 = vadd.f32 %v4842, %v4854
    %v4856 = vpop.f32.mrf.mxu0
    %4857 = vdwg.mxu0
    %4858 = vmatpush.bf16.msra.mxu0 %v4037
    %4859 = vmatpush.bf16.msra.mxu0 %v4033
    %4860 = vmatpush.bf16.msra.mxu0 %v4029
    %4861 = vmatpush.bf16.msra.mxu0 %v4025
    %4862 = vmatpush.bf16.msra.mxu0 %v4021
    %4863 = vmatpush.bf16.msra.mxu0 %v4017
    %4864 = vmatpush.bf16.msra.mxu0 %v4013
    %4865 = vmatpush.bf16.msra.mxu0 %v4009
    %4866 = vmatmul.bf16.gmra.mxu0 %v1820
    %v4867 = vpop.f32.mrf.mxu0
    %v4868 = vadd.f32 %v4855, %v4867
    %v4869 = vpop.f32.mrf.mxu0
    %4870 = vdwg.mxu0
    %4871 = vmatpush.bf16.msra.mxu0 %v4069
    %4872 = vmatpush.bf16.msra.mxu0 %v4065
    %4873 = vmatpush.bf16.msra.mxu0 %v4061
    %4874 = vmatpush.bf16.msra.mxu0 %v4057
    %4875 = vmatpush.bf16.msra.mxu0 %v4053
    %4876 = vmatpush.bf16.msra.mxu0 %v4049
    %4877 = vmatpush.bf16.msra.mxu0 %v4045
    %4878 = vmatpush.bf16.msra.mxu0 %v4041
    %4879 = vmatmul.bf16.gmra.mxu0 %v1821
    %v4880 = vpop.f32.mrf.mxu0
    %v4881 = vadd.f32 %v4868, %v4880
    %v4882 = vpop.f32.mrf.mxu0
    %4883 = vdwg.mxu0
    %4884 = vmatpush.bf16.msra.mxu0 %v3654
    %4885 = vmatpush.bf16.msra.mxu0 %v3650
    %4886 = vmatpush.bf16.msra.mxu0 %v3646
    %4887 = vmatpush.bf16.msra.mxu0 %v3642
    %4888 = vmatpush.bf16.msra.mxu0 %v3638
    %4889 = vmatpush.bf16.msra.mxu0 %v3634
    %4890 = vmatpush.bf16.msra.mxu0 %v3630
    %4891 = vmatpush.bf16.msra.mxu0 %v3626
    %4892 = vmatmul.bf16.gmra.mxu0 %v1808
    %v4893 = vpop.f32.mrf.mxu0
    %v4894 = vadd.f32 %v2274, %v4893
    %v4895 = vpop.f32.mrf.mxu0
    %4896 = vdwg.mxu0
    %4897 = vmatpush.bf16.msra.mxu0 %v3686
    %4898 = vmatpush.bf16.msra.mxu0 %v3682
    %4899 = vmatpush.bf16.msra.mxu0 %v3678
    %4900 = vmatpush.bf16.msra.mxu0 %v3674
    %4901 = vmatpush.bf16.msra.mxu0 %v3670
    %4902 = vmatpush.bf16.msra.mxu0 %v3666
    %4903 = vmatpush.bf16.msra.mxu0 %v3662
    %4904 = vmatpush.bf16.msra.mxu0 %v3658
    %4905 = vmatmul.bf16.gmra.mxu0 %v1809
    %v4906 = vpop.f32.mrf.mxu0
    %v4907 = vadd.f32 %v4894, %v4906
    %v4908 = vpop.f32.mrf.mxu0
    %4909 = vdwg.mxu0
    %4910 = vmatpush.bf16.msra.mxu0 %v3718
    %4911 = vmatpush.bf16.msra.mxu0 %v3714
    %4912 = vmatpush.bf16.msra.mxu0 %v3710
    %4913 = vmatpush.bf16.msra.mxu0 %v3706
    %4914 = vmatpush.bf16.msra.mxu0 %v3702
    %4915 = vmatpush.bf16.msra.mxu0 %v3698
    %4916 = vmatpush.bf16.msra.mxu0 %v3694
    %4917 = vmatpush.bf16.msra.mxu0 %v3690
    %4918 = vmatmul.bf16.gmra.mxu0 %v1810
    %v4919 = vpop.f32.mrf.mxu0
    %v4920 = vadd.f32 %v4907, %v4919
    %v4921 = vpop.f32.mrf.mxu0
    %4922 = vdwg.mxu0
    %4923 = vmatpush.bf16.msra.mxu0 %v3750
    %4924 = vmatpush.bf16.msra.mxu0 %v3746
    %4925 = vmatpush.bf16.msra.mxu0 %v3742
    %4926 = vmatpush.bf16.msra.mxu0 %v3738
    %4927 = vmatpush.bf16.msra.mxu0 %v3734
    %4928 = vmatpush.bf16.msra.mxu0 %v3730
    %4929 = vmatpush.bf16.msra.mxu0 %v3726
    %4930 = vmatpush.bf16.msra.mxu0 %v3722
    %4931 = vmatmul.bf16.gmra.mxu0 %v1811
    %v4932 = vpop.f32.mrf.mxu0
    %v4933 = vadd.f32 %v4920, %v4932
    %v4934 = vpop.f32.mrf.mxu0
    %4935 = vdwg.mxu0
    %4936 = vmatpush.bf16.msra.mxu0 %v3782
    %4937 = vmatpush.bf16.msra.mxu0 %v3778
    %4938 = vmatpush.bf16.msra.mxu0 %v3774
    %4939 = vmatpush.bf16.msra.mxu0 %v3770
    %4940 = vmatpush.bf16.msra.mxu0 %v3766
    %4941 = vmatpush.bf16.msra.mxu0 %v3762
    %4942 = vmatpush.bf16.msra.mxu0 %v3758
    %4943 = vmatpush.bf16.msra.mxu0 %v3754
    %4944 = vmatmul.bf16.gmra.mxu0 %v1812
    %v4945 = vpop.f32.mrf.mxu0
    %v4946 = vadd.f32 %v4933, %v4945
    %v4947 = vpop.f32.mrf.mxu0
    %4948 = vdwg.mxu0
    %4949 = vmatpush.bf16.msra.mxu0 %v3814
    %4950 = vmatpush.bf16.msra.mxu0 %v3810
    %4951 = vmatpush.bf16.msra.mxu0 %v3806
    %4952 = vmatpush.bf16.msra.mxu0 %v3802
    %4953 = vmatpush.bf16.msra.mxu0 %v3798
    %4954 = vmatpush.bf16.msra.mxu0 %v3794
    %4955 = vmatpush.bf16.msra.mxu0 %v3790
    %4956 = vmatpush.bf16.msra.mxu0 %v3786
    %4957 = vmatmul.bf16.gmra.mxu0 %v1813
    %v4958 = vpop.f32.mrf.mxu0
    %v4959 = vadd.f32 %v4946, %v4958
    %v4960 = vpop.f32.mrf.mxu0
    %4961 = vdwg.mxu0
    %4962 = vmatpush.bf16.msra.mxu0 %v3846
    %4963 = vmatpush.bf16.msra.mxu0 %v3842
    %4964 = vmatpush.bf16.msra.mxu0 %v3838
    %4965 = vmatpush.bf16.msra.mxu0 %v3834
    %4966 = vmatpush.bf16.msra.mxu0 %v3830
    %4967 = vmatpush.bf16.msra.mxu0 %v3826
    %4968 = vmatpush.bf16.msra.mxu0 %v3822
    %4969 = vmatpush.bf16.msra.mxu0 %v3818
    %4970 = vmatmul.bf16.gmra.mxu0 %v1814
    %v4971 = vpop.f32.mrf.mxu0
    %v4972 = vadd.f32 %v4959, %v4971
    %v4973 = vpop.f32.mrf.mxu0
    %4974 = vdwg.mxu0
    %4975 = vmatpush.bf16.msra.mxu0 %v3878
    %4976 = vmatpush.bf16.msra.mxu0 %v3874
    %4977 = vmatpush.bf16.msra.mxu0 %v3870
    %4978 = vmatpush.bf16.msra.mxu0 %v3866
    %4979 = vmatpush.bf16.msra.mxu0 %v3862
    %4980 = vmatpush.bf16.msra.mxu0 %v3858
    %4981 = vmatpush.bf16.msra.mxu0 %v3854
    %4982 = vmatpush.bf16.msra.mxu0 %v3850
    %4983 = vmatmul.bf16.gmra.mxu0 %v1815
    %v4984 = vpop.f32.mrf.mxu0
    %v4985 = vadd.f32 %v4972, %v4984
    %v4986 = vpop.f32.mrf.mxu0
    %4987 = vdwg.mxu0
    %4988 = vmatpush.bf16.msra.mxu0 %v3910
    %4989 = vmatpush.bf16.msra.mxu0 %v3906
    %4990 = vmatpush.bf16.msra.mxu0 %v3902
    %4991 = vmatpush.bf16.msra.mxu0 %v3898
    %4992 = vmatpush.bf16.msra.mxu0 %v3894
    %4993 = vmatpush.bf16.msra.mxu0 %v3890
    %4994 = vmatpush.bf16.msra.mxu0 %v3886
    %4995 = vmatpush.bf16.msra.mxu0 %v3882
    %4996 = vmatmul.bf16.gmra.mxu0 %v1816
    %v4997 = vpop.f32.mrf.mxu0
    %v4998 = vadd.f32 %v4985, %v4997
    %v4999 = vpop.f32.mrf.mxu0
    %5000 = vdwg.mxu0
    %5001 = vmatpush.bf16.msra.mxu0 %v3942
    %5002 = vmatpush.bf16.msra.mxu0 %v3938
    %5003 = vmatpush.bf16.msra.mxu0 %v3934
    %5004 = vmatpush.bf16.msra.mxu0 %v3930
    %5005 = vmatpush.bf16.msra.mxu0 %v3926
    %5006 = vmatpush.bf16.msra.mxu0 %v3922
    %5007 = vmatpush.bf16.msra.mxu0 %v3918
    %5008 = vmatpush.bf16.msra.mxu0 %v3914
    %5009 = vmatmul.bf16.gmra.mxu0 %v1817
    %v5010 = vpop.f32.mrf.mxu0
    %v5011 = vadd.f32 %v4998, %v5010
    %v5012 = vpop.f32.mrf.mxu0
    %5013 = vdwg.mxu0
    %5014 = vmatpush.bf16.msra.mxu0 %v3974
    %5015 = vmatpush.bf16.msra.mxu0 %v3970
    %5016 = vmatpush.bf16.msra.mxu0 %v3966
    %5017 = vmatpush.bf16.msra.mxu0 %v3962
    %5018 = vmatpush.bf16.msra.mxu0 %v3958
    %5019 = vmatpush.bf16.msra.mxu0 %v3954
    %5020 = vmatpush.bf16.msra.mxu0 %v3950
    %5021 = vmatpush.bf16.msra.mxu0 %v3946
    %5022 = vmatmul.bf16.gmra.mxu0 %v1818
    %v5023 = vpop.f32.mrf.mxu0
    %v5024 = vadd.f32 %v5011, %v5023
    %v5025 = vpop.f32.mrf.mxu0
    %5026 = vdwg.mxu0
    %5027 = vmatpush.bf16.msra.mxu0 %v4006
    %5028 = vmatpush.bf16.msra.mxu0 %v4002
    %5029 = vmatpush.bf16.msra.mxu0 %v3998
    %5030 = vmatpush.bf16.msra.mxu0 %v3994
    %5031 = vmatpush.bf16.msra.mxu0 %v3990
    %5032 = vmatpush.bf16.msra.mxu0 %v3986
    %5033 = vmatpush.bf16.msra.mxu0 %v3982
    %5034 = vmatpush.bf16.msra.mxu0 %v3978
    %5035 = vmatmul.bf16.gmra.mxu0 %v1819
    %v5036 = vpop.f32.mrf.mxu0
    %v5037 = vadd.f32 %v5024, %v5036
    %v5038 = vpop.f32.mrf.mxu0
    %5039 = vdwg.mxu0
    %5040 = vmatpush.bf16.msra.mxu0 %v4038
    %5041 = vmatpush.bf16.msra.mxu0 %v4034
    %5042 = vmatpush.bf16.msra.mxu0 %v4030
    %5043 = vmatpush.bf16.msra.mxu0 %v4026
    %5044 = vmatpush.bf16.msra.mxu0 %v4022
    %5045 = vmatpush.bf16.msra.mxu0 %v4018
    %5046 = vmatpush.bf16.msra.mxu0 %v4014
    %5047 = vmatpush.bf16.msra.mxu0 %v4010
    %5048 = vmatmul.bf16.gmra.mxu0 %v1820
    %v5049 = vpop.f32.mrf.mxu0
    %v5050 = vadd.f32 %v5037, %v5049
    %v5051 = vpop.f32.mrf.mxu0
    %5052 = vdwg.mxu0
    %5053 = vmatpush.bf16.msra.mxu0 %v4070
    %5054 = vmatpush.bf16.msra.mxu0 %v4066
    %5055 = vmatpush.bf16.msra.mxu0 %v4062
    %5056 = vmatpush.bf16.msra.mxu0 %v4058
    %5057 = vmatpush.bf16.msra.mxu0 %v4054
    %5058 = vmatpush.bf16.msra.mxu0 %v4050
    %5059 = vmatpush.bf16.msra.mxu0 %v4046
    %5060 = vmatpush.bf16.msra.mxu0 %v4042
    %5061 = vmatmul.bf16.gmra.mxu0 %v1821
    %v5062 = vpop.f32.mrf.mxu0
    %v5063 = vadd.f32 %v5050, %v5062
    %v5064 = vpop.f32.mrf.mxu0
    %5065 = vdwg.mxu0
    %5066 = vmatpush.bf16.msra.mxu0 %v3655
    %5067 = vmatpush.bf16.msra.mxu0 %v3651
    %5068 = vmatpush.bf16.msra.mxu0 %v3647
    %5069 = vmatpush.bf16.msra.mxu0 %v3643
    %5070 = vmatpush.bf16.msra.mxu0 %v3639
    %5071 = vmatpush.bf16.msra.mxu0 %v3635
    %5072 = vmatpush.bf16.msra.mxu0 %v3631
    %5073 = vmatpush.bf16.msra.mxu0 %v3627
    %5074 = vmatmul.bf16.gmra.mxu0 %v1808
    %v5075 = vpop.f32.mrf.mxu0
    %v5076 = vadd.f32 %v2275, %v5075
    %v5077 = vpop.f32.mrf.mxu0
    %5078 = vdwg.mxu0
    %5079 = vmatpush.bf16.msra.mxu0 %v3687
    %5080 = vmatpush.bf16.msra.mxu0 %v3683
    %5081 = vmatpush.bf16.msra.mxu0 %v3679
    %5082 = vmatpush.bf16.msra.mxu0 %v3675
    %5083 = vmatpush.bf16.msra.mxu0 %v3671
    %5084 = vmatpush.bf16.msra.mxu0 %v3667
    %5085 = vmatpush.bf16.msra.mxu0 %v3663
    %5086 = vmatpush.bf16.msra.mxu0 %v3659
    %5087 = vmatmul.bf16.gmra.mxu0 %v1809
    %v5088 = vpop.f32.mrf.mxu0
    %v5089 = vadd.f32 %v5076, %v5088
    %v5090 = vpop.f32.mrf.mxu0
    %5091 = vdwg.mxu0
    %5092 = vmatpush.bf16.msra.mxu0 %v3719
    %5093 = vmatpush.bf16.msra.mxu0 %v3715
    %5094 = vmatpush.bf16.msra.mxu0 %v3711
    %5095 = vmatpush.bf16.msra.mxu0 %v3707
    %5096 = vmatpush.bf16.msra.mxu0 %v3703
    %5097 = vmatpush.bf16.msra.mxu0 %v3699
    %5098 = vmatpush.bf16.msra.mxu0 %v3695
    %5099 = vmatpush.bf16.msra.mxu0 %v3691
    %5100 = vmatmul.bf16.gmra.mxu0 %v1810
    %v5101 = vpop.f32.mrf.mxu0
    %v5102 = vadd.f32 %v5089, %v5101
    %v5103 = vpop.f32.mrf.mxu0
    %5104 = vdwg.mxu0
    %5105 = vmatpush.bf16.msra.mxu0 %v3751
    %5106 = vmatpush.bf16.msra.mxu0 %v3747
    %5107 = vmatpush.bf16.msra.mxu0 %v3743
    %5108 = vmatpush.bf16.msra.mxu0 %v3739
    %5109 = vmatpush.bf16.msra.mxu0 %v3735
    %5110 = vmatpush.bf16.msra.mxu0 %v3731
    %5111 = vmatpush.bf16.msra.mxu0 %v3727
    %5112 = vmatpush.bf16.msra.mxu0 %v3723
    %5113 = vmatmul.bf16.gmra.mxu0 %v1811
    %v5114 = vpop.f32.mrf.mxu0
    %v5115 = vadd.f32 %v5102, %v5114
    %v5116 = vpop.f32.mrf.mxu0
    %5117 = vdwg.mxu0
    %5118 = vmatpush.bf16.msra.mxu0 %v3783
    %5119 = vmatpush.bf16.msra.mxu0 %v3779
    %5120 = vmatpush.bf16.msra.mxu0 %v3775
    %5121 = vmatpush.bf16.msra.mxu0 %v3771
    %5122 = vmatpush.bf16.msra.mxu0 %v3767
    %5123 = vmatpush.bf16.msra.mxu0 %v3763
    %5124 = vmatpush.bf16.msra.mxu0 %v3759
    %5125 = vmatpush.bf16.msra.mxu0 %v3755
    %5126 = vmatmul.bf16.gmra.mxu0 %v1812
    %v5127 = vpop.f32.mrf.mxu0
    %v5128 = vadd.f32 %v5115, %v5127
    %v5129 = vpop.f32.mrf.mxu0
    %5130 = vdwg.mxu0
    %5131 = vmatpush.bf16.msra.mxu0 %v3815
    %5132 = vmatpush.bf16.msra.mxu0 %v3811
    %5133 = vmatpush.bf16.msra.mxu0 %v3807
    %5134 = vmatpush.bf16.msra.mxu0 %v3803
    %5135 = vmatpush.bf16.msra.mxu0 %v3799
    %5136 = vmatpush.bf16.msra.mxu0 %v3795
    %5137 = vmatpush.bf16.msra.mxu0 %v3791
    %5138 = vmatpush.bf16.msra.mxu0 %v3787
    %5139 = vmatmul.bf16.gmra.mxu0 %v1813
    %v5140 = vpop.f32.mrf.mxu0
    %v5141 = vadd.f32 %v5128, %v5140
    %v5142 = vpop.f32.mrf.mxu0
    %5143 = vdwg.mxu0
    %5144 = vmatpush.bf16.msra.mxu0 %v3847
    %5145 = vmatpush.bf16.msra.mxu0 %v3843
    %5146 = vmatpush.bf16.msra.mxu0 %v3839
    %5147 = vmatpush.bf16.msra.mxu0 %v3835
    %5148 = vmatpush.bf16.msra.mxu0 %v3831
    %5149 = vmatpush.bf16.msra.mxu0 %v3827
    %5150 = vmatpush.bf16.msra.mxu0 %v3823
    %5151 = vmatpush.bf16.msra.mxu0 %v3819
    %5152 = vmatmul.bf16.gmra.mxu0 %v1814
    %v5153 = vpop.f32.mrf.mxu0
    %v5154 = vadd.f32 %v5141, %v5153
    %v5155 = vpop.f32.mrf.mxu0
    %5156 = vdwg.mxu0
    %5157 = vmatpush.bf16.msra.mxu0 %v3879
    %5158 = vmatpush.bf16.msra.mxu0 %v3875
    %5159 = vmatpush.bf16.msra.mxu0 %v3871
    %5160 = vmatpush.bf16.msra.mxu0 %v3867
    %5161 = vmatpush.bf16.msra.mxu0 %v3863
    %5162 = vmatpush.bf16.msra.mxu0 %v3859
    %5163 = vmatpush.bf16.msra.mxu0 %v3855
    %5164 = vmatpush.bf16.msra.mxu0 %v3851
    %5165 = vmatmul.bf16.gmra.mxu0 %v1815
    %v5166 = vpop.f32.mrf.mxu0
    %v5167 = vadd.f32 %v5154, %v5166
    %v5168 = vpop.f32.mrf.mxu0
    %5169 = vdwg.mxu0
    %5170 = vmatpush.bf16.msra.mxu0 %v3911
    %5171 = vmatpush.bf16.msra.mxu0 %v3907
    %5172 = vmatpush.bf16.msra.mxu0 %v3903
    %5173 = vmatpush.bf16.msra.mxu0 %v3899
    %5174 = vmatpush.bf16.msra.mxu0 %v3895
    %5175 = vmatpush.bf16.msra.mxu0 %v3891
    %5176 = vmatpush.bf16.msra.mxu0 %v3887
    %5177 = vmatpush.bf16.msra.mxu0 %v3883
    %5178 = vmatmul.bf16.gmra.mxu0 %v1816
    %v5179 = vpop.f32.mrf.mxu0
    %v5180 = vadd.f32 %v5167, %v5179
    %v5181 = vpop.f32.mrf.mxu0
    %5182 = vdwg.mxu0
    %5183 = vmatpush.bf16.msra.mxu0 %v3943
    %5184 = vmatpush.bf16.msra.mxu0 %v3939
    %5185 = vmatpush.bf16.msra.mxu0 %v3935
    %5186 = vmatpush.bf16.msra.mxu0 %v3931
    %5187 = vmatpush.bf16.msra.mxu0 %v3927
    %5188 = vmatpush.bf16.msra.mxu0 %v3923
    %5189 = vmatpush.bf16.msra.mxu0 %v3919
    %5190 = vmatpush.bf16.msra.mxu0 %v3915
    %5191 = vmatmul.bf16.gmra.mxu0 %v1817
    %v5192 = vpop.f32.mrf.mxu0
    %v5193 = vadd.f32 %v5180, %v5192
    %v5194 = vpop.f32.mrf.mxu0
    %5195 = vdwg.mxu0
    %5196 = vmatpush.bf16.msra.mxu0 %v3975
    %5197 = vmatpush.bf16.msra.mxu0 %v3971
    %5198 = vmatpush.bf16.msra.mxu0 %v3967
    %5199 = vmatpush.bf16.msra.mxu0 %v3963
    %5200 = vmatpush.bf16.msra.mxu0 %v3959
    %5201 = vmatpush.bf16.msra.mxu0 %v3955
    %5202 = vmatpush.bf16.msra.mxu0 %v3951
    %5203 = vmatpush.bf16.msra.mxu0 %v3947
    %5204 = vmatmul.bf16.gmra.mxu0 %v1818
    %v5205 = vpop.f32.mrf.mxu0
    %v5206 = vadd.f32 %v5193, %v5205
    %v5207 = vpop.f32.mrf.mxu0
    %5208 = vdwg.mxu0
    %5209 = vmatpush.bf16.msra.mxu0 %v4007
    %5210 = vmatpush.bf16.msra.mxu0 %v4003
    %5211 = vmatpush.bf16.msra.mxu0 %v3999
    %5212 = vmatpush.bf16.msra.mxu0 %v3995
    %5213 = vmatpush.bf16.msra.mxu0 %v3991
    %5214 = vmatpush.bf16.msra.mxu0 %v3987
    %5215 = vmatpush.bf16.msra.mxu0 %v3983
    %5216 = vmatpush.bf16.msra.mxu0 %v3979
    %5217 = vmatmul.bf16.gmra.mxu0 %v1819
    %v5218 = vpop.f32.mrf.mxu0
    %v5219 = vadd.f32 %v5206, %v5218
    %v5220 = vpop.f32.mrf.mxu0
    %5221 = vdwg.mxu0
    %5222 = vmatpush.bf16.msra.mxu0 %v4039
    %5223 = vmatpush.bf16.msra.mxu0 %v4035
    %5224 = vmatpush.bf16.msra.mxu0 %v4031
    %5225 = vmatpush.bf16.msra.mxu0 %v4027
    %5226 = vmatpush.bf16.msra.mxu0 %v4023
    %5227 = vmatpush.bf16.msra.mxu0 %v4019
    %5228 = vmatpush.bf16.msra.mxu0 %v4015
    %5229 = vmatpush.bf16.msra.mxu0 %v4011
    %5230 = vmatmul.bf16.gmra.mxu0 %v1820
    %v5231 = vpop.f32.mrf.mxu0
    %v5232 = vadd.f32 %v5219, %v5231
    %v5233 = vpop.f32.mrf.mxu0
    %5234 = vdwg.mxu0
    %5235 = vmatpush.bf16.msra.mxu0 %v4071
    %5236 = vmatpush.bf16.msra.mxu0 %v4067
    %5237 = vmatpush.bf16.msra.mxu0 %v4063
    %5238 = vmatpush.bf16.msra.mxu0 %v4059
    %5239 = vmatpush.bf16.msra.mxu0 %v4055
    %5240 = vmatpush.bf16.msra.mxu0 %v4051
    %5241 = vmatpush.bf16.msra.mxu0 %v4047
    %5242 = vmatpush.bf16.msra.mxu0 %v4043
    %5243 = vmatmul.bf16.gmra.mxu0 %v1821
    %v5244 = vpop.f32.mrf.mxu0
    %v5245 = vadd.f32 %v5232, %v5244
    %v5246 = vpop.f32.mrf.mxu0
    %5247 = vdwg.mxu0
    %v5248 = vmax.f32 %v4699, 0.0
    %v5249 = vmax.f32 %v4881, 0.0
    %v5250 = vmax.f32 %v5063, 0.0
    %v5251 = vmax.f32 %v5245, 0.0
    %v5256 = vrot.slane %v5249, 4
    %v5257 = vrot.slane %v5251, 4
    %vm5258 = vcmask 1043456
    %v5259 = vsel %vm5258, %v5248, %v5256
    %v5260 = vsel %vm5258, %v5250, %v5257
    %5263 = vst [vmem:[#allocation17] sm:$0xff] %v5259
    %5264 = vst [vmem:[#allocation17 + $0x8] sm:$0xff] %v5260
    %v5265 = vrot.slane %v5248, 2
    %v5266 = vrot.slane %v5249, 2
    %v5267 = vrot.slane %v5250, 2
    %v5268 = vrot.slane %v5251, 2
    %v5273 = vsub.f32 %v5248, %v5265
    %v5274 = vsub.f32 %v5249, %v5266
    %v5275 = vsub.f32 %v5250, %v5267
    %v5276 = vsub.f32 %v5251, %v5268
    %v5277 = vand.u32 2147483647, %v5273
    %v5278 = vand.u32 2147483647, %v5274
    %v5279 = vand.u32 2147483647, %v5275
    %v5280 = vand.u32 2147483647, %v5276
    %v5281 = vld [vmem:[%s8] sm:$0xff]
    %v5282 = vld [vmem:[%s8 + $0x8] sm:$0xff]
    %v5283 = vld [vmem:[%s8 + $0x10] sm:$0xff]
    %v5284 = vld [vmem:[%s8 + $0x18] sm:$0xff]
    %v5285 = vld [vmem:[%s8 + $0x20] sm:$0xff]
    %v5286 = vld [vmem:[%s8 + $0x28] sm:$0xff]
    %v5287 = vld [vmem:[%s8 + $0x30] sm:$0xff]
    %v5288 = vld [vmem:[%s8 + $0x38] sm:$0xff]
    %v5289 = vld [vmem:[%s8 + $0x40] sm:$0xff]
    %v5290 = vld [vmem:[%s8 + $0x48] sm:$0xff]
    %v5291 = vld [vmem:[%s8 + $0x50] sm:$0xff]
    %v5292 = vld [vmem:[%s8 + $0x58] sm:$0xff]
    %v5293 = vld [vmem:[%s8 + $0x60] sm:$0xff]
    %v5294 = vld [vmem:[%s8 + $0x68] sm:$0xff]
    %v5295 = vld [vmem:[%s8 + $0x70] sm:$0xff]
    %v5296 = vld [vmem:[%s8 + $0x78] sm:$0xff]
    %v5297 = vld [vmem:[%s8 + $0x80] sm:$0xff]
    %v5298 = vld [vmem:[%s8 + $0x88] sm:$0xff]
    %v5299 = vld [vmem:[%s8 + $0x90] sm:$0xff]
    %v5300 = vld [vmem:[%s8 + $0x98] sm:$0xff]
    %v5301 = vld [vmem:[%s8 + $0xa0] sm:$0xff]
    %v5302 = vld [vmem:[%s8 + $0xa8] sm:$0xff]
    %v5303 = vld [vmem:[%s8 + $0xb0] sm:$0xff]
    %v5304 = vld [vmem:[%s8 + $0xb8] sm:$0xff]
    %v5305 = vld [vmem:[%s8 + $0xc0] sm:$0xff]
    %v5306 = vld [vmem:[%s8 + $0xc8] sm:$0xff]
    %v5307 = vld [vmem:[%s8 + $0xd0] sm:$0xff]
    %v5308 = vld [vmem:[%s8 + $0xd8] sm:$0xff]
    %v5309 = vld [vmem:[%s8 + $0xe0] sm:$0xff]
    %v5310 = vld [vmem:[%s8 + $0xe8] sm:$0xff]
    %v5311 = vld [vmem:[%s8 + $0xf0] sm:$0xff]
    %v5312 = vld [vmem:[%s8 + $0xf8] sm:$0xff]
    %v5313 = vld [vmem:[%s8 + $0x100] sm:$0xff]
    %v5314 = vld [vmem:[%s8 + $0x108] sm:$0xff]
    %v5315 = vld [vmem:[%s8 + $0x110] sm:$0xff]
    %v5316 = vld [vmem:[%s8 + $0x118] sm:$0xff]
    %v5317 = vld [vmem:[%s8 + $0x120] sm:$0xff]
    %v5318 = vld [vmem:[%s8 + $0x128] sm:$0xff]
    %v5319 = vld [vmem:[%s8 + $0x130] sm:$0xff]
    %v5320 = vld [vmem:[%s8 + $0x138] sm:$0xff]
    %v5321 = vld [vmem:[%s8 + $0x140] sm:$0xff]
    %v5322 = vld [vmem:[%s8 + $0x148] sm:$0xff]
    %v5323 = vld [vmem:[%s8 + $0x150] sm:$0xff]
    %v5324 = vld [vmem:[%s8 + $0x158] sm:$0xff]
    %v5325 = vld [vmem:[%s8 + $0x160] sm:$0xff]
    %v5326 = vld [vmem:[%s8 + $0x168] sm:$0xff]
    %v5327 = vld [vmem:[%s8 + $0x170] sm:$0xff]
    %v5328 = vld [vmem:[%s8 + $0x178] sm:$0xff]
    %v5329 = vld [vmem:[%s8 + $0x180] sm:$0xff]
    %v5330 = vld [vmem:[%s8 + $0x188] sm:$0xff]
    %v5331 = vld [vmem:[%s8 + $0x190] sm:$0xff]
    %v5332 = vld [vmem:[%s8 + $0x198] sm:$0xff]
    %v5333 = vld [vmem:[%s8 + $0x1a0] sm:$0xff]
    %v5334 = vld [vmem:[%s8 + $0x1a8] sm:$0xff]
    %v5335 = vld [vmem:[%s8 + $0x1b0] sm:$0xff]
    %v5336 = vld [vmem:[%s8 + $0x1b8] sm:$0xff]
    %v5337 = vld [vmem:[%s8 + $0x1c0] sm:$0xff]
    %v5338 = vld [vmem:[%s8 + $0x1c8] sm:$0xff]
    %v5339 = vld [vmem:[%s8 + $0x1d0] sm:$0xff]
    %v5340 = vld [vmem:[%s8 + $0x1d8] sm:$0xff]
    %v5341 = vld [vmem:[%s8 + $0x1e0] sm:$0xff]
    %v5342 = vld [vmem:[%s8 + $0x1e8] sm:$0xff]
    %v5343 = vld [vmem:[%s8 + $0x1f0] sm:$0xff]
    %v5344 = vld [vmem:[%s8 + $0x1f8] sm:$0xff]
    %v5345 = vld [vmem:[#allocation5] sm:$0x1]
    %v5347 = vperm.slane %v5345, 0
    %5349 = vmatpush.msra.mxu0 %v5296
    %5350 = vmatpush.msra.mxu0 %v5295
    %5351 = vmatpush.msra.mxu0 %v5294
    %5352 = vmatpush.msra.mxu0 %v5293
    %5353 = vmatpush.msra.mxu0 %v5292
    %5354 = vmatpush.msra.mxu0 %v5291
    %5355 = vmatpush.msra.mxu0 %v5290
    %5356 = vmatpush.msra.mxu0 %v5289
    %5357 = vmatpush.msra.mxu0 %v5288
    %5358 = vmatpush.msra.mxu0 %v5287
    %5359 = vmatpush.msra.mxu0 %v5286
    %5360 = vmatpush.msra.mxu0 %v5285
    %5361 = vmatpush.msra.mxu0 %v5284
    %5362 = vmatpush.msra.mxu0 %v5283
    %5363 = vmatpush.msra.mxu0 %v5282
    %5364 = vmatpush.msra.mxu0 %v5281
    %5365 = vmatmul.f32.gmra.mxu0 %v5277
    %v5366 = vpop.f32.mrf.mxu0
    %v5367 = vadd.f32 %v5347, %v5366
    %5368 = vdwg.mxu0
    %5369 = vmatpush.msra.mxu0 %v5312
    %5370 = vmatpush.msra.mxu0 %v5311
    %5371 = vmatpush.msra.mxu0 %v5310
    %5372 = vmatpush.msra.mxu0 %v5309
    %5373 = vmatpush.msra.mxu0 %v5308
    %5374 = vmatpush.msra.mxu0 %v5307
    %5375 = vmatpush.msra.mxu0 %v5306
    %5376 = vmatpush.msra.mxu0 %v5305
    %5377 = vmatpush.msra.mxu0 %v5304
    %5378 = vmatpush.msra.mxu0 %v5303
    %5379 = vmatpush.msra.mxu0 %v5302
    %5380 = vmatpush.msra.mxu0 %v5301
    %5381 = vmatpush.msra.mxu0 %v5300
    %5382 = vmatpush.msra.mxu0 %v5299
    %5383 = vmatpush.msra.mxu0 %v5298
    %5384 = vmatpush.msra.mxu0 %v5297
    %5385 = vmatmul.f32.gmra.mxu0 %v5278
    %v5386 = vpop.f32.mrf.mxu0
    %v5387 = vadd.f32 %v5367, %v5386
    %5388 = vdwg.mxu0
    %5389 = vmatpush.msra.mxu0 %v5328
    %5390 = vmatpush.msra.mxu0 %v5327
    %5391 = vmatpush.msra.mxu0 %v5326
    %5392 = vmatpush.msra.mxu0 %v5325
    %5393 = vmatpush.msra.mxu0 %v5324
    %5394 = vmatpush.msra.mxu0 %v5323
    %5395 = vmatpush.msra.mxu0 %v5322
    %5396 = vmatpush.msra.mxu0 %v5321
    %5397 = vmatpush.msra.mxu0 %v5320
    %5398 = vmatpush.msra.mxu0 %v5319
    %5399 = vmatpush.msra.mxu0 %v5318
    %5400 = vmatpush.msra.mxu0 %v5317
    %5401 = vmatpush.msra.mxu0 %v5316
    %5402 = vmatpush.msra.mxu0 %v5315
    %5403 = vmatpush.msra.mxu0 %v5314
    %5404 = vmatpush.msra.mxu0 %v5313
    %5405 = vmatmul.f32.gmra.mxu0 %v5279
    %v5406 = vpop.f32.mrf.mxu0
    %v5407 = vadd.f32 %v5387, %v5406
    %5408 = vdwg.mxu0
    %5409 = vmatpush.msra.mxu0 %v5344
    %5410 = vmatpush.msra.mxu0 %v5343
    %5411 = vmatpush.msra.mxu0 %v5342
    %5412 = vmatpush.msra.mxu0 %v5341
    %5413 = vmatpush.msra.mxu0 %v5340
    %5414 = vmatpush.msra.mxu0 %v5339
    %5415 = vmatpush.msra.mxu0 %v5338
    %5416 = vmatpush.msra.mxu0 %v5337
    %5417 = vmatpush.msra.mxu0 %v5336
    %5418 = vmatpush.msra.mxu0 %v5335
    %5419 = vmatpush.msra.mxu0 %v5334
    %5420 = vmatpush.msra.mxu0 %v5333
    %5421 = vmatpush.msra.mxu0 %v5332
    %5422 = vmatpush.msra.mxu0 %v5331
    %5423 = vmatpush.msra.mxu0 %v5330
    %5424 = vmatpush.msra.mxu0 %v5329
    %5425 = vmatmul.f32.gmra.mxu0 %v5280
    %v5426 = vpop.f32.mrf.mxu0
    %v5427 = vadd.f32 %v5407, %v5426
    %5428 = vdwg.mxu0
    %v5429 = vxor.u32 %v5427, 2147483648
    %v5430 = vmul.f32 %v5429, 1.442695
    %v5431 = vpow.pop %v5430
    %v5432 = vadd.f32 %v5431, 1.0
    %v5433 = vrcp.pop %v5432
    %v5434 = vmul.f32 %v5432, %v5433
    %v5435 = vsub.f32 1.0, %v5434
    %v5436 = vmul.f32 %v5433, %v5435
    %v5437 = vadd.f32 %v5433, %v5436
    %vm5438 = vweird.f32 %v5432
    %vm5439 = vweird.f32 %v5433
    %vm5440 = vmor %vm5438, %vm5439
    %v5441 = vsel %vm5440, %v5433, %v5437
    %v5442 = vand.u32 2147483647, %v5432
    %vm5443 = vcmp.eq.f32.partialorder %v5442, 8.507059e+37
    %v5444 = vand.u32 %v5432, 2147483648
    %v5445 = vor.u32 1.1754944e-38, %v5444
    %v5446 = vsel %vm5443, %v5445, %v5441
    %v5447 = vmul.f32 1.0, %v5446
    %vm5448 = vcmask 1024
    %5449 = vst.msk [vmem:[%s10] sm:$0x3] %vm5448, %v5447
    // Predicated region
    $region66: #{tpu_custom_call.1} parent=1 // pred_check
      _
    $region67: #{tpu_custom_call.1} parent=1 // pred_check_branch
      %5451 = sbr.rel (0) target = $region69
    $region68: #{tpu_custom_call.1} parent=1 // pred_region
      _
    $region69: #{tpu_custom_call.1} parent=1 // pred_fallthru
      _
    // Predicated region
    $region70: #{tpu_custom_call.1} parent=1 // pred_check
      _
    $region71: #{tpu_custom_call.1} parent=1 // pred_check_branch
      %5453 = sbr.rel (0) target = $region73
    $region72: #{tpu_custom_call.1} parent=1 // pred_region
      %5455 = vsyncadd [#allocation8], 0
      %s5457 = sshll.u32 [#allocation17], 4
      %s5458 = int_to_ptr.vmem [resolvable:$true] %s5457
      %s5459 = sshll.u32 %s11, 4
      %s5460 = int_to_ptr.hbm [resolvable:$true] %s5459
      %5462 = dma.vmem_to_hbm [thread:$0]  %s5458, 256, %s5460, [#allocation8]
    $region73: #{tpu_custom_call.1} parent=1 // pred_fallthru
      _
    // Predicated region
    $region74: #{tpu_custom_call.1} parent=1 // pred_check
      _
    $region75: #{tpu_custom_call.1} parent=1 // pred_check_branch
      %5464 = sbr.rel (0) target = $region77
    $region76: #{tpu_custom_call.1} parent=1 // pred_region
      _
    $region77: #{tpu_custom_call.1} parent=1 // pred_fallthru
      _
    // Predicated region
    $region78: #{tpu_custom_call.1} parent=1 // pred_check
      _
    $region79: #{tpu_custom_call.1} parent=1 // pred_check_branch
      %5466 = sbr.rel (0) target = $region81
    $region80: #{tpu_custom_call.1} parent=1 // pred_region
      %5468 = dma.done [#allocation8], 256
    $region81: #{tpu_custom_call.1} parent=1 // pred_fallthru
      _
    %5469 = vsyncpa [#allocation7], 1
    %5470 = vsyncpa [#allocation10], 1
    %5471 = vsyncpa [#allocation13], 1
    %5472 = vsyncpa [#allocation16], 1
    %5473 = vsyncpa [#allocation8], 1

</llo_original>
